<compile_context>
chip_gen: v7x
topology: tpu7x:2x2x1
jax: 0.10.0
libtpu: 0.0.40
codegen_flags: <defaults>
</compile_context>

<pallas_src>
import functools
import math

import jax
import jax.numpy as jnp
from jax import lax
from jax.experimental import pallas as pl
from jax.experimental.pallas import tpu as pltpu

EPS = 1e-5


def _round_up(x, m):
    return (x + m - 1) // m * m


def _vmem_limit_bytes():
    # ~3/4 of physical VMEM: ~96 MiB on v5e/v6e, ~48 MiB on v7x.
    try:
        cap = pltpu.get_tpu_info().vmem_capacity_bytes
        return int(min(cap * 3 // 4, 100 * 1024 * 1024))
    except Exception:
        return 32 * 1024 * 1024  # safe default on every listed generation


# -----------------------------------------------------------------------------
# Kernel 1: Conv3d(3x3x3, pad=1) for one sample, optionally fused with the
# previous block's BatchNorm+ReLU on the load path, emitting per-sample
# BatchNorm partial statistics (sum, sum of squares) of its own output.
# -----------------------------------------------------------------------------
def _conv3d_kernel(*refs, H, halo, fuse_input_bn):
    if fuse_input_bn:
        x_ref, wb_ref, sc_ref, sh_ref, y_ref, stats_ref = refs
    else:
        x_ref, wb_ref, y_ref, stats_ref = refs
    # x_ref    : (D*H, W*Cin)       raw input volume for sample n (bf16)
    # wb_ref   : (9, W*Cin, W*Cout) clipped band weights, tap t = kd*3 + kh
    # sc/sh    : (1, W*Cin)         input BN scale/shift (fused path only)
    # y_ref    : (D*H, W*Cout)      conv output (bias-free)
    # stats_ref: (8, W*Cout)        row0 = sum, row1 = sum(y*y) over (d, h)
    DH, K = x_ref.shape
    WC = y_ref.shape[-1]

    xv = x_ref[...]
    if fuse_input_bn:
        # Fused BN+ReLU of the previous block, applied only to the data region
        # so the zero halo built below stays exactly zero.
        xv = jnp.maximum(xv.astype(jnp.float32) * sc_ref[...] + sh_ref[...], 0.0)
    xv = xv.astype(jnp.bfloat16)

    # Zero-haloed flattened (plane, row) slab: rows [halo, halo + DH) hold the
    # volume; `halo` zero rows above/below stand in for the d padding (and the
    # corner h reads).  Tiny at these shapes, so it lives in vregs.
    zpad = jnp.zeros((halo, K), jnp.bfloat16)
    xp = jnp.concatenate([zpad, xv, zpad], axis=0)         # (2*halo + DH, K)

    # h-boundary masks: for kh=0 (kh=2) the row h=0 (h=H-1) would read the
    # last (first) row of the neighbouring plane, which must count as zero.
    h_of_row = lax.broadcasted_iota(jnp.int32, (DH, K), 0) % H
    not_first = h_of_row != 0
    not_last = h_of_row != H - 1

    acc = jnp.zeros((DH, WC), jnp.float32)
    for kd in range(3):
        for kh in range(3):
            off = halo - H - 1 + kd * H + kh               # static slice start
            lhs = xp[off:off + DH, :]
            if kh == 0:
                lhs = jnp.where(not_first, lhs, 0)
            elif kh == 2:
                lhs = jnp.where(not_last, lhs, 0)
            acc = acc + jnp.dot(lhs, wb_ref[kd * 3 + kh],
                                preferred_element_type=jnp.float32)

    y_ref[...] = acc.astype(y_ref.dtype)
    s = jnp.sum(acc, axis=0, keepdims=True)
    q = jnp.sum(acc * acc, axis=0, keepdims=True)
    pad = jnp.zeros((stats_ref.shape[0] - 2, WC), jnp.float32)
    stats_ref[...] = jnp.concatenate([s, q, pad], axis=0)


def _conv3d_pass(x, wb, in_scale, in_shift, *, H, out_dtype):
    N, DH, K = x.shape
    WC = wb.shape[-1]
    halo = _round_up(H + 1, 8)
    fuse = in_scale is not None

    kernel = functools.partial(_conv3d_kernel, H=H, halo=halo,
                               fuse_input_bn=fuse)
    in_specs = [
        pl.BlockSpec((None, DH, K), lambda n: (n, 0, 0)),
        # Constant index map -> the band weight is DMA'd once and stays
        # resident across the grid.
        pl.BlockSpec((9, K, WC), lambda n: (0, 0, 0)),
    ]
    operands = [x, wb]
    if fuse:
        in_specs += [pl.BlockSpec((1, K), lambda n: (0, 0)),
                     pl.BlockSpec((1, K), lambda n: (0, 0))]
        operands += [in_scale, in_shift]

    # TODO(synk): for production shapes, tile DH (and W-tile the band weight,
    # whose size grows ~W^2) so blocks stay inside v7x's 64 MiB VMEM.
    return pl.pallas_call(
        kernel,
        out_shape=(jax.ShapeDtypeStruct((N, DH, WC), out_dtype),
                   jax.ShapeDtypeStruct((N, 8, WC), jnp.float32)),
        grid_spec=pltpu.PrefetchScalarGridSpec(
            num_scalar_prefetch=0,
            grid=(N,),
            in_specs=in_specs,
            out_specs=[pl.BlockSpec((None, DH, WC), lambda n: (n, 0, 0)),
                       pl.BlockSpec((None, 8, WC), lambda n: (n, 0, 0))],
        ),
        compiler_params=pltpu.CompilerParams(
            dimension_semantics=("parallel",),
            vmem_limit_bytes=_vmem_limit_bytes()),
    )(*operands)


# -----------------------------------------------------------------------------
# Kernel 2: standalone BatchNorm apply (y*scale + shift) + ReLU (final block).
# -----------------------------------------------------------------------------
def _bn_relu_kernel(y_ref, sc_ref, sh_ref, o_ref):
    o_ref[...] = jnp.maximum(
        y_ref[...].astype(jnp.float32) * sc_ref[...] + sh_ref[...], 0.0
    ).astype(o_ref.dtype)


def _bn_relu_pass(y, scale_t, shift_t):
    N, DH, WC = y.shape
    return pl.pallas_call(
        _bn_relu_kernel,
        out_shape=jax.ShapeDtypeStruct((N, DH, WC), jnp.float32),
        grid_spec=pltpu.PrefetchScalarGridSpec(
            num_scalar_prefetch=0,
            grid=(N,),
            in_specs=[pl.BlockSpec((None, DH, WC), lambda n: (n, 0, 0)),
                      pl.BlockSpec((1, WC), lambda n: (0, 0)),
                      pl.BlockSpec((1, WC), lambda n: (0, 0))],
            out_specs=pl.BlockSpec((None, DH, WC), lambda n: (n, 0, 0)),
        ),
        compiler_params=pltpu.CompilerParams(
            dimension_semantics=("parallel",),
            vmem_limit_bytes=_vmem_limit_bytes()),
    )(y, scale_t, shift_t)


# -----------------------------------------------------------------------------
# Host-side helpers
# -----------------------------------------------------------------------------
def _banded_weight(w, W):
    """(3,3,3,Cin,Cout) DHWIO -> (9, W*Cin, W*Cout) clipped band weights.

    wb[kd*3+kh, wi*Cin+ci, wo*Cout+co] = w[kd,kh,kw,ci,co] with wi = wo+kw-1,
    out-of-range kw taps dropped, so one matmul of a flattened (W*Cin) input
    row against wb[t] sums over (kw, ci) for every output column wo at once,
    and the input needs no W halo.  Built with a single one-hot einsum.
    """
    Cin, Cout = w.shape[3], w.shape[4]
    kw = jnp.arange(3)[:, None, None]
    wi = jnp.arange(W)[None, :, None]
    wo = jnp.arange(W)[None, None, :]
    sel = (wi == wo + kw - 1).astype(w.dtype)               # (3, W, W)
    wb = jnp.einsum('dhkio,kxw->dhxiwo', w, sel)            # (3,3,W,Cin,W,Cout)
    return wb.reshape(9, W * Cin, W * Cout)


def _bn_affine(stats, gamma, beta, count, W):
    """Training-mode BatchNorm folded into per-channel (scale, shift), tiled
    onto the (w, c) lane layout.  Conv bias is omitted upstream because BN
    subtracts the per-channel batch mean, so it cancels exactly."""
    C = gamma.shape[0]
    s = stats[:, 0, :].reshape(-1, W, C).sum(axis=(0, 1))
    q = stats[:, 1, :].reshape(-1, W, C).sum(axis=(0, 1))
    mean = s / count
    # TODO(synk): E[y^2]-E[y]^2 is cancellation-prone when |mean| >> std; use a
    # shifted / two-pass variance if this feeds much deeper stacks.
    var = jnp.maximum(q / count - mean * mean, 0.0)
    scale = gamma * lax.rsqrt(var + EPS)
    shift = beta - mean * scale
    return (jnp.tile(scale, W).reshape(1, W * C),
            jnp.tile(shift, W).reshape(1, W * C))


def double_conv(x_ncdhw, w1, b1, g1, be1, w2, b2, g2, be2):
    """Matches DoubleConv.forward; takes/returns PyTorch-style NCDHW tensors.

    b1/b2 are accepted for interface parity but never added: a per-channel
    conv bias cancels exactly under training-mode BatchNorm.
    """
    # TODO(synk): BatchNorm3d running_mean/running_var buffer updates are
    # stateful module side effects and are not produced here.
    del b1, b2
    N, Cin, D, H, W = x_ncdhw.shape
    Cout2 = w2.shape[-1]
    count = N * D * H * W

    # NCDHW -> (N, D*H, W*Cin) bf16 (lane axis = (w, cin), cin minor).
    x = jnp.transpose(x_ncdhw, (0, 2, 3, 4, 1))
    x = x.reshape(N, D * H, W * Cin).astype(jnp.bfloat16)

    wb1 = _banded_weight(w1, W).astype(jnp.bfloat16)
    wb2 = _banded_weight(w2, W).astype(jnp.bfloat16)

    # Block 1 conv (bf16 intermediate in HBM) + streaming BN statistics.
    y1, st1 = _conv3d_pass(x, wb1, None, None, H=H, out_dtype=jnp.bfloat16)
    sc1, sh1 = _bn_affine(st1, g1, be1, count, W)

    # Block 2 conv with block 1's BN+ReLU fused onto its load path.
    y2, st2 = _conv3d_pass(y1, wb2, sc1, sh1, H=H, out_dtype=jnp.float32)
    sc2, sh2 = _bn_affine(st2, g2, be2, count, W)

    # Final standalone BN+ReLU pass.
    # TODO(synk): W*Cout < 128 at these toy shapes so stores are lane-masked;
    # production shapes (W*Cout >= 128) make the output slabs lane-dense.
    out = _bn_relu_pass(y2, sc2, sh2)                       # (N, D*H, W*Cout2)
    out = out.reshape(N, D, H, W, Cout2)
    return jnp.transpose(out, (0, 4, 1, 2, 3))              # NDHWC -> NCDHW


# ------------------------------ pure-JAX references --------------------------
def _reference(x_ncdhw, w1, b1, g1, be1, w2, b2, g2, be2, *, matched):
    """matched=True mirrors kernel numerics (bf16 conv operands, bias dropped,
    bf16 intermediate activation, stats from f32); matched=False is plain f32
    PyTorch training-mode semantics (including the conv bias)."""
    x = jnp.transpose(x_ncdhw, (0, 2, 3, 4, 1))

    def conv(xin, w, dtype):
        return lax.conv_general_dilated(
            xin.astype(dtype), w.astype(dtype), (1, 1, 1), "SAME",
            dimension_numbers=("NDHWC", "DHWIO", "NDHWC"),
            preferred_element_type=jnp.float32)

    if matched:
        def block(xin, w, g, be, bf16_out):
            y = conv(xin, w, jnp.bfloat16)
            mean = jnp.mean(y, axis=(0, 1, 2, 3))
            var = jnp.maximum(jnp.mean(y * y, axis=(0, 1, 2, 3)) - mean * mean, 0.0)
            scale = g * lax.rsqrt(var + EPS)
            shift = be - mean * scale
            if bf16_out:
                y = y.astype(jnp.bfloat16).astype(jnp.float32)
            return jnp.maximum(y * scale + shift, 0.0)
        a = block(x, w1, g1, be1, True)
        a = block(a, w2, g2, be2, False)
    else:
        def block(xin, w, b, g, be):
            y = conv(xin, w, jnp.float32) + b
            mean = jnp.mean(y, axis=(0, 1, 2, 3), keepdims=True)
            var = jnp.mean(jnp.square(y - mean), axis=(0, 1, 2, 3), keepdims=True)
            return jnp.maximum((y - mean) * lax.rsqrt(var + EPS) * g + be, 0.0)
        a = block(x, w1, b1, g1, be1)
        a = block(a, w2, b2, g2, be2)
    return jnp.transpose(a, (0, 4, 1, 2, 3))


if __name__ == "__main__":
    N, Cin, Cout, D, H, W = 2, 4, 8, 8, 8, 8

    key = jax.random.PRNGKey(0)
    kx, kw1, kb1, kw2, kb2, kg1, kbe1, kg2, kbe2 = jax.random.split(key, 9)

    # input, NCDHW like PyTorch's Conv3d
    x = jax.random.normal(kx, (N, Cin, D, H, W), jnp.float32)

    # deterministic synthetic parameters (PyTorch-default-like init ranges)
    bound1 = 1.0 / math.sqrt(Cin * 27)
    w1 = jax.random.uniform(kw1, (3, 3, 3, Cin, Cout), jnp.float32, -bound1, bound1)
    b1 = jax.random.uniform(kb1, (Cout,), jnp.float32, -bound1, bound1)
    bound2 = 1.0 / math.sqrt(Cout * 27)
    w2 = jax.random.uniform(kw2, (3, 3, 3, Cout, Cout), jnp.float32, -bound2, bound2)
    b2 = jax.random.uniform(kb2, (Cout,), jnp.float32, -bound2, bound2)
    g1 = 1.0 + 0.1 * jax.random.normal(kg1, (Cout,), jnp.float32)
    be1 = 0.1 * jax.random.normal(kbe1, (Cout,), jnp.float32)
    g2 = 1.0 + 0.1 * jax.random.normal(kg2, (Cout,), jnp.float32)
    be2 = 0.1 * jax.random.normal(kbe2, (Cout,), jnp.float32)

    fwd = jax.jit(double_conv)
    out = jax.block_until_ready(fwd(x, w1, b1, g1, be1, w2, b2, g2, be2))
    assert out.shape == (N, Cout, D, H, W)

    # structural check vs. a reference with matched bf16 rounding points
    ref16 = _reference(x, w1, b1, g1, be1, w2, b2, g2, be2, matched=True)
    err16 = float(jnp.max(jnp.abs(out - ref16)))
    assert jnp.allclose(out, ref16, atol=1e-2, rtol=1e-2), err16

    # end-to-end check vs. full-f32 PyTorch semantics (incl. conv bias)
    ref32 = _reference(x, w1, b1, g1, be1, w2, b2, g2, be2, matched=False)
    err32 = float(jnp.max(jnp.abs(out - ref32)))
    assert jnp.allclose(out, ref32, atol=6e-2, rtol=6e-2), err32

    print("KERNEL_OK")
</pallas_src>

<mosaic_0001>
module attributes {stable_mosaic.version = 11 : i64} {
  func.func @_conv3d_kernel(%arg0: i32, %arg1: memref<1x64x32xbf16, #tpu.memory_space<vmem>>, %arg2: memref<9x32x64xbf16, #tpu.memory_space<vmem>>, %arg3: memref<1x64x64xbf16, #tpu.memory_space<vmem>>, %arg4: memref<1x8x64xf32, #tpu.memory_space<vmem>>) attributes {dimension_semantics = [#tpu.dimension_semantics<parallel>], iteration_bounds = array<i64: 2>, scalar_prefetch = 0 : i64, scratch_operands = 0 : i64, tpu.core_type = #tpu.core_type<tc>, window_params = [{transform_indices = @transform_0, window_bounds = array<i64: 1, 64, 32>}, {pipeline_mode = #tpu.pipeline_mode<synchronous>, transform_indices = @transform_1, window_bounds = array<i64: 9, 32, 64>}, {transform_indices = @transform_2, window_bounds = array<i64: 1, 64, 64>}, {transform_indices = @transform_3, window_bounds = array<i64: 1, 8, 64>}]} {
    %c0 = arith.constant 0 : index
    %c0_0 = arith.constant 0 : index
    %c0_1 = arith.constant 0 : index
    %0 = vector.load %arg1[%c0, %c0_0, %c0_1] : memref<1x64x32xbf16, #tpu.memory_space<vmem>>, vector<1x64x32xbf16>
    %1 = vector.shape_cast %0 : vector<1x64x32xbf16> to vector<64x32xbf16>
    %cst = arith.constant 0.000000e+00 : bf16
    %2 = vector.broadcast %cst : bf16 to vector<16x32xbf16>
    %3 = tpu.concatenate %2, %1, %2 in 0 : vector<16x32xbf16>, vector<64x32xbf16>, vector<16x32xbf16> -> vector<96x32xbf16>
    %4 = tpu.iota {dimensions = array<i32: 0>} : vector<64x32xi32>
    %c8_i32 = arith.constant 8 : i32
    %c0_i32 = arith.constant 0 : i32
    %5 = arith.cmpi eq, %c8_i32, %c0_i32 : i32
    %c1_i32 = arith.constant 1 : i32
    %6 = arith.select %5, %c1_i32, %c8_i32 : i32
    %7 = vector.broadcast %6 : i32 to vector<64x32xi32>
    %8 = arith.remsi %4, %7 : vector<64x32xi32>
    %c0_i32_2 = arith.constant 0 : i32
    %9 = vector.broadcast %c0_i32_2 : i32 to vector<64x32xi32>
    %10 = arith.cmpi ne, %8, %9 : vector<64x32xi32>
    %c0_i32_3 = arith.constant 0 : i32
    %11 = vector.broadcast %c0_i32_3 : i32 to vector<64x32xi32>
    %12 = arith.cmpi slt, %8, %11 : vector<64x32xi32>
    %c0_i32_4 = arith.constant 0 : i32
    %13 = arith.cmpi slt, %6, %c0_i32_4 : i32
    %14 = vector.broadcast %13 : i1 to vector<64x32xi1>
    %15 = vector.broadcast %14 : vector<64x32xi1> to vector<64x32xi1>
    %16 = arith.xori %12, %15 : vector<64x32xi1>
    %17 = arith.andi %16, %10 : vector<64x32xi1>
    %18 = vector.broadcast %6 : i32 to vector<64x32xi32>
    %19 = arith.addi %8, %18 : vector<64x32xi32>
    %20 = arith.select %17, %19, %8 : vector<64x32xi1>, vector<64x32xi32>
    %c0_i32_5 = arith.constant 0 : i32
    %21 = vector.broadcast %c0_i32_5 : i32 to vector<64x32xi32>
    %22 = arith.cmpi ne, %20, %21 : vector<64x32xi32>
    %c7_i32 = arith.constant 7 : i32
    %23 = vector.broadcast %c7_i32 : i32 to vector<64x32xi32>
    %24 = arith.cmpi ne, %20, %23 : vector<64x32xi32>
    %cst_6 = arith.constant 0.000000e+00 : f32
    %25 = vector.broadcast %cst_6 : f32 to vector<64x64xf32>
    %26 = vector.extract_strided_slice %3 {offsets = [7, 0], sizes = [64, 32], strides = [1, 1]} : vector<96x32xbf16> to vector<64x32xbf16>
    %c0_i32_7 = arith.constant 0 : i32
    %27 = arith.sitofp %c0_i32_7 : i32 to bf16
    %28 = vector.broadcast %27 : bf16 to vector<64x32xbf16>
    %29 = arith.select %22, %26, %28 : vector<64x32xi1>, vector<64x32xbf16>
    %c0_8 = arith.constant 0 : index
    %c0_9 = arith.constant 0 : index
    %c0_10 = arith.constant 0 : index
    %30 = vector.load %arg2[%c0_8, %c0_9, %c0_10] : memref<9x32x64xbf16, #tpu.memory_space<vmem>>, vector<1x32x64xbf16>
    %31 = vector.shape_cast %30 : vector<1x32x64xbf16> to vector<32x64xbf16>
    %cst_11 = arith.constant dense<0.000000e+00> : vector<64x64xf32>
    %32 = tpu.matmul %29, %31, %cst_11 {dimension_numbers = #tpu.dot_dimension_numbers<[1], [0], [0], [1], [0, 0, 1, 1], [], []>} : vector<64x32xbf16>, vector<32x64xbf16>, vector<64x64xf32> -> vector<64x64xf32>
    %33 = arith.addf %25, %32 : vector<64x64xf32>
    %34 = vector.extract_strided_slice %3 {offsets = [8, 0], sizes = [64, 32], strides = [1, 1]} : vector<96x32xbf16> to vector<64x32xbf16>
    %c1 = arith.constant 1 : index
    %c0_12 = arith.constant 0 : index
    %c0_13 = arith.constant 0 : index
    %35 = vector.load %arg2[%c1, %c0_12, %c0_13] : memref<9x32x64xbf16, #tpu.memory_space<vmem>>, vector<1x32x64xbf16>
    %36 = vector.shape_cast %35 : vector<1x32x64xbf16> to vector<32x64xbf16>
    %cst_14 = arith.constant dense<0.000000e+00> : vector<64x64xf32>
    %37 = tpu.matmul %34, %36, %cst_14 {dimension_numbers = #tpu.dot_dimension_numbers<[1], [0], [0], [1], [0, 0, 1, 1], [], []>} : vector<64x32xbf16>, vector<32x64xbf16>, vector<64x64xf32> -> vector<64x64xf32>
    %38 = arith.addf %33, %37 : vector<64x64xf32>
    %39 = vector.extract_strided_slice %3 {offsets = [9, 0], sizes = [64, 32], strides = [1, 1]} : vector<96x32xbf16> to vector<64x32xbf16>
    %c0_i32_15 = arith.constant 0 : i32
    %40 = arith.sitofp %c0_i32_15 : i32 to bf16
    %41 = vector.broadcast %40 : bf16 to vector<64x32xbf16>
    %42 = arith.select %24, %39, %41 : vector<64x32xi1>, vector<64x32xbf16>
    %c2 = arith.constant 2 : index
    %c0_16 = arith.constant 0 : index
    %c0_17 = arith.constant 0 : index
    %43 = vector.load %arg2[%c2, %c0_16, %c0_17] : memref<9x32x64xbf16, #tpu.memory_space<vmem>>, vector<1x32x64xbf16>
    %44 = vector.shape_cast %43 : vector<1x32x64xbf16> to vector<32x64xbf16>
    %cst_18 = arith.constant dense<0.000000e+00> : vector<64x64xf32>
    %45 = tpu.matmul %42, %44, %cst_18 {dimension_numbers = #tpu.dot_dimension_numbers<[1], [0], [0], [1], [0, 0, 1, 1], [], []>} : vector<64x32xbf16>, vector<32x64xbf16>, vector<64x64xf32> -> vector<64x64xf32>
    %46 = arith.addf %38, %45 : vector<64x64xf32>
    %47 = vector.extract_strided_slice %3 {offsets = [15, 0], sizes = [64, 32], strides = [1, 1]} : vector<96x32xbf16> to vector<64x32xbf16>
    %c0_i32_19 = arith.constant 0 : i32
    %48 = arith.sitofp %c0_i32_19 : i32 to bf16
    %49 = vector.broadcast %48 : bf16 to vector<64x32xbf16>
    %50 = arith.select %22, %47, %49 : vector<64x32xi1>, vector<64x32xbf16>
    %c3 = arith.constant 3 : index
    %c0_20 = arith.constant 0 : index
    %c0_21 = arith.constant 0 : index
    %51 = vector.load %arg2[%c3, %c0_20, %c0_21] : memref<9x32x64xbf16, #tpu.memory_space<vmem>>, vector<1x32x64xbf16>
    %52 = vector.shape_cast %51 : vector<1x32x64xbf16> to vector<32x64xbf16>
    %cst_22 = arith.constant dense<0.000000e+00> : vector<64x64xf32>
    %53 = tpu.matmul %50, %52, %cst_22 {dimension_numbers = #tpu.dot_dimension_numbers<[1], [0], [0], [1], [0, 0, 1, 1], [], []>} : vector<64x32xbf16>, vector<32x64xbf16>, vector<64x64xf32> -> vector<64x64xf32>
    %54 = arith.addf %46, %53 : vector<64x64xf32>
    %55 = vector.extract_strided_slice %3 {offsets = [16, 0], sizes = [64, 32], strides = [1, 1]} : vector<96x32xbf16> to vector<64x32xbf16>
    %c4 = arith.constant 4 : index
    %c0_23 = arith.constant 0 : index
    %c0_24 = arith.constant 0 : index
    %56 = vector.load %arg2[%c4, %c0_23, %c0_24] : memref<9x32x64xbf16, #tpu.memory_space<vmem>>, vector<1x32x64xbf16>
    %57 = vector.shape_cast %56 : vector<1x32x64xbf16> to vector<32x64xbf16>
    %cst_25 = arith.constant dense<0.000000e+00> : vector<64x64xf32>
    %58 = tpu.matmul %55, %57, %cst_25 {dimension_numbers = #tpu.dot_dimension_numbers<[1], [0], [0], [1], [0, 0, 1, 1], [], []>} : vector<64x32xbf16>, vector<32x64xbf16>, vector<64x64xf32> -> vector<64x64xf32>
    %59 = arith.addf %54, %58 : vector<64x64xf32>
    %60 = vector.extract_strided_slice %3 {offsets = [17, 0], sizes = [64, 32], strides = [1, 1]} : vector<96x32xbf16> to vector<64x32xbf16>
    %c0_i32_26 = arith.constant 0 : i32
    %61 = arith.sitofp %c0_i32_26 : i32 to bf16
    %62 = vector.broadcast %61 : bf16 to vector<64x32xbf16>
    %63 = arith.select %24, %60, %62 : vector<64x32xi1>, vector<64x32xbf16>
    %c5 = arith.constant 5 : index
    %c0_27 = arith.constant 0 : index
    %c0_28 = arith.constant 0 : index
    %64 = vector.load %arg2[%c5, %c0_27, %c0_28] : memref<9x32x64xbf16, #tpu.memory_space<vmem>>, vector<1x32x64xbf16>
    %65 = vector.shape_cast %64 : vector<1x32x64xbf16> to vector<32x64xbf16>
    %cst_29 = arith.constant dense<0.000000e+00> : vector<64x64xf32>
    %66 = tpu.matmul %63, %65, %cst_29 {dimension_numbers = #tpu.dot_dimension_numbers<[1], [0], [0], [1], [0, 0, 1, 1], [], []>} : vector<64x32xbf16>, vector<32x64xbf16>, vector<64x64xf32> -> vector<64x64xf32>
    %67 = arith.addf %59, %66 : vector<64x64xf32>
    %68 = vector.extract_strided_slice %3 {offsets = [23, 0], sizes = [64, 32], strides = [1, 1]} : vector<96x32xbf16> to vector<64x32xbf16>
    %c0_i32_30 = arith.constant 0 : i32
    %69 = arith.sitofp %c0_i32_30 : i32 to bf16
    %70 = vector.broadcast %69 : bf16 to vector<64x32xbf16>
    %71 = arith.select %22, %68, %70 : vector<64x32xi1>, vector<64x32xbf16>
    %c6 = arith.constant 6 : index
    %c0_31 = arith.constant 0 : index
    %c0_32 = arith.constant 0 : index
    %72 = vector.load %arg2[%c6, %c0_31, %c0_32] : memref<9x32x64xbf16, #tpu.memory_space<vmem>>, vector<1x32x64xbf16>
    %73 = vector.shape_cast %72 : vector<1x32x64xbf16> to vector<32x64xbf16>
    %cst_33 = arith.constant dense<0.000000e+00> : vector<64x64xf32>
    %74 = tpu.matmul %71, %73, %cst_33 {dimension_numbers = #tpu.dot_dimension_numbers<[1], [0], [0], [1], [0, 0, 1, 1], [], []>} : vector<64x32xbf16>, vector<32x64xbf16>, vector<64x64xf32> -> vector<64x64xf32>
    %75 = arith.addf %67, %74 : vector<64x64xf32>
    %76 = vector.extract_strided_slice %3 {offsets = [24, 0], sizes = [64, 32], strides = [1, 1]} : vector<96x32xbf16> to vector<64x32xbf16>
    %c7 = arith.constant 7 : index
    %c0_34 = arith.constant 0 : index
    %c0_35 = arith.constant 0 : index
    %77 = vector.load %arg2[%c7, %c0_34, %c0_35] : memref<9x32x64xbf16, #tpu.memory_space<vmem>>, vector<1x32x64xbf16>
    %78 = vector.shape_cast %77 : vector<1x32x64xbf16> to vector<32x64xbf16>
    %cst_36 = arith.constant dense<0.000000e+00> : vector<64x64xf32>
    %79 = tpu.matmul %76, %78, %cst_36 {dimension_numbers = #tpu.dot_dimension_numbers<[1], [0], [0], [1], [0, 0, 1, 1], [], []>} : vector<64x32xbf16>, vector<32x64xbf16>, vector<64x64xf32> -> vector<64x64xf32>
    %80 = arith.addf %75, %79 : vector<64x64xf32>
    %81 = vector.extract_strided_slice %3 {offsets = [25, 0], sizes = [64, 32], strides = [1, 1]} : vector<96x32xbf16> to vector<64x32xbf16>
    %c0_i32_37 = arith.constant 0 : i32
    %82 = arith.sitofp %c0_i32_37 : i32 to bf16
    %83 = vector.broadcast %82 : bf16 to vector<64x32xbf16>
    %84 = arith.select %24, %81, %83 : vector<64x32xi1>, vector<64x32xbf16>
    %c8 = arith.constant 8 : index
    %c0_38 = arith.constant 0 : index
    %c0_39 = arith.constant 0 : index
    %85 = vector.load %arg2[%c8, %c0_38, %c0_39] : memref<9x32x64xbf16, #tpu.memory_space<vmem>>, vector<1x32x64xbf16>
    %86 = vector.shape_cast %85 : vector<1x32x64xbf16> to vector<32x64xbf16>
    %cst_40 = arith.constant dense<0.000000e+00> : vector<64x64xf32>
    %87 = tpu.matmul %84, %86, %cst_40 {dimension_numbers = #tpu.dot_dimension_numbers<[1], [0], [0], [1], [0, 0, 1, 1], [], []>} : vector<64x32xbf16>, vector<32x64xbf16>, vector<64x64xf32> -> vector<64x64xf32>
    %88 = arith.addf %80, %87 : vector<64x64xf32>
    %89 = arith.truncf %88 : vector<64x64xf32> to vector<64x64xbf16>
    %c0_41 = arith.constant 0 : index
    %c0_42 = arith.constant 0 : index
    %c0_43 = arith.constant 0 : index
    %90 = vector.load %arg3[%c0_41, %c0_42, %c0_43] : memref<1x64x64xbf16, #tpu.memory_space<vmem>>, vector<1x64x64xbf16>
    %91 = vector.shape_cast %90 : vector<1x64x64xbf16> to vector<64x64xbf16>
    %92 = vector.shape_cast %89 : vector<64x64xbf16> to vector<1x64x64xbf16>
    tpu.vector_store %arg3[%c0_41, %c0_42, %c0_43], %92 {strides = array<i32>} : memref<1x64x64xbf16, #tpu.memory_space<vmem>>, vector<1x64x64xbf16>,
    %cst_44 = arith.constant dense<0.000000e+00> : vector<64xf32>
    %93 = vector.multi_reduction <add>, %88, %cst_44 [0] : vector<64x64xf32> to vector<64xf32>
    %94 = vector.shape_cast %93 : vector<64xf32> to vector<1x64xf32>
    %95 = arith.mulf %88, %88 : vector<64x64xf32>
    %cst_45 = arith.constant dense<0.000000e+00> : vector<64xf32>
    %96 = vector.multi_reduction <add>, %95, %cst_45 [0] : vector<64x64xf32> to vector<64xf32>
    %97 = vector.shape_cast %96 : vector<64xf32> to vector<1x64xf32>
    %cst_46 = arith.constant 0.000000e+00 : f32
    %98 = vector.broadcast %cst_46 : f32 to vector<6x64xf32>
    %99 = tpu.concatenate %94, %97, %98 in 0 : vector<1x64xf32>, vector<1x64xf32>, vector<6x64xf32> -> vector<8x64xf32>
    %c0_47 = arith.constant 0 : index
    %c0_48 = arith.constant 0 : index
    %c0_49 = arith.constant 0 : index
    %100 = vector.load %arg4[%c0_47, %c0_48, %c0_49] : memref<1x8x64xf32, #tpu.memory_space<vmem>>, vector<1x8x64xf32>
    %101 = vector.shape_cast %100 : vector<1x8x64xf32> to vector<8x64xf32>
    %102 = vector.shape_cast %99 : vector<8x64xf32> to vector<1x8x64xf32>
    tpu.vector_store %arg4[%c0_47, %c0_48, %c0_49], %102 {strides = array<i32>} : memref<1x8x64xf32, #tpu.memory_space<vmem>>, vector<1x8x64xf32>,
    return
  }
  func.func @transform_0(%arg0: i32) -> (i32, i32, i32) {
    %c0_i32 = arith.constant 0 : i32
    %c0_i32_0 = arith.constant 0 : i32
    %c0_i32_1 = arith.constant 0 : i32
    return %arg0, %c0_i32, %c0_i32_0 : i32, i32, i32
  }
  func.func @transform_1(%arg0: i32) -> (i32, i32, i32) {
    %c0_i32 = arith.constant 0 : i32
    %c0_i32_0 = arith.constant 0 : i32
    %c0_i32_1 = arith.constant 0 : i32
    %c0_i32_2 = arith.constant 0 : i32
    return %c0_i32, %c0_i32_0, %c0_i32_1 : i32, i32, i32
  }
  func.func @transform_2(%arg0: i32) -> (i32, i32, i32) {
    %c0_i32 = arith.constant 0 : i32
    %c0_i32_0 = arith.constant 0 : i32
    %c0_i32_1 = arith.constant 0 : i32
    return %arg0, %c0_i32, %c0_i32_0 : i32, i32, i32
  }
  func.func @transform_3(%arg0: i32) -> (i32, i32, i32) {
    %c0_i32 = arith.constant 0 : i32
    %c0_i32_0 = arith.constant 0 : i32
    %c0_i32_1 = arith.constant 0 : i32
    return %arg0, %c0_i32, %c0_i32_0 : i32, i32, i32
  }
}

module attributes {stable_mosaic.version = 11 : i64} {
  func.func @_bn_relu_kernel(%arg0: i32, %arg1: memref<1x64x64xf32, #tpu.memory_space<vmem>>, %arg2: memref<1x64xf32, #tpu.memory_space<vmem>>, %arg3: memref<1x64xf32, #tpu.memory_space<vmem>>, %arg4: memref<1x64x64xf32, #tpu.memory_space<vmem>>) attributes {dimension_semantics = [#tpu.dimension_semantics<parallel>], iteration_bounds = array<i64: 2>, scalar_prefetch = 0 : i64, scratch_operands = 0 : i64, tpu.core_type = #tpu.core_type<tc>, window_params = [{transform_indices = @transform_0, window_bounds = array<i64: 1, 64, 64>}, {pipeline_mode = #tpu.pipeline_mode<synchronous>, transform_indices = @transform_1, window_bounds = array<i64: 1, 64>}, {pipeline_mode = #tpu.pipeline_mode<synchronous>, transform_indices = @transform_2, window_bounds = array<i64: 1, 64>}, {transform_indices = @transform_3, window_bounds = array<i64: 1, 64, 64>}]} {
    %c0 = arith.constant 0 : index
    %c0_0 = arith.constant 0 : index
    %c0_1 = arith.constant 0 : index
    %0 = vector.load %arg1[%c0, %c0_0, %c0_1] : memref<1x64x64xf32, #tpu.memory_space<vmem>>, vector<1x64x64xf32>
    %1 = vector.shape_cast %0 : vector<1x64x64xf32> to vector<64x64xf32>
    %c0_2 = arith.constant 0 : index
    %c0_3 = arith.constant 0 : index
    %2 = vector.load %arg2[%c0_2, %c0_3] : memref<1x64xf32, #tpu.memory_space<vmem>>, vector<1x64xf32>
    %3 = vector.broadcast %2 : vector<1x64xf32> to vector<64x64xf32>
    %4 = arith.mulf %1, %3 : vector<64x64xf32>
    %c0_4 = arith.constant 0 : index
    %c0_5 = arith.constant 0 : index
    %5 = vector.load %arg3[%c0_4, %c0_5] : memref<1x64xf32, #tpu.memory_space<vmem>>, vector<1x64xf32>
    %6 = vector.broadcast %5 : vector<1x64xf32> to vector<64x64xf32>
    %7 = arith.addf %4, %6 : vector<64x64xf32>
    %cst = arith.constant 0.000000e+00 : f32
    %8 = vector.broadcast %cst : f32 to vector<64x64xf32>
    %9 = arith.maximumf %7, %8 : vector<64x64xf32>
    %c0_6 = arith.constant 0 : index
    %c0_7 = arith.constant 0 : index
    %c0_8 = arith.constant 0 : index
    %10 = vector.load %arg4[%c0_6, %c0_7, %c0_8] : memref<1x64x64xf32, #tpu.memory_space<vmem>>, vector<1x64x64xf32>
    %11 = vector.shape_cast %10 : vector<1x64x64xf32> to vector<64x64xf32>
    %12 = vector.shape_cast %9 : vector<64x64xf32> to vector<1x64x64xf32>
    tpu.vector_store %arg4[%c0_6, %c0_7, %c0_8], %12 {strides = array<i32>} : memref<1x64x64xf32, #tpu.memory_space<vmem>>, vector<1x64x64xf32>,
    return
  }
  func.func @transform_0(%arg0: i32) -> (i32, i32, i32) {
    %c0_i32 = arith.constant 0 : i32
    %c0_i32_0 = arith.constant 0 : i32
    %c0_i32_1 = arith.constant 0 : i32
    return %arg0, %c0_i32, %c0_i32_0 : i32, i32, i32
  }
  func.func @transform_1(%arg0: i32) -> (i32, i32) {
    %c0_i32 = arith.constant 0 : i32
    %c0_i32_0 = arith.constant 0 : i32
    %c0_i32_1 = arith.constant 0 : i32
    return %c0_i32, %c0_i32_0 : i32, i32
  }
  func.func @transform_2(%arg0: i32) -> (i32, i32) {
    %c0_i32 = arith.constant 0 : i32
    %c0_i32_0 = arith.constant 0 : i32
    %c0_i32_1 = arith.constant 0 : i32
    return %c0_i32, %c0_i32_0 : i32, i32
  }
  func.func @transform_3(%arg0: i32) -> (i32, i32, i32) {
    %c0_i32 = arith.constant 0 : i32
    %c0_i32_0 = arith.constant 0 : i32
    %c0_i32_1 = arith.constant 0 : i32
    return %arg0, %c0_i32, %c0_i32_0 : i32, i32, i32
  }
}

module attributes {stable_mosaic.version = 11 : i64} {
  func.func @_conv3d_kernel(%arg0: i32, %arg1: memref<1x64x64xbf16, #tpu.memory_space<vmem>>, %arg2: memref<9x64x64xbf16, #tpu.memory_space<vmem>>, %arg3: memref<1x64xf32, #tpu.memory_space<vmem>>, %arg4: memref<1x64xf32, #tpu.memory_space<vmem>>, %arg5: memref<1x64x64xf32, #tpu.memory_space<vmem>>, %arg6: memref<1x8x64xf32, #tpu.memory_space<vmem>>) attributes {dimension_semantics = [#tpu.dimension_semantics<parallel>], iteration_bounds = array<i64: 2>, scalar_prefetch = 0 : i64, scratch_operands = 0 : i64, tpu.core_type = #tpu.core_type<tc>, window_params = [{transform_indices = @transform_0, window_bounds = array<i64: 1, 64, 64>}, {pipeline_mode = #tpu.pipeline_mode<synchronous>, transform_indices = @transform_1, window_bounds = array<i64: 9, 64, 64>}, {pipeline_mode = #tpu.pipeline_mode<synchronous>, transform_indices = @transform_2, window_bounds = array<i64: 1, 64>}, {pipeline_mode = #tpu.pipeline_mode<synchronous>, transform_indices = @transform_3, window_bounds = array<i64: 1, 64>}, {transform_indices = @transform_4, window_bounds = array<i64: 1, 64, 64>}, {transform_indices = @transform_5, window_bounds = array<i64: 1, 8, 64>}]} {
    %c0 = arith.constant 0 : index
    %c0_0 = arith.constant 0 : index
    %c0_1 = arith.constant 0 : index
    %0 = vector.load %arg1[%c0, %c0_0, %c0_1] : memref<1x64x64xbf16, #tpu.memory_space<vmem>>, vector<1x64x64xbf16>
    %1 = vector.shape_cast %0 : vector<1x64x64xbf16> to vector<64x64xbf16>
    %2 = arith.extf %1 : vector<64x64xbf16> to vector<64x64xf32>
    %c0_2 = arith.constant 0 : index
    %c0_3 = arith.constant 0 : index
    %3 = vector.load %arg3[%c0_2, %c0_3] : memref<1x64xf32, #tpu.memory_space<vmem>>, vector<1x64xf32>
    %4 = vector.broadcast %3 : vector<1x64xf32> to vector<64x64xf32>
    %5 = arith.mulf %2, %4 : vector<64x64xf32>
    %c0_4 = arith.constant 0 : index
    %c0_5 = arith.constant 0 : index
    %6 = vector.load %arg4[%c0_4, %c0_5] : memref<1x64xf32, #tpu.memory_space<vmem>>, vector<1x64xf32>
    %7 = vector.broadcast %6 : vector<1x64xf32> to vector<64x64xf32>
    %8 = arith.addf %5, %7 : vector<64x64xf32>
    %cst = arith.constant 0.000000e+00 : f32
    %9 = vector.broadcast %cst : f32 to vector<64x64xf32>
    %10 = arith.maximumf %8, %9 : vector<64x64xf32>
    %11 = arith.truncf %10 : vector<64x64xf32> to vector<64x64xbf16>
    %cst_6 = arith.constant 0.000000e+00 : bf16
    %12 = vector.broadcast %cst_6 : bf16 to vector<16x64xbf16>
    %13 = tpu.concatenate %12, %11, %12 in 0 : vector<16x64xbf16>, vector<64x64xbf16>, vector<16x64xbf16> -> vector<96x64xbf16>
    %14 = tpu.iota {dimensions = array<i32: 0>} : vector<64x64xi32>
    %c8_i32 = arith.constant 8 : i32
    %c0_i32 = arith.constant 0 : i32
    %15 = arith.cmpi eq, %c8_i32, %c0_i32 : i32
    %c1_i32 = arith.constant 1 : i32
    %16 = arith.select %15, %c1_i32, %c8_i32 : i32
    %17 = vector.broadcast %16 : i32 to vector<64x64xi32>
    %18 = arith.remsi %14, %17 : vector<64x64xi32>
    %c0_i32_7 = arith.constant 0 : i32
    %19 = vector.broadcast %c0_i32_7 : i32 to vector<64x64xi32>
    %20 = arith.cmpi ne, %18, %19 : vector<64x64xi32>
    %c0_i32_8 = arith.constant 0 : i32
    %21 = vector.broadcast %c0_i32_8 : i32 to vector<64x64xi32>
    %22 = arith.cmpi slt, %18, %21 : vector<64x64xi32>
    %c0_i32_9 = arith.constant 0 : i32
    %23 = arith.cmpi slt, %16, %c0_i32_9 : i32
    %24 = vector.broadcast %23 : i1 to vector<64x64xi1>
    %25 = vector.broadcast %24 : vector<64x64xi1> to vector<64x64xi1>
    %26 = arith.xori %22, %25 : vector<64x64xi1>
    %27 = arith.andi %26, %20 : vector<64x64xi1>
    %28 = vector.broadcast %16 : i32 to vector<64x64xi32>
    %29 = arith.addi %18, %28 : vector<64x64xi32>
    %30 = arith.select %27, %29, %18 : vector<64x64xi1>, vector<64x64xi32>
    %c0_i32_10 = arith.constant 0 : i32
    %31 = vector.broadcast %c0_i32_10 : i32 to vector<64x64xi32>
    %32 = arith.cmpi ne, %30, %31 : vector<64x64xi32>
    %c7_i32 = arith.constant 7 : i32
    %33 = vector.broadcast %c7_i32 : i32 to vector<64x64xi32>
    %34 = arith.cmpi ne, %30, %33 : vector<64x64xi32>
    %cst_11 = arith.constant 0.000000e+00 : f32
    %35 = vector.broadcast %cst_11 : f32 to vector<64x64xf32>
    %36 = vector.extract_strided_slice %13 {offsets = [7, 0], sizes = [64, 64], strides = [1, 1]} : vector<96x64xbf16> to vector<64x64xbf16>
    %c0_i32_12 = arith.constant 0 : i32
    %37 = arith.sitofp %c0_i32_12 : i32 to bf16
    %38 = vector.broadcast %37 : bf16 to vector<64x64xbf16>
    %39 = arith.select %32, %36, %38 : vector<64x64xi1>, vector<64x64xbf16>
    %c0_13 = arith.constant 0 : index
    %c0_14 = arith.constant 0 : index
    %c0_15 = arith.constant 0 : index
    %40 = vector.load %arg2[%c0_13, %c0_14, %c0_15] : memref<9x64x64xbf16, #tpu.memory_space<vmem>>, vector<1x64x64xbf16>
    %41 = vector.shape_cast %40 : vector<1x64x64xbf16> to vector<64x64xbf16>
    %cst_16 = arith.constant dense<0.000000e+00> : vector<64x64xf32>
    %42 = tpu.matmul %39, %41, %cst_16 {dimension_numbers = #tpu.dot_dimension_numbers<[1], [0], [0], [1], [0, 0, 1, 1], [], []>} : vector<64x64xbf16>, vector<64x64xbf16>, vector<64x64xf32> -> vector<64x64xf32>
    %43 = arith.addf %35, %42 : vector<64x64xf32>
    %44 = vector.extract_strided_slice %13 {offsets = [8, 0], sizes = [64, 64], strides = [1, 1]} : vector<96x64xbf16> to vector<64x64xbf16>
    %c1 = arith.constant 1 : index
    %c0_17 = arith.constant 0 : index
    %c0_18 = arith.constant 0 : index
    %45 = vector.load %arg2[%c1, %c0_17, %c0_18] : memref<9x64x64xbf16, #tpu.memory_space<vmem>>, vector<1x64x64xbf16>
    %46 = vector.shape_cast %45 : vector<1x64x64xbf16> to vector<64x64xbf16>
    %cst_19 = arith.constant dense<0.000000e+00> : vector<64x64xf32>
    %47 = tpu.matmul %44, %46, %cst_19 {dimension_numbers = #tpu.dot_dimension_numbers<[1], [0], [0], [1], [0, 0, 1, 1], [], []>} : vector<64x64xbf16>, vector<64x64xbf16>, vector<64x64xf32> -> vector<64x64xf32>
    %48 = arith.addf %43, %47 : vector<64x64xf32>
    %49 = vector.extract_strided_slice %13 {offsets = [9, 0], sizes = [64, 64], strides = [1, 1]} : vector<96x64xbf16> to vector<64x64xbf16>
    %c0_i32_20 = arith.constant 0 : i32
    %50 = arith.sitofp %c0_i32_20 : i32 to bf16
    %51 = vector.broadcast %50 : bf16 to vector<64x64xbf16>
    %52 = arith.select %34, %49, %51 : vector<64x64xi1>, vector<64x64xbf16>
    %c2 = arith.constant 2 : index
    %c0_21 = arith.constant 0 : index
    %c0_22 = arith.constant 0 : index
    %53 = vector.load %arg2[%c2, %c0_21, %c0_22] : memref<9x64x64xbf16, #tpu.memory_space<vmem>>, vector<1x64x64xbf16>
    %54 = vector.shape_cast %53 : vector<1x64x64xbf16> to vector<64x64xbf16>
    %cst_23 = arith.constant dense<0.000000e+00> : vector<64x64xf32>
    %55 = tpu.matmul %52, %54, %cst_23 {dimension_numbers = #tpu.dot_dimension_numbers<[1], [0], [0], [1], [0, 0, 1, 1], [], []>} : vector<64x64xbf16>, vector<64x64xbf16>, vector<64x64xf32> -> vector<64x64xf32>
    %56 = arith.addf %48, %55 : vector<64x64xf32>
    %57 = vector.extract_strided_slice %13 {offsets = [15, 0], sizes = [64, 64], strides = [1, 1]} : vector<96x64xbf16> to vector<64x64xbf16>
    %c0_i32_24 = arith.constant 0 : i32
    %58 = arith.sitofp %c0_i32_24 : i32 to bf16
    %59 = vector.broadcast %58 : bf16 to vector<64x64xbf16>
    %60 = arith.select %32, %57, %59 : vector<64x64xi1>, vector<64x64xbf16>
    %c3 = arith.constant 3 : index
    %c0_25 = arith.constant 0 : index
    %c0_26 = arith.constant 0 : index
    %61 = vector.load %arg2[%c3, %c0_25, %c0_26] : memref<9x64x64xbf16, #tpu.memory_space<vmem>>, vector<1x64x64xbf16>
    %62 = vector.shape_cast %61 : vector<1x64x64xbf16> to vector<64x64xbf16>
    %cst_27 = arith.constant dense<0.000000e+00> : vector<64x64xf32>
    %63 = tpu.matmul %60, %62, %cst_27 {dimension_numbers = #tpu.dot_dimension_numbers<[1], [0], [0], [1], [0, 0, 1, 1], [], []>} : vector<64x64xbf16>, vector<64x64xbf16>, vector<64x64xf32> -> vector<64x64xf32>
    %64 = arith.addf %56, %63 : vector<64x64xf32>
    %65 = vector.extract_strided_slice %13 {offsets = [16, 0], sizes = [64, 64], strides = [1, 1]} : vector<96x64xbf16> to vector<64x64xbf16>
    %c4 = arith.constant 4 : index
    %c0_28 = arith.constant 0 : index
    %c0_29 = arith.constant 0 : index
    %66 = vector.load %arg2[%c4, %c0_28, %c0_29] : memref<9x64x64xbf16, #tpu.memory_space<vmem>>, vector<1x64x64xbf16>
    %67 = vector.shape_cast %66 : vector<1x64x64xbf16> to vector<64x64xbf16>
    %cst_30 = arith.constant dense<0.000000e+00> : vector<64x64xf32>
    %68 = tpu.matmul %65, %67, %cst_30 {dimension_numbers = #tpu.dot_dimension_numbers<[1], [0], [0], [1], [0, 0, 1, 1], [], []>} : vector<64x64xbf16>, vector<64x64xbf16>, vector<64x64xf32> -> vector<64x64xf32>
    %69 = arith.addf %64, %68 : vector<64x64xf32>
    %70 = vector.extract_strided_slice %13 {offsets = [17, 0], sizes = [64, 64], strides = [1, 1]} : vector<96x64xbf16> to vector<64x64xbf16>
    %c0_i32_31 = arith.constant 0 : i32
    %71 = arith.sitofp %c0_i32_31 : i32 to bf16
    %72 = vector.broadcast %71 : bf16 to vector<64x64xbf16>
    %73 = arith.select %34, %70, %72 : vector<64x64xi1>, vector<64x64xbf16>
    %c5 = arith.constant 5 : index
    %c0_32 = arith.constant 0 : index
    %c0_33 = arith.constant 0 : index
    %74 = vector.load %arg2[%c5, %c0_32, %c0_33] : memref<9x64x64xbf16, #tpu.memory_space<vmem>>, vector<1x64x64xbf16>
    %75 = vector.shape_cast %74 : vector<1x64x64xbf16> to vector<64x64xbf16>
    %cst_34 = arith.constant dense<0.000000e+00> : vector<64x64xf32>
    %76 = tpu.matmul %73, %75, %cst_34 {dimension_numbers = #tpu.dot_dimension_numbers<[1], [0], [0], [1], [0, 0, 1, 1], [], []>} : vector<64x64xbf16>, vector<64x64xbf16>, vector<64x64xf32> -> vector<64x64xf32>
    %77 = arith.addf %69, %76 : vector<64x64xf32>
    %78 = vector.extract_strided_slice %13 {offsets = [23, 0], sizes = [64, 64], strides = [1, 1]} : vector<96x64xbf16> to vector<64x64xbf16>
    %c0_i32_35 = arith.constant 0 : i32
    %79 = arith.sitofp %c0_i32_35 : i32 to bf16
    %80 = vector.broadcast %79 : bf16 to vector<64x64xbf16>
    %81 = arith.select %32, %78, %80 : vector<64x64xi1>, vector<64x64xbf16>
    %c6 = arith.constant 6 : index
    %c0_36 = arith.constant 0 : index
    %c0_37 = arith.constant 0 : index
    %82 = vector.load %arg2[%c6, %c0_36, %c0_37] : memref<9x64x64xbf16, #tpu.memory_space<vmem>>, vector<1x64x64xbf16>
    %83 = vector.shape_cast %82 : vector<1x64x64xbf16> to vector<64x64xbf16>
    %cst_38 = arith.constant dense<0.000000e+00> : vector<64x64xf32>
    %84 = tpu.matmul %81, %83, %cst_38 {dimension_numbers = #tpu.dot_dimension_numbers<[1], [0], [0], [1], [0, 0, 1, 1], [], []>} : vector<64x64xbf16>, vector<64x64xbf16>, vector<64x64xf32> -> vector<64x64xf32>
    %85 = arith.addf %77, %84 : vector<64x64xf32>
    %86 = vector.extract_strided_slice %13 {offsets = [24, 0], sizes = [64, 64], strides = [1, 1]} : vector<96x64xbf16> to vector<64x64xbf16>
    %c7 = arith.constant 7 : index
    %c0_39 = arith.constant 0 : index
    %c0_40 = arith.constant 0 : index
    %87 = vector.load %arg2[%c7, %c0_39, %c0_40] : memref<9x64x64xbf16, #tpu.memory_space<vmem>>, vector<1x64x64xbf16>
    %88 = vector.shape_cast %87 : vector<1x64x64xbf16> to vector<64x64xbf16>
    %cst_41 = arith.constant dense<0.000000e+00> : vector<64x64xf32>
    %89 = tpu.matmul %86, %88, %cst_41 {dimension_numbers = #tpu.dot_dimension_numbers<[1], [0], [0], [1], [0, 0, 1, 1], [], []>} : vector<64x64xbf16>, vector<64x64xbf16>, vector<64x64xf32> -> vector<64x64xf32>
    %90 = arith.addf %85, %89 : vector<64x64xf32>
    %91 = vector.extract_strided_slice %13 {offsets = [25, 0], sizes = [64, 64], strides = [1, 1]} : vector<96x64xbf16> to vector<64x64xbf16>
    %c0_i32_42 = arith.constant 0 : i32
    %92 = arith.sitofp %c0_i32_42 : i32 to bf16
    %93 = vector.broadcast %92 : bf16 to vector<64x64xbf16>
    %94 = arith.select %34, %91, %93 : vector<64x64xi1>, vector<64x64xbf16>
    %c8 = arith.constant 8 : index
    %c0_43 = arith.constant 0 : index
    %c0_44 = arith.constant 0 : index
    %95 = vector.load %arg2[%c8, %c0_43, %c0_44] : memref<9x64x64xbf16, #tpu.memory_space<vmem>>, vector<1x64x64xbf16>
    %96 = vector.shape_cast %95 : vector<1x64x64xbf16> to vector<64x64xbf16>
    %cst_45 = arith.constant dense<0.000000e+00> : vector<64x64xf32>
    %97 = tpu.matmul %94, %96, %cst_45 {dimension_numbers = #tpu.dot_dimension_numbers<[1], [0], [0], [1], [0, 0, 1, 1], [], []>} : vector<64x64xbf16>, vector<64x64xbf16>, vector<64x64xf32> -> vector<64x64xf32>
    %98 = arith.addf %90, %97 : vector<64x64xf32>
    %c0_46 = arith.constant 0 : index
    %c0_47 = arith.constant 0 : index
    %c0_48 = arith.constant 0 : index
    %99 = vector.load %arg5[%c0_46, %c0_47, %c0_48] : memref<1x64x64xf32, #tpu.memory_space<vmem>>, vector<1x64x64xf32>
    %100 = vector.shape_cast %99 : vector<1x64x64xf32> to vector<64x64xf32>
    %101 = vector.shape_cast %98 : vector<64x64xf32> to vector<1x64x64xf32>
    tpu.vector_store %arg5[%c0_46, %c0_47, %c0_48], %101 {strides = array<i32>} : memref<1x64x64xf32, #tpu.memory_space<vmem>>, vector<1x64x64xf32>,
    %cst_49 = arith.constant dense<0.000000e+00> : vector<64xf32>
    %102 = vector.multi_reduction <add>, %98, %cst_49 [0] : vector<64x64xf32> to vector<64xf32>
    %103 = vector.shape_cast %102 : vector<64xf32> to vector<1x64xf32>
    %104 = arith.mulf %98, %98 : vector<64x64xf32>
    %cst_50 = arith.constant dense<0.000000e+00> : vector<64xf32>
    %105 = vector.multi_reduction <add>, %104, %cst_50 [0] : vector<64x64xf32> to vector<64xf32>
    %106 = vector.shape_cast %105 : vector<64xf32> to vector<1x64xf32>
    %cst_51 = arith.constant 0.000000e+00 : f32
    %107 = vector.broadcast %cst_51 : f32 to vector<6x64xf32>
    %108 = tpu.concatenate %103, %106, %107 in 0 : vector<1x64xf32>, vector<1x64xf32>, vector<6x64xf32> -> vector<8x64xf32>
    %c0_52 = arith.constant 0 : index
    %c0_53 = arith.constant 0 : index
    %c0_54 = arith.constant 0 : index
    %109 = vector.load %arg6[%c0_52, %c0_53, %c0_54] : memref<1x8x64xf32, #tpu.memory_space<vmem>>, vector<1x8x64xf32>
    %110 = vector.shape_cast %109 : vector<1x8x64xf32> to vector<8x64xf32>
    %111 = vector.shape_cast %108 : vector<8x64xf32> to vector<1x8x64xf32>
    tpu.vector_store %arg6[%c0_52, %c0_53, %c0_54], %111 {strides = array<i32>} : memref<1x8x64xf32, #tpu.memory_space<vmem>>, vector<1x8x64xf32>,
    return
  }
  func.func @transform_0(%arg0: i32) -> (i32, i32, i32) {
    %c0_i32 = arith.constant 0 : i32
    %c0_i32_0 = arith.constant 0 : i32
    %c0_i32_1 = arith.constant 0 : i32
    return %arg0, %c0_i32, %c0_i32_0 : i32, i32, i32
  }
  func.func @transform_1(%arg0: i32) -> (i32, i32, i32) {
    %c0_i32 = arith.constant 0 : i32
    %c0_i32_0 = arith.constant 0 : i32
    %c0_i32_1 = arith.constant 0 : i32
    %c0_i32_2 = arith.constant 0 : i32
    return %c0_i32, %c0_i32_0, %c0_i32_1 : i32, i32, i32
  }
  func.func @transform_2(%arg0: i32) -> (i32, i32) {
    %c0_i32 = arith.constant 0 : i32
    %c0_i32_0 = arith.constant 0 : i32
    %c0_i32_1 = arith.constant 0 : i32
    return %c0_i32, %c0_i32_0 : i32, i32
  }
  func.func @transform_3(%arg0: i32) -> (i32, i32) {
    %c0_i32 = arith.constant 0 : i32
    %c0_i32_0 = arith.constant 0 : i32
    %c0_i32_1 = arith.constant 0 : i32
    return %c0_i32, %c0_i32_0 : i32, i32
  }
  func.func @transform_4(%arg0: i32) -> (i32, i32, i32) {
    %c0_i32 = arith.constant 0 : i32
    %c0_i32_0 = arith.constant 0 : i32
    %c0_i32_1 = arith.constant 0 : i32
    return %arg0, %c0_i32, %c0_i32_0 : i32, i32, i32
  }
  func.func @transform_5(%arg0: i32) -> (i32, i32, i32) {
    %c0_i32 = arith.constant 0 : i32
    %c0_i32_0 = arith.constant 0 : i32
    %c0_i32_1 = arith.constant 0 : i32
    return %arg0, %c0_i32, %c0_i32_0 : i32, i32, i32
  }
}

</mosaic_0001>

<llo_original>
// kernel: tile.28
$region0: #{tile.28}
  #allocation0 [shape = 's32[1]{0}', space=sflag, size = 0x4, scoped, tag = 'scoped memory for tile.28']
  %s0 = inlined_call_operand.vmem [shape: f32[8], index: 0, kind: input, shape index: {}]
  %s1 = inlined_call_operand.vmem [shape: f32[8,8], index: 1, kind: output, shape index: {}]
  // Predicated region
  $region2: #{tile.28} parent=0 // pred_check
    _
  $region3: #{tile.28} parent=0 // pred_check_branch
    %3 = sbr.rel (0) target = $region5
  $region4: #{tile.28} parent=0 // pred_region
    _
  $region5: #{tile.28} parent=0 // pred_fallthru
    _
  %v4 = vld [vmem:[%s0] ss:$0 sm:$0xff]
  %5 = vst [vmem:[%s1] sm:$0xff] %v4

// kernel: tile.29
$region0: #{tile.29}
  %s0 = inlined_call_operand.vmem [shape: f32[8,8], index: 0, kind: input, shape index: {}]
  %s1 = inlined_call_operand.vmem [shape: f32[1,64], index: 1, kind: output, shape index: {}]
  $region1: #{tile.29} parent=0
    #allocation0 [shape = 'u8[4096]{0}', space=vmem, size = 0x1000, scoped, tag = 'scoped mem for output reshape']
    %v2 = vld [vmem:[%s0] sm:$0x1]
    %vm3 = vcmask 64512
    %4 = vst.msk [vmem:[#allocation0] sm:$0x1] %vm3, %v2
    %s5 = scalar_lea.vmem %s0, 7
    %v6 = vld [vmem:[%s5] sm:$0x1]
    %7 = vrot.lane.b32.xlu0 %v6, 56
    %v8 = vpop.permute.xlu0 %7
    %vm9 = vcmask 523712
    %10 = vst.msk [vmem:[#allocation0] sm:$0x1] %vm9, %v8
    %s11 = scalar_lea.vmem %s0, 6
    %v12 = vld [vmem:[%s11] sm:$0x1]
    %13 = vrot.lane.b32.xlu0 %v12, 48
    %v14 = vpop.permute.xlu0 %13
    %vm15 = vcmask 458112
    %16 = vst.msk [vmem:[#allocation0] sm:$0x1] %vm15, %v14
    %s17 = scalar_lea.vmem %s0, 5
    %v18 = vld [vmem:[%s17] sm:$0x1]
    %19 = vrot.lane.b32.xlu0 %v18, 40
    %v20 = vpop.permute.xlu0 %19
    %vm21 = vcmask 392512
    %22 = vst.msk [vmem:[#allocation0] sm:$0x1] %vm21, %v20
    %s23 = scalar_lea.vmem %s0, 4
    %v24 = vld [vmem:[%s23] sm:$0x1]
    %25 = vrot.lane.b32.xlu0 %v24, 32
    %v26 = vpop.permute.xlu0 %25
    %vm27 = vcmask 326912
    %28 = vst.msk [vmem:[#allocation0] sm:$0x1] %vm27, %v26
    %s29 = scalar_lea.vmem %s0, 3
    %v30 = vld [vmem:[%s29] sm:$0x1]
    %31 = vrot.lane.b32.xlu0 %v30, 24
    %v32 = vpop.permute.xlu0 %31
    %vm33 = vcmask 261312
    %34 = vst.msk [vmem:[#allocation0] sm:$0x1] %vm33, %v32
    %s35 = scalar_lea.vmem %s0, 2
    %v36 = vld [vmem:[%s35] sm:$0x1]
    %37 = vrot.lane.b32.xlu0 %v36, 16
    %v38 = vpop.permute.xlu0 %37
    %vm39 = vcmask 195712
    %40 = vst.msk [vmem:[#allocation0] sm:$0x1] %vm39, %v38
    %s41 = scalar_lea.vmem %s0, 1
    %v42 = vld [vmem:[%s41] sm:$0x1]
    %43 = vrot.lane.b32.xlu0 %v42, 8
    %v44 = vpop.permute.xlu0 %43
    %vm45 = vcmask 130112
    %46 = vst.msk [vmem:[#allocation0] sm:$0x1] %vm45, %v44
    %s48 = sshllo.u32 0, 1
    %v50 = vld [vmem:[#allocation0] sm:%s48]
    %s51 = sshllo.u32 0, 1
    %52 = vst [vmem:[%s1] sm:%s51] %v50

// kernel: double_conv.3
$region0: #{double_conv.3}
  #allocation0 [shape = 'u32[]', space=smem, size = 0x4, offset = 0x4, fixed_abs, tag = 'smem constant byte address 0x4 - core index']
  #allocation1 [shape = 'u32[144,128]{1,0:T(1,128)}', space=vmem, size = 0x12000, scoped, tag = 'internal scratch']
  %s0 = inlined_call_operand.vmem [shape: bf16[2,64,32], index: 0, kind: input, shape index: {}]
  %s1 = inlined_call_operand.vmem [shape: bf16[9,32,64], index: 1, kind: input, shape index: {}]
  %s2 = inlined_call_operand.vmem [shape: bf16[2,64,64], index: 2, kind: output, shape index: {0}]
  %s3 = inlined_call_operand.vmem [shape: f32[2,8,64], index: 3, kind: output, shape index: {1}]
  %4 = xla_tuple %s2, %s3
  %s5 = sld [smem:[#allocation0]]
  $region49: #{double_conv.3} parent=0
    _
  %s7 = ssub.s32 1, %s5
  %s8 = scalar_select 0, %s7, %s5
  loop: start=0, step=1, limit=4
  $region2: #{double_conv.3} parent=0 // loop_pre_header
    _
  $region3: #{double_conv.3} parent=0 // loop_header
    %s10 = sphi 0, %s14
    %p11 = scmp.ge.s32.totalorder %s10, 4
    %s20 = sphi 0, %s22
    %s23 = sphi 0, %s20
    %s24 = sphi 0, %s23
    %s40 = sphi 0, %s24
    %s44 = sphi 0, %s44
    %s46 = sphi 0, %s44
    %s47 = sphi 0, %s46
    %s61 = sphi 0, %s47
    %s67 = sphi 0, %s69
    %s70 = sphi 0, %s67
    %s71 = sphi 0, %s70
    %s87 = sphi 0, %s71
    %s93 = sphi 0, %s95
    %s96 = sphi 0, %s93
    %s97 = sphi 0, %s96
    %s113 = sphi 0, %s97
  $region4: #{double_conv.3} parent=0 // loop_header_branch
    %13 = sbr.rel (%p11) target = $region8
  $region5: #{double_conv.3} parent=0 // loop_body
    %s15 = ssub.s32 %s10, 1
    %s16 = ssub.s32 %s10, 2
    %s17 = sadd.s32 %s10, 1
    %s18 = ssub.s32 %s10, %s17
    %p19 = scmp.eq.s32.totalorder %s18, 0
    %s21 = sadd.s32 %s20, 1
    %s22 = scalar_select %p19, %s20, %s21
    %p25 = pneg %p19
    %p26 = scmp.eq.s32.totalorder %s10, 1
    %p27 = por %p25, %p26
    %p28 = scmp.ne.s32.totalorder %s20, %s23
    %p29 = scmp.eq.s32.totalorder %s10, 0
    %p30 = por %p28, %p29
    %p31 = scmp.ne.s32.totalorder %s20, %s23
    %p32 = scmp.eq.s32.totalorder %s15, 1
    %p33 = por %p31, %p32
    %p34 = scmp.ne.s32.totalorder %s23, %s24
    %p35 = scmp.eq.s32.totalorder %s15, 0
    %p36 = por %p34, %p35
    %p37 = scmp.ne.s32.totalorder %s23, %s24
    %p38 = scmp.eq.s32.totalorder %s16, 1
    %p39 = por %p37, %p38
    %p41 = scmp.ne.s32.totalorder %s24, %s40
    %p42 = scmp.eq.s32.totalorder %s16, 0
    %p43 = por %p41, %p42
    %s45 = sadd.s32 %s44, 1
    %p48 = scmp.eq.s32.totalorder %s10, 1
    %p49 = scmp.ne.s32.totalorder %s44, %s46
    %p50 = scmp.eq.s32.totalorder %s10, 0
    %p51 = por %p49, %p50
    %p52 = scmp.ne.s32.totalorder %s44, %s46
    %p53 = scmp.eq.s32.totalorder %s15, 1
    %p54 = por %p52, %p53
    %p55 = scmp.ne.s32.totalorder %s46, %s47
    %p56 = scmp.eq.s32.totalorder %s15, 0
    %p57 = por %p55, %p56
    %p58 = scmp.ne.s32.totalorder %s46, %s47
    %p59 = scmp.eq.s32.totalorder %s16, 1
    %p60 = por %p58, %p59
    %p62 = scmp.ne.s32.totalorder %s47, %s61
    %p63 = scmp.eq.s32.totalorder %s16, 0
    %p64 = por %p62, %p63
    %s65 = ssub.s32 %s10, %s17
    %p66 = scmp.eq.s32.totalorder %s65, 0
    %s68 = sadd.s32 %s67, 1
    %s69 = scalar_select %p66, %s67, %s68
    %p72 = pneg %p66
    %p73 = scmp.eq.s32.totalorder %s10, 1
    %p74 = por %p72, %p73
    %p75 = scmp.ne.s32.totalorder %s67, %s70
    %p76 = scmp.eq.s32.totalorder %s10, 0
    %p77 = por %p75, %p76
    %p78 = scmp.ne.s32.totalorder %s67, %s70
    %p79 = scmp.eq.s32.totalorder %s15, 1
    %p80 = por %p78, %p79
    %p81 = scmp.ne.s32.totalorder %s70, %s71
    %p82 = scmp.eq.s32.totalorder %s15, 0
    %p83 = por %p81, %p82
    %p84 = scmp.ne.s32.totalorder %s70, %s71
    %p85 = scmp.eq.s32.totalorder %s16, 1
    %p86 = por %p84, %p85
    %p88 = scmp.ne.s32.totalorder %s71, %s87
    %p89 = scmp.eq.s32.totalorder %s16, 0
    %p90 = por %p88, %p89
    %s91 = ssub.s32 %s10, %s17
    %p92 = scmp.eq.s32.totalorder %s91, 0
    %s94 = sadd.s32 %s93, 1
    %s95 = scalar_select %p92, %s93, %s94
    %p98 = pneg %p92
    %p99 = scmp.eq.s32.totalorder %s10, 1
    %p100 = por %p98, %p99
    %p101 = scmp.ne.s32.totalorder %s93, %s96
    %p102 = scmp.eq.s32.totalorder %s10, 0
    %p103 = por %p101, %p102
    %p104 = scmp.ne.s32.totalorder %s93, %s96
    %p105 = scmp.eq.s32.totalorder %s15, 1
    %p106 = por %p104, %p105
    %p107 = scmp.ne.s32.totalorder %s96, %s97
    %p108 = scmp.eq.s32.totalorder %s15, 0
    %p109 = por %p107, %p108
    %p110 = scmp.ne.s32.totalorder %s96, %s97
    %p111 = scmp.eq.s32.totalorder %s16, 1
    %p112 = por %p110, %p111
    %p114 = scmp.ne.s32.totalorder %s97, %s113
    %p115 = scmp.eq.s32.totalorder %s16, 0
    %p116 = por %p114, %p115
    %p117 = scmp.le.s32.totalorder 1, %s10
    %p118 = scmp.lt.s32.totalorder %s10, 3
    %p119 = pnand %p117, %p118
    %p120 = pneg %p119
    // Predicated region
    $region9: #{double_conv.3} parent=5 // pred_check
      _
    $region10: #{double_conv.3} parent=5 // pred_check_branch
      %122 = sbr.rel (%p119) target = $region12
    $region11: #{double_conv.3} parent=5 // pred_region
      %s123 = ssub.s32 %s10, 1
      // Predicated region
      $region13: #{double_conv.3} parent=11 // pred_check
        %p124 = pneg %p57
      $region14: #{double_conv.3} parent=11 // pred_check_branch
        %126 = sbr.rel (%p124) target = $region16
      $region15: #{double_conv.3} parent=11 // pred_region
        _
      $region16: #{double_conv.3} parent=11 // pred_fallthru
        _
    $region12: #{double_conv.3} parent=5 // pred_fallthru
      _
    %p127 = scmp.lt.s32.totalorder %s10, 2
    // Predicated region
    $region17: #{double_conv.3} parent=5 // pred_check
      %p128 = pneg %p127
    $region18: #{double_conv.3} parent=5 // pred_check_branch
      %130 = sbr.rel (%p128) target = $region20
    $region19: #{double_conv.3} parent=5 // pred_region
      // Predicated region
      $region21: #{double_conv.3} parent=19 // pred_check
        %p131 = pneg %p30
      $region22: #{double_conv.3} parent=19 // pred_check_branch
        %133 = sbr.rel (%p131) target = $region24
      $region23: #{double_conv.3} parent=19 // pred_region
        %p134 = scmp.lt.s32.totalorder %s10, 1
        %s135 = scalar_select %p134, %s10, 1
        %s136 = smul.addr %s135, 8
        %s137 = smul.addr %s136, 4
        %s138 = scalar_lea.vmem %s0, %s137
      $region24: #{double_conv.3} parent=19 // pred_fallthru
        _
    $region20: #{double_conv.3} parent=5 // pred_fallthru
      _
    %p139 = scmp.le.s32.totalorder 1, %s10
    %p140 = scmp.lt.s32.totalorder %s10, 3
    %p141 = pnand %p139, %p140
    %p142 = pneg %p141
    // Predicated region
    $region25: #{double_conv.3} parent=5 // pred_check
      _
    $region26: #{double_conv.3} parent=5 // pred_check_branch
      %144 = sbr.rel (%p141) target = $region28
    $region27: #{double_conv.3} parent=5 // pred_region
      %s145 = ssub.s32 %s10, 1
      %p146 = scmp.lt.s32.totalorder %s15, 1
      %s147 = scalar_select %p146, %s15, 1
      %s148 = smul.addr %s147, 8
      %s149 = smul.addr %s148, 4
      %s150 = scalar_lea.vmem %s0, %s149
      %p151 = pneg %p36
      %p152 = pneg %p33
      %p153 = pneg %p57
      %p154 = pneg %p54
      %p155 = pneg %p83
      %p156 = pneg %p80
      %p157 = scmp.lt.s32.totalorder %s15, 1
      %s158 = scalar_select %p157, %s15, 1
      %s159 = smul.addr %s158, 8
      %s160 = smul.addr %s159, 4
      %s161 = scalar_lea.vmem %s2, %s160
      %p162 = pneg %p109
      %p163 = pneg %p106
      %p164 = scmp.lt.s32.totalorder %s15, 1
      %s165 = scalar_select %p164, %s15, 1
      %s166 = smul.addr %s165, 8
      %s167 = scalar_lea.vmem %s3, %s166
      %p168 = scmp.lt.s32.totalorder %s15, 1
      %s169 = scalar_select %p168, %s15, 1
      %s170 = smul.addr %s169, 8
      %s171 = smul.addr %s170, 4
      %s172 = scalar_lea.vmem %s0, %s171
      %p173 = scmp.lt.s32.totalorder %s15, 1
      %s174 = scalar_select %p173, %s15, 1
      %s175 = smul.addr %s174, 8
      %s176 = smul.addr %s175, 4
      %s177 = scalar_lea.vmem %s2, %s176
      %p178 = scmp.lt.s32.totalorder %s15, 1
      %s179 = scalar_select %p178, %s15, 1
      %s180 = smul.addr %s179, 8
      %s181 = scalar_lea.vmem %s3, %s180
      %v185 = vld [vmem:[%s172] sm:$0xf]
      %v186 = vld [vmem:[%s172 + $0x4] sm:$0xf]
      %v187 = vld [vmem:[%s172 + $0x8] sm:$0xf]
      %v188 = vld [vmem:[%s172 + $0xc] sm:$0xf]
      %v189 = vld [vmem:[%s172 + $0x10] sm:$0xf]
      %v190 = vld [vmem:[%s172 + $0x14] sm:$0xf]
      %v191 = vld [vmem:[%s172 + $0x18] sm:$0xf]
      %v192 = vld [vmem:[%s172 + $0x1c] sm:$0xf]
      %v201 = vunpack.c.l.b16 %v185
      %v202 = vunpack.c.l.b16 %v186
      %v203 = vunpack.c.l.b16 %v187
      %v204 = vunpack.c.l.b16 %v188
      %v205 = vunpack.c.l.b16 %v189
      %v206 = vunpack.c.l.b16 %v190
      %v207 = vunpack.c.l.b16 %v191
      %v208 = vunpack.c.l.b16 %v192
      %v209 = vpack.c.b16 %v202, %v201
      %v210 = vpack.c.b16 %v204, %v203
      %v211 = vpack.c.b16 %v206, %v205
      %v212 = vpack.c.b16 %v208, %v207
      %v217 = vlaneseq
      %v218 = vshrl.u32 %v217, 7
      %v219 = vadd.s32 %v218, 8
      %v220 = vadd.s32 %v218, 16
      %v221 = vadd.s32 %v218, 24
      %v222 = vadd.s32 %v218, 32
      %v223 = vadd.s32 %v218, 40
      %v224 = vadd.s32 %v218, 48
      %v225 = vadd.s32 %v218, 56
      %vm226 = vcmp.lt.s32.totalorder %v218, 0
      %v227 = vsub.s32 0, %v218
      %v228 = vsel %vm226, %v227, %v218
      %v229 = vshrl.u32 %v228, 3
      %v230 = vand.u32 %v228, 7
      %v231 = vsub.s32 0, %v230
      %v232 = vsel %vm226, %v231, %v230
      %vm233 = vcmp.lt.s32.totalorder %v219, 0
      %v234 = vsub.s32 0, %v219
      %v235 = vsel %vm233, %v234, %v219
      %v236 = vshrl.u32 %v235, 3
      %v237 = vand.u32 %v235, 7
      %v238 = vsub.s32 0, %v237
      %v239 = vsel %vm233, %v238, %v237
      %vm240 = vcmp.lt.s32.totalorder %v220, 0
      %v241 = vsub.s32 0, %v220
      %v242 = vsel %vm240, %v241, %v220
      %v243 = vshrl.u32 %v242, 3
      %v244 = vand.u32 %v242, 7
      %v245 = vsub.s32 0, %v244
      %v246 = vsel %vm240, %v245, %v244
      %vm247 = vcmp.lt.s32.totalorder %v221, 0
      %v248 = vsub.s32 0, %v221
      %v249 = vsel %vm247, %v248, %v221
      %v250 = vshrl.u32 %v249, 3
      %v251 = vand.u32 %v249, 7
      %v252 = vsub.s32 0, %v251
      %v253 = vsel %vm247, %v252, %v251
      %vm254 = vcmp.lt.s32.totalorder %v222, 0
      %v255 = vsub.s32 0, %v222
      %v256 = vsel %vm254, %v255, %v222
      %v257 = vshrl.u32 %v256, 3
      %v258 = vand.u32 %v256, 7
      %v259 = vsub.s32 0, %v258
      %v260 = vsel %vm254, %v259, %v258
      %vm261 = vcmp.lt.s32.totalorder %v223, 0
      %v262 = vsub.s32 0, %v223
      %v263 = vsel %vm261, %v262, %v223
      %v264 = vshrl.u32 %v263, 3
      %v265 = vand.u32 %v263, 7
      %v266 = vsub.s32 0, %v265
      %v267 = vsel %vm261, %v266, %v265
      %vm268 = vcmp.lt.s32.totalorder %v224, 0
      %v269 = vsub.s32 0, %v224
      %v270 = vsel %vm268, %v269, %v224
      %v271 = vshrl.u32 %v270, 3
      %v272 = vand.u32 %v270, 7
      %v273 = vsub.s32 0, %v272
      %v274 = vsel %vm268, %v273, %v272
      %vm275 = vcmp.lt.s32.totalorder %v225, 0
      %v276 = vsub.s32 0, %v225
      %v277 = vsel %vm275, %v276, %v225
      %v278 = vshrl.u32 %v277, 3
      %v279 = vand.u32 %v277, 7
      %v280 = vsub.s32 0, %v279
      %v281 = vsel %vm275, %v280, %v279
      %vm282 = vcmp.ne.s32.totalorder %v232, 0
      %vm283 = vcmp.ne.s32.totalorder %v239, 0
      %vm284 = vcmp.ne.s32.totalorder %v246, 0
      %vm285 = vcmp.ne.s32.totalorder %v253, 0
      %vm286 = vcmp.ne.s32.totalorder %v260, 0
      %vm287 = vcmp.ne.s32.totalorder %v267, 0
      %vm288 = vcmp.ne.s32.totalorder %v274, 0
      %vm289 = vcmp.ne.s32.totalorder %v281, 0
      %vm290 = vcmp.lt.s32.totalorder %v232, 0
      %vm291 = vcmp.lt.s32.totalorder %v239, 0
      %vm292 = vcmp.lt.s32.totalorder %v246, 0
      %vm293 = vcmp.lt.s32.totalorder %v253, 0
      %vm294 = vcmp.lt.s32.totalorder %v260, 0
      %vm295 = vcmp.lt.s32.totalorder %v267, 0
      %vm296 = vcmp.lt.s32.totalorder %v274, 0
      %vm297 = vcmp.lt.s32.totalorder %v281, 0
      %vm298 = vmand %vm290, %vm282
      %vm299 = vmand %vm291, %vm283
      %vm300 = vmand %vm292, %vm284
      %vm301 = vmand %vm293, %vm285
      %vm302 = vmand %vm294, %vm286
      %vm303 = vmand %vm295, %vm287
      %vm304 = vmand %vm296, %vm288
      %vm305 = vmand %vm297, %vm289
      %v306 = vadd.s32 %v232, 8
      %v307 = vadd.s32 %v239, 8
      %v308 = vadd.s32 %v246, 8
      %v309 = vadd.s32 %v253, 8
      %v310 = vadd.s32 %v260, 8
      %v311 = vadd.s32 %v267, 8
      %v312 = vadd.s32 %v274, 8
      %v313 = vadd.s32 %v281, 8
      %v314 = vsel %vm298, %v306, %v232
      %v315 = vsel %vm299, %v307, %v239
      %v316 = vsel %vm300, %v308, %v246
      %v317 = vsel %vm301, %v309, %v253
      %v318 = vsel %vm302, %v310, %v260
      %v319 = vsel %vm303, %v311, %v267
      %v320 = vsel %vm304, %v312, %v274
      %v321 = vsel %vm305, %v313, %v281
      %vm322 = vcmp.ne.s32.totalorder %v314, 0
      %vm323 = vcmp.ne.s32.totalorder %v315, 0
      %vm324 = vcmp.ne.s32.totalorder %v316, 0
      %vm325 = vcmp.ne.s32.totalorder %v317, 0
      %vm326 = vcmp.ne.s32.totalorder %v318, 0
      %vm327 = vcmp.ne.s32.totalorder %v319, 0
      %vm328 = vcmp.ne.s32.totalorder %v320, 0
      %vm329 = vcmp.ne.s32.totalorder %v321, 0
      %vm330 = vcmp.ne.s32.totalorder %v314, 7
      %vm331 = vcmp.ne.s32.totalorder %v315, 7
      %vm332 = vcmp.ne.s32.totalorder %v316, 7
      %vm333 = vcmp.ne.s32.totalorder %v317, 7
      %vm334 = vcmp.ne.s32.totalorder %v318, 7
      %vm335 = vcmp.ne.s32.totalorder %v319, 7
      %vm336 = vcmp.ne.s32.totalorder %v320, 7
      %vm337 = vcmp.ne.s32.totalorder %v321, 7
      %vm338 = vmpackc.low %vm322, %vm322
      %vm339 = vmpackc.low %vm323, %vm323
      %vm340 = vmpackc.low %vm324, %vm324
      %vm341 = vmpackc.low %vm325, %vm325
      %vm342 = vmpackc.low %vm326, %vm326
      %vm343 = vmpackc.low %vm327, %vm327
      %vm344 = vmpackc.low %vm328, %vm328
      %vm345 = vmpackc.low %vm329, %vm329
      %v346 = vsel %vm338, 65537, 0
      %v347 = vsel %vm339, 65537, 0
      %v348 = vsel %vm340, 65537, 0
      %v349 = vsel %vm341, 65537, 0
      %v350 = vsel %vm342, 65537, 0
      %v351 = vsel %vm343, 65537, 0
      %v352 = vsel %vm344, 65537, 0
      %v353 = vsel %vm345, 65537, 0
      %v354 = vunpack.c.l.b16 %v346
      %v355 = vunpack.c.l.b16 %v347
      %v356 = vunpack.c.l.b16 %v348
      %v357 = vunpack.c.l.b16 %v349
      %v358 = vunpack.c.l.b16 %v350
      %v359 = vunpack.c.l.b16 %v351
      %v360 = vunpack.c.l.b16 %v352
      %v361 = vunpack.c.l.b16 %v353
      %v362 = vpack.c.b16 %v355, %v354
      %v363 = vpack.c.b16 %v357, %v356
      %v364 = vpack.c.b16 %v359, %v358
      %v365 = vpack.c.b16 %v361, %v360
      %vm366 = vsmask.f32 3328
      %v368 = vshrl.u32 %v362, 16
      %v370 = vrot.slane %v368, 4
      %v371 = vshll.u32 %v362, 16
      %v373 = vrot.slane %v371, 5
      %v374 = vor.u32 %v370, %v373
      %v376 = vshrl.u32 %v363, 16
      %v378 = vrot.slane %v376, 4
      %v379 = vshll.u32 %v363, 16
      %v381 = vrot.slane %v379, 5
      %v382 = vor.u32 %v378, %v381
      %v383 = vsel %vm366, %v374, %v382
      %v385 = vshrl.u32 %v364, 16
      %v387 = vrot.slane %v385, 4
      %v388 = vshll.u32 %v364, 16
      %v390 = vrot.slane %v388, 5
      %v391 = vor.u32 %v387, %v390
      %v392 = vsel %vm366, %v382, %v391
      %v394 = vshrl.u32 %v365, 16
      %v396 = vrot.slane %v394, 4
      %v397 = vshll.u32 %v365, 16
      %v399 = vrot.slane %v397, 5
      %v400 = vor.u32 %v396, %v399
      %v401 = vsel %vm366, %v391, %v400
      %vm402 = vcmp.ne.s16.totalorder %v383, 0
      %vm403 = vcmp.ne.s16.totalorder %v392, 0
      %vm404 = vcmp.ne.s16.totalorder %v401, 0
      %vm405 = vcmp.ne.s16.totalorder %v400, 0
      %v406 = vsel %vm402, %v209, 0
      %v407 = vsel %vm403, %v210, 0
      %v408 = vsel %vm404, %v211, 0
      %v409 = vsel %vm405, %v212, 0
      %v410 = vld [vmem:[%s1] sm:$0xf]
      %v411 = vld [vmem:[%s1 + $0x4] sm:$0xf]
      %v412 = vld [vmem:[%s1 + $0x8] sm:$0xf]
      %v413 = vld [vmem:[%s1 + $0xc] sm:$0xf]
      %s414 = scalar_lea.vmem %s1, 16
      %v415 = vld [vmem:[%s414] sm:$0xf]
      %v416 = vld [vmem:[%s414 + $0x4] sm:$0xf]
      %v417 = vld [vmem:[%s414 + $0x8] sm:$0xf]
      %v418 = vld [vmem:[%s414 + $0xc] sm:$0xf]
      %vm420 = vcmask 1043456
      %v421 = vrot.slane 0, 4
      %v422 = vrot.slane %v209, 4
      %v423 = vsel %vm420, %v421, %v422
      %v424 = vrot.slane %v210, 4
      %v425 = vsel %vm420, %v422, %v424
      %v426 = vrot.slane %v211, 4
      %v427 = vsel %vm420, %v424, %v426
      %v428 = vrot.slane %v212, 4
      %v429 = vsel %vm420, %v426, %v428
      %v434 = vunpack.c.l.b16 %v415
      %v435 = vunpack.c.l.b16 %v416
      %v436 = vunpack.c.l.b16 %v417
      %v437 = vunpack.c.l.b16 %v418
      %v438 = vpack.c.b16 %v435, %v434
      %v439 = vpack.c.b16 %v437, %v436
      %vm442 = vcmask 261120
      %v444 = vsel %vm442, %v423, 0
      %v447 = vsel %vm442, %v425, 0
      %v450 = vsel %vm442, %v427, 0
      %v453 = vsel %vm442, %v429, 0
      %455 = vmatprep.subr.bf16.mxu0 0
      %456 = vmatpush1.bf16.msra.mxu0 %v438
      %457 = vmatprep.subr.bf16.mxu0 0
      %458 = vmatpush1.bf16.msra.mxu0 %v439
      %459 = vmatprep.subr.bf16.mxu0 0
      %460 = vmatpush1.bf16.msra.mxu0 0
      %461 = vmatprep.subr.bf16.mxu0 0
      %462 = vmatpush1.bf16.msra.mxu0 0
      %463 = vmatprep.subr.bf16.mxu0 0
      %464 = vmatpush1.bf16.msra.mxu0 0
      %465 = vmatprep.subr.bf16.mxu0 0
      %466 = vmatpush1.bf16.msra.mxu0 0
      %467 = vmatprep.subr.bf16.mxu0 0
      %468 = vmatpush1.bf16.msra.mxu0 0
      %469 = vmatprep.subr.bf16.mxu0 0
      %470 = vmatpush1.bf16.msra.mxu0 0
      %471 = vmatprep.subr.bf16.mxu0 0
      %472 = vmatpush1.bf16.msra.mxu0 0
      %473 = vmatprep.subr.bf16.mxu0 0
      %474 = vmatpush1.bf16.msra.mxu0 0
      %475 = vmatprep.subr.bf16.mxu0 0
      %476 = vmatpush1.bf16.msra.mxu0 0
      %477 = vmatprep.subr.bf16.mxu0 0
      %478 = vmatpush1.bf16.msra.mxu0 0
      %479 = vmatprep.subr.bf16.mxu0 0
      %480 = vmatpush1.bf16.msra.mxu0 0
      %481 = vmatprep.subr.bf16.mxu0 0
      %482 = vmatpush1.bf16.msra.mxu0 0
      %483 = vmatprep.subr.bf16.mxu0 0
      %484 = vmatpush1.bf16.msra.mxu0 0
      %485 = vmatprep.subr.bf16.mxu0 0
      %486 = vmatpush1.bf16.msra.mxu0 0
      %487 = vmatprep.mubr.bf16.mxu0 0
      %488 = vmatmul.mubr.bf16.gmra.mrb[0].mxu0 %v444
      %v489 = vpop.f32.mrb[0].mxu0
      %v490 = vadd.f32 0.0, %v489
      %v491 = vpop.f32.mrb[0].mxu0
      %v492 = vpop.f32.mrb[0].mxu0
      %v493 = vadd.f32 0.0, %v492
      %v494 = vpop.f32.mrb[0].mxu0
      %495 = vmatprep.mubr.bf16.mxu0 0
      %496 = vmatmul.mubr.bf16.gmra.mrb[0].mxu0 %v447
      %v497 = vpop.f32.mrb[0].mxu0
      %v498 = vadd.f32 0.0, %v497
      %v499 = vpop.f32.mrb[0].mxu0
      %v500 = vpop.f32.mrb[0].mxu0
      %v501 = vadd.f32 0.0, %v500
      %v502 = vpop.f32.mrb[0].mxu0
      %503 = vmatprep.mubr.bf16.mxu0 0
      %504 = vmatmul.mubr.bf16.gmra.mrb[0].mxu0 %v450
      %v505 = vpop.f32.mrb[0].mxu0
      %v506 = vadd.f32 0.0, %v505
      %v507 = vpop.f32.mrb[0].mxu0
      %v508 = vpop.f32.mrb[0].mxu0
      %v509 = vadd.f32 0.0, %v508
      %v510 = vpop.f32.mrb[0].mxu0
      %511 = vmatprep.mubr.bf16.mxu0 0
      %512 = vmatmul.mubr.bf16.gmra.mrb[0].mxu0 %v453
      %v513 = vpop.f32.mrb[0].mxu0
      %v514 = vadd.f32 0.0, %v513
      %v515 = vpop.f32.mrb[0].mxu0
      %v516 = vpop.f32.mrb[0].mxu0
      %v517 = vadd.f32 0.0, %v516
      %v518 = vpop.f32.mrb[0].mxu0
      %519 = vdwg.mxu0
      %vm520 = vsmask.f32 4352
      %v522 = vshrl.u32 0, 16
      %v524 = vrot.slane %v522, 3
      %v525 = vshll.u32 0, 16
      %v527 = vrot.slane %v525, 4
      %v528 = vor.u32 %v524, %v527
      %v530 = vshrl.u32 %v406, 16
      %v532 = vrot.slane %v530, 3
      %v533 = vshll.u32 %v406, 16
      %v535 = vrot.slane %v533, 4
      %v536 = vor.u32 %v532, %v535
      %v537 = vsel %vm520, %v528, %v536
      %v539 = vshrl.u32 %v407, 16
      %v541 = vrot.slane %v539, 3
      %v542 = vshll.u32 %v407, 16
      %v544 = vrot.slane %v542, 4
      %v545 = vor.u32 %v541, %v544
      %v546 = vsel %vm520, %v536, %v545
      %v548 = vshrl.u32 %v408, 16
      %v550 = vrot.slane %v548, 3
      %v551 = vshll.u32 %v408, 16
      %v553 = vrot.slane %v551, 4
      %v554 = vor.u32 %v550, %v553
      %v555 = vsel %vm520, %v545, %v554
      %v557 = vshrl.u32 %v409, 16
      %v559 = vrot.slane %v557, 3
      %v560 = vshll.u32 %v409, 16
      %v562 = vrot.slane %v560, 4
      %v563 = vor.u32 %v559, %v562
      %v564 = vsel %vm520, %v554, %v563
      %v569 = vunpack.c.l.b16 %v410
      %v570 = vunpack.c.l.b16 %v411
      %v571 = vunpack.c.l.b16 %v412
      %v572 = vunpack.c.l.b16 %v413
      %v573 = vpack.c.b16 %v570, %v569
      %v574 = vpack.c.b16 %v572, %v571
      %v578 = vsel %vm442, %v537, 0
      %v581 = vsel %vm442, %v546, 0
      %v584 = vsel %vm442, %v555, 0
      %v587 = vsel %vm442, %v564, 0
      %589 = vmatprep.subr.bf16.mxu0 0
      %590 = vmatpush1.bf16.msra.mxu0 %v573
      %591 = vmatprep.subr.bf16.mxu0 0
      %592 = vmatpush1.bf16.msra.mxu0 %v574
      %593 = vmatprep.subr.bf16.mxu0 0
      %594 = vmatpush1.bf16.msra.mxu0 0
      %595 = vmatprep.subr.bf16.mxu0 0
      %596 = vmatpush1.bf16.msra.mxu0 0
      %597 = vmatprep.subr.bf16.mxu0 0
      %598 = vmatpush1.bf16.msra.mxu0 0
      %599 = vmatprep.subr.bf16.mxu0 0
      %600 = vmatpush1.bf16.msra.mxu0 0
      %601 = vmatprep.subr.bf16.mxu0 0
      %602 = vmatpush1.bf16.msra.mxu0 0
      %603 = vmatprep.subr.bf16.mxu0 0
      %604 = vmatpush1.bf16.msra.mxu0 0
      %605 = vmatprep.subr.bf16.mxu0 0
      %606 = vmatpush1.bf16.msra.mxu0 0
      %607 = vmatprep.subr.bf16.mxu0 0
      %608 = vmatpush1.bf16.msra.mxu0 0
      %609 = vmatprep.subr.bf16.mxu0 0
      %610 = vmatpush1.bf16.msra.mxu0 0
      %611 = vmatprep.subr.bf16.mxu0 0
      %612 = vmatpush1.bf16.msra.mxu0 0
      %613 = vmatprep.subr.bf16.mxu0 0
      %614 = vmatpush1.bf16.msra.mxu0 0
      %615 = vmatprep.subr.bf16.mxu0 0
      %616 = vmatpush1.bf16.msra.mxu0 0
      %617 = vmatprep.subr.bf16.mxu0 0
      %618 = vmatpush1.bf16.msra.mxu0 0
      %619 = vmatprep.subr.bf16.mxu0 0
      %620 = vmatpush1.bf16.msra.mxu0 0
      %621 = vmatprep.mubr.bf16.mxu0 0
      %622 = vmatmul.mubr.bf16.gmra.mrb[0].mxu0 %v578
      %v623 = vpop.f32.mrb[0].mxu0
      %v624 = vadd.f32 %v490, %v623
      %v625 = vpop.f32.mrb[0].mxu0
      %v626 = vpop.f32.mrb[0].mxu0
      %v627 = vadd.f32 %v493, %v626
      %v628 = vpop.f32.mrb[0].mxu0
      %629 = vmatprep.mubr.bf16.mxu0 0
      %630 = vmatmul.mubr.bf16.gmra.mrb[0].mxu0 %v581
      %v631 = vpop.f32.mrb[0].mxu0
      %v632 = vadd.f32 %v498, %v631
      %v633 = vpop.f32.mrb[0].mxu0
      %v634 = vpop.f32.mrb[0].mxu0
      %v635 = vadd.f32 %v501, %v634
      %v636 = vpop.f32.mrb[0].mxu0
      %637 = vmatprep.mubr.bf16.mxu0 0
      %638 = vmatmul.mubr.bf16.gmra.mrb[0].mxu0 %v584
      %v639 = vpop.f32.mrb[0].mxu0
      %v640 = vadd.f32 %v506, %v639
      %v641 = vpop.f32.mrb[0].mxu0
      %v642 = vpop.f32.mrb[0].mxu0
      %v643 = vadd.f32 %v509, %v642
      %v644 = vpop.f32.mrb[0].mxu0
      %645 = vmatprep.mubr.bf16.mxu0 0
      %646 = vmatmul.mubr.bf16.gmra.mrb[0].mxu0 %v587
      %v647 = vpop.f32.mrb[0].mxu0
      %v648 = vadd.f32 %v514, %v647
      %v649 = vpop.f32.mrb[0].mxu0
      %v650 = vpop.f32.mrb[0].mxu0
      %v651 = vadd.f32 %v517, %v650
      %v652 = vpop.f32.mrb[0].mxu0
      %653 = vdwg.mxu0
      %vm654 = vmpackc.low %vm330, %vm330
      %vm655 = vmpackc.low %vm331, %vm331
      %vm656 = vmpackc.low %vm332, %vm332
      %vm657 = vmpackc.low %vm333, %vm333
      %vm658 = vmpackc.low %vm334, %vm334
      %vm659 = vmpackc.low %vm335, %vm335
      %vm660 = vmpackc.low %vm336, %vm336
      %vm661 = vmpackc.low %vm337, %vm337
      %v662 = vsel %vm654, 65537, 0
      %v663 = vsel %vm655, 65537, 0
      %v664 = vsel %vm656, 65537, 0
      %v665 = vsel %vm657, 65537, 0
      %v666 = vsel %vm658, 65537, 0
      %v667 = vsel %vm659, 65537, 0
      %v668 = vsel %vm660, 65537, 0
      %v669 = vsel %vm661, 65537, 0
      %v670 = vunpack.c.l.b16 %v662
      %v671 = vunpack.c.l.b16 %v663
      %v672 = vunpack.c.l.b16 %v664
      %v673 = vunpack.c.l.b16 %v665
      %v674 = vunpack.c.l.b16 %v666
      %v675 = vunpack.c.l.b16 %v667
      %v676 = vunpack.c.l.b16 %v668
      %v677 = vunpack.c.l.b16 %v669
      %v678 = vpack.c.b16 %v671, %v670
      %v679 = vpack.c.b16 %v673, %v672
      %v680 = vpack.c.b16 %v675, %v674
      %v681 = vpack.c.b16 %v677, %v676
      %v683 = vshrl.u32 %v678, 16
      %v685 = vrot.slane %v683, 3
      %v686 = vshll.u32 %v678, 16
      %v688 = vrot.slane %v686, 4
      %v689 = vor.u32 %v685, %v688
      %v691 = vshrl.u32 %v679, 16
      %v693 = vrot.slane %v691, 3
      %v694 = vshll.u32 %v679, 16
      %v696 = vrot.slane %v694, 4
      %v697 = vor.u32 %v693, %v696
      %v698 = vsel %vm520, %v689, %v697
      %v700 = vshrl.u32 %v680, 16
      %v702 = vrot.slane %v700, 3
      %v703 = vshll.u32 %v680, 16
      %v705 = vrot.slane %v703, 4
      %v706 = vor.u32 %v702, %v705
      %v707 = vsel %vm520, %v697, %v706
      %v709 = vshrl.u32 %v681, 16
      %v711 = vrot.slane %v709, 3
      %v712 = vshll.u32 %v681, 16
      %v714 = vrot.slane %v712, 4
      %v715 = vor.u32 %v711, %v714
      %v716 = vsel %vm520, %v706, %v715
      %vm717 = vcmp.ne.s16.totalorder %v698, 0
      %vm718 = vcmp.ne.s16.totalorder %v707, 0
      %vm719 = vcmp.ne.s16.totalorder %v716, 0
      %vm720 = vcmp.ne.s16.totalorder %v715, 0
      %v721 = vsel %vm717, %v209, 0
      %v722 = vsel %vm718, %v210, 0
      %v723 = vsel %vm719, %v211, 0
      %v724 = vsel %vm720, %v212, 0
      %s725 = scalar_lea.vmem %s1, 32
      %v726 = vld [vmem:[%s725] sm:$0xf]
      %v727 = vld [vmem:[%s725 + $0x4] sm:$0xf]
      %v728 = vld [vmem:[%s725 + $0x8] sm:$0xf]
      %v729 = vld [vmem:[%s725 + $0xc] sm:$0xf]
      %v730 = vrot.slane %v522, 4
      %v731 = vrot.slane %v525, 5
      %v732 = vor.u32 %v730, %v731
      %v734 = vshrl.u32 %v721, 16
      %v736 = vrot.slane %v734, 4
      %v737 = vshll.u32 %v721, 16
      %v739 = vrot.slane %v737, 5
      %v740 = vor.u32 %v736, %v739
      %v741 = vsel %vm366, %v732, %v740
      %v743 = vshrl.u32 %v722, 16
      %v745 = vrot.slane %v743, 4
      %v746 = vshll.u32 %v722, 16
      %v748 = vrot.slane %v746, 5
      %v749 = vor.u32 %v745, %v748
      %v750 = vsel %vm366, %v740, %v749
      %v752 = vshrl.u32 %v723, 16
      %v754 = vrot.slane %v752, 4
      %v755 = vshll.u32 %v723, 16
      %v757 = vrot.slane %v755, 5
      %v758 = vor.u32 %v754, %v757
      %v759 = vsel %vm366, %v749, %v758
      %v761 = vshrl.u32 %v724, 16
      %v763 = vrot.slane %v761, 4
      %v764 = vshll.u32 %v724, 16
      %v766 = vrot.slane %v764, 5
      %v767 = vor.u32 %v763, %v766
      %v768 = vsel %vm366, %v758, %v767
      %v773 = vunpack.c.l.b16 %v726
      %v774 = vunpack.c.l.b16 %v727
      %v775 = vunpack.c.l.b16 %v728
      %v776 = vunpack.c.l.b16 %v729
      %v777 = vpack.c.b16 %v774, %v773
      %v778 = vpack.c.b16 %v776, %v775
      %v782 = vsel %vm442, %v741, 0
      %v785 = vsel %vm442, %v750, 0
      %v788 = vsel %vm442, %v759, 0
      %v791 = vsel %vm442, %v768, 0
      %793 = vmatprep.subr.bf16.mxu0 0
      %794 = vmatpush1.bf16.msra.mxu0 %v777
      %795 = vmatprep.subr.bf16.mxu0 0
      %796 = vmatpush1.bf16.msra.mxu0 %v778
      %797 = vmatprep.subr.bf16.mxu0 0
      %798 = vmatpush1.bf16.msra.mxu0 0
      %799 = vmatprep.subr.bf16.mxu0 0
      %800 = vmatpush1.bf16.msra.mxu0 0
      %801 = vmatprep.subr.bf16.mxu0 0
      %802 = vmatpush1.bf16.msra.mxu0 0
      %803 = vmatprep.subr.bf16.mxu0 0
      %804 = vmatpush1.bf16.msra.mxu0 0
      %805 = vmatprep.subr.bf16.mxu0 0
      %806 = vmatpush1.bf16.msra.mxu0 0
      %807 = vmatprep.subr.bf16.mxu0 0
      %808 = vmatpush1.bf16.msra.mxu0 0
      %809 = vmatprep.subr.bf16.mxu0 0
      %810 = vmatpush1.bf16.msra.mxu0 0
      %811 = vmatprep.subr.bf16.mxu0 0
      %812 = vmatpush1.bf16.msra.mxu0 0
      %813 = vmatprep.subr.bf16.mxu0 0
      %814 = vmatpush1.bf16.msra.mxu0 0
      %815 = vmatprep.subr.bf16.mxu0 0
      %816 = vmatpush1.bf16.msra.mxu0 0
      %817 = vmatprep.subr.bf16.mxu0 0
      %818 = vmatpush1.bf16.msra.mxu0 0
      %819 = vmatprep.subr.bf16.mxu0 0
      %820 = vmatpush1.bf16.msra.mxu0 0
      %821 = vmatprep.subr.bf16.mxu0 0
      %822 = vmatpush1.bf16.msra.mxu0 0
      %823 = vmatprep.subr.bf16.mxu0 0
      %824 = vmatpush1.bf16.msra.mxu0 0
      %825 = vmatprep.mubr.bf16.mxu0 0
      %826 = vmatmul.mubr.bf16.gmra.mrb[0].mxu0 %v782
      %v827 = vpop.f32.mrb[0].mxu0
      %v828 = vadd.f32 0.0, %v827
      %v829 = vpop.f32.mrb[0].mxu0
      %v830 = vpop.f32.mrb[0].mxu0
      %v831 = vadd.f32 0.0, %v830
      %v832 = vpop.f32.mrb[0].mxu0
      %833 = vmatprep.mubr.bf16.mxu0 0
      %834 = vmatmul.mubr.bf16.gmra.mrb[0].mxu0 %v785
      %v835 = vpop.f32.mrb[0].mxu0
      %v836 = vadd.f32 0.0, %v835
      %v837 = vpop.f32.mrb[0].mxu0
      %v838 = vpop.f32.mrb[0].mxu0
      %v839 = vadd.f32 0.0, %v838
      %v840 = vpop.f32.mrb[0].mxu0
      %841 = vmatprep.mubr.bf16.mxu0 0
      %842 = vmatmul.mubr.bf16.gmra.mrb[0].mxu0 %v788
      %v843 = vpop.f32.mrb[0].mxu0
      %v844 = vadd.f32 0.0, %v843
      %v845 = vpop.f32.mrb[0].mxu0
      %v846 = vpop.f32.mrb[0].mxu0
      %v847 = vadd.f32 0.0, %v846
      %v848 = vpop.f32.mrb[0].mxu0
      %849 = vmatprep.mubr.bf16.mxu0 0
      %850 = vmatmul.mubr.bf16.gmra.mrb[0].mxu0 %v791
      %v851 = vpop.f32.mrb[0].mxu0
      %v852 = vadd.f32 0.0, %v851
      %v853 = vpop.f32.mrb[0].mxu0
      %v854 = vpop.f32.mrb[0].mxu0
      %v855 = vadd.f32 0.0, %v854
      %v856 = vpop.f32.mrb[0].mxu0
      %857 = vdwg.mxu0
      %v858 = vadd.f32 %v624, %v828
      %v859 = vadd.f32 %v627, %v831
      %v860 = vadd.f32 %v632, %v836
      %v861 = vadd.f32 %v635, %v839
      %v862 = vadd.f32 %v640, %v844
      %v863 = vadd.f32 %v643, %v847
      %v864 = vadd.f32 %v648, %v852
      %v865 = vadd.f32 %v651, %v855
      %vm866 = vsmask.f32 7424
      %v867 = vrot.slane %v371, 1
      %v868 = vor.u32 %v368, %v867
      %v869 = vrot.slane %v379, 1
      %v870 = vsel %vm866, %v868, %v869
      %v871 = vor.u32 %v376, %v869
      %v872 = vrot.slane %v388, 1
      %v873 = vsel %vm866, %v871, %v872
      %v874 = vor.u32 %v385, %v872
      %v875 = vrot.slane %v397, 1
      %v876 = vsel %vm866, %v874, %v875
      %v877 = vor.u32 %v394, %v875
      %vm878 = vcmp.ne.s16.totalorder %v870, 0
      %vm879 = vcmp.ne.s16.totalorder %v873, 0
      %vm880 = vcmp.ne.s16.totalorder %v876, 0
      %vm881 = vcmp.ne.s16.totalorder %v877, 0
      %v882 = vsel %vm878, %v209, 0
      %v883 = vsel %vm879, %v210, 0
      %v884 = vsel %vm880, %v211, 0
      %v885 = vsel %vm881, %v212, 0
      %s886 = scalar_lea.vmem %s1, 48
      %v887 = vld [vmem:[%s886] sm:$0xf]
      %v888 = vld [vmem:[%s886 + $0x4] sm:$0xf]
      %v889 = vld [vmem:[%s886 + $0x8] sm:$0xf]
      %v890 = vld [vmem:[%s886 + $0xc] sm:$0xf]
      %vm891 = vsmask.f32 256
      %v892 = vrot.slane %v522, 7
      %v894 = vshrl.u32 %v882, 16
      %v896 = vrot.slane %v894, 7
      %v897 = vshll.u32 %v882, 16
      %v899 = vor.u32 %v896, %v897
      %v900 = vsel %vm891, %v892, %v899
      %v902 = vshrl.u32 %v883, 16
      %v904 = vrot.slane %v902, 7
      %v905 = vshll.u32 %v883, 16
      %v907 = vor.u32 %v904, %v905
      %v908 = vsel %vm891, %v896, %v907
      %v910 = vshrl.u32 %v884, 16
      %v912 = vrot.slane %v910, 7
      %v913 = vshll.u32 %v884, 16
      %v915 = vor.u32 %v912, %v913
      %v916 = vsel %vm891, %v904, %v915
      %v918 = vshrl.u32 %v885, 16
      %v920 = vrot.slane %v918, 7
      %v921 = vshll.u32 %v885, 16
      %v923 = vor.u32 %v920, %v921
      %v924 = vsel %vm891, %v912, %v923
      %v929 = vunpack.c.l.b16 %v887
      %v930 = vunpack.c.l.b16 %v888
      %v931 = vunpack.c.l.b16 %v889
      %v932 = vunpack.c.l.b16 %v890
      %v933 = vpack.c.b16 %v930, %v929
      %v934 = vpack.c.b16 %v932, %v931
      %v938 = vsel %vm442, %v900, 0
      %v941 = vsel %vm442, %v908, 0
      %v944 = vsel %vm442, %v916, 0
      %v947 = vsel %vm442, %v924, 0
      %949 = vmatprep.subr.bf16.mxu0 0
      %950 = vmatpush1.bf16.msra.mxu0 %v933
      %951 = vmatprep.subr.bf16.mxu0 0
      %952 = vmatpush1.bf16.msra.mxu0 %v934
      %953 = vmatprep.subr.bf16.mxu0 0
      %954 = vmatpush1.bf16.msra.mxu0 0
      %955 = vmatprep.subr.bf16.mxu0 0
      %956 = vmatpush1.bf16.msra.mxu0 0
      %957 = vmatprep.subr.bf16.mxu0 0
      %958 = vmatpush1.bf16.msra.mxu0 0
      %959 = vmatprep.subr.bf16.mxu0 0
      %960 = vmatpush1.bf16.msra.mxu0 0
      %961 = vmatprep.subr.bf16.mxu0 0
      %962 = vmatpush1.bf16.msra.mxu0 0
      %963 = vmatprep.subr.bf16.mxu0 0
      %964 = vmatpush1.bf16.msra.mxu0 0
      %965 = vmatprep.subr.bf16.mxu0 0
      %966 = vmatpush1.bf16.msra.mxu0 0
      %967 = vmatprep.subr.bf16.mxu0 0
      %968 = vmatpush1.bf16.msra.mxu0 0
      %969 = vmatprep.subr.bf16.mxu0 0
      %970 = vmatpush1.bf16.msra.mxu0 0
      %971 = vmatprep.subr.bf16.mxu0 0
      %972 = vmatpush1.bf16.msra.mxu0 0
      %973 = vmatprep.subr.bf16.mxu0 0
      %974 = vmatpush1.bf16.msra.mxu0 0
      %975 = vmatprep.subr.bf16.mxu0 0
      %976 = vmatpush1.bf16.msra.mxu0 0
      %977 = vmatprep.subr.bf16.mxu0 0
      %978 = vmatpush1.bf16.msra.mxu0 0
      %979 = vmatprep.subr.bf16.mxu0 0
      %980 = vmatpush1.bf16.msra.mxu0 0
      %981 = vmatprep.mubr.bf16.mxu0 0
      %982 = vmatmul.mubr.bf16.gmra.mrb[0].mxu0 %v938
      %v983 = vpop.f32.mrb[0].mxu0
      %v984 = vadd.f32 0.0, %v983
      %v985 = vpop.f32.mrb[0].mxu0
      %v986 = vpop.f32.mrb[0].mxu0
      %v987 = vadd.f32 0.0, %v986
      %v988 = vpop.f32.mrb[0].mxu0
      %989 = vmatprep.mubr.bf16.mxu0 0
      %990 = vmatmul.mubr.bf16.gmra.mrb[0].mxu0 %v941
      %v991 = vpop.f32.mrb[0].mxu0
      %v992 = vadd.f32 0.0, %v991
      %v993 = vpop.f32.mrb[0].mxu0
      %v994 = vpop.f32.mrb[0].mxu0
      %v995 = vadd.f32 0.0, %v994
      %v996 = vpop.f32.mrb[0].mxu0
      %997 = vmatprep.mubr.bf16.mxu0 0
      %998 = vmatmul.mubr.bf16.gmra.mrb[0].mxu0 %v944
      %v999 = vpop.f32.mrb[0].mxu0
      %v1000 = vadd.f32 0.0, %v999
      %v1001 = vpop.f32.mrb[0].mxu0
      %v1002 = vpop.f32.mrb[0].mxu0
      %v1003 = vadd.f32 0.0, %v1002
      %v1004 = vpop.f32.mrb[0].mxu0
      %1005 = vmatprep.mubr.bf16.mxu0 0
      %1006 = vmatmul.mubr.bf16.gmra.mrb[0].mxu0 %v947
      %v1007 = vpop.f32.mrb[0].mxu0
      %v1008 = vadd.f32 0.0, %v1007
      %v1009 = vpop.f32.mrb[0].mxu0
      %v1010 = vpop.f32.mrb[0].mxu0
      %v1011 = vadd.f32 0.0, %v1010
      %v1012 = vpop.f32.mrb[0].mxu0
      %1013 = vdwg.mxu0
      %v1014 = vadd.f32 %v858, %v984
      %v1015 = vadd.f32 %v859, %v987
      %v1016 = vadd.f32 %v860, %v992
      %v1017 = vadd.f32 %v861, %v995
      %v1018 = vadd.f32 %v862, %v1000
      %v1019 = vadd.f32 %v863, %v1003
      %v1020 = vadd.f32 %v864, %v1008
      %v1021 = vadd.f32 %v865, %v1011
      %s1022 = scalar_lea.vmem %s1, 64
      %v1023 = vld [vmem:[%s1022] sm:$0xf]
      %v1024 = vld [vmem:[%s1022 + $0x4] sm:$0xf]
      %v1025 = vld [vmem:[%s1022 + $0x8] sm:$0xf]
      %v1026 = vld [vmem:[%s1022 + $0xc] sm:$0xf]
      %v1031 = vunpack.c.l.b16 %v1023
      %v1032 = vunpack.c.l.b16 %v1024
      %v1033 = vunpack.c.l.b16 %v1025
      %v1034 = vunpack.c.l.b16 %v1026
      %v1035 = vpack.c.b16 %v1032, %v1031
      %v1036 = vpack.c.b16 %v1034, %v1033
      %v1040 = vsel %vm442, %v209, 0
      %v1043 = vsel %vm442, %v210, 0
      %v1046 = vsel %vm442, %v211, 0
      %v1049 = vsel %vm442, %v212, 0
      %1051 = vmatprep.subr.bf16.mxu0 0
      %1052 = vmatpush1.bf16.msra.mxu0 %v1035
      %1053 = vmatprep.subr.bf16.mxu0 0
      %1054 = vmatpush1.bf16.msra.mxu0 %v1036
      %1055 = vmatprep.subr.bf16.mxu0 0
      %1056 = vmatpush1.bf16.msra.mxu0 0
      %1057 = vmatprep.subr.bf16.mxu0 0
      %1058 = vmatpush1.bf16.msra.mxu0 0
      %1059 = vmatprep.subr.bf16.mxu0 0
      %1060 = vmatpush1.bf16.msra.mxu0 0
      %1061 = vmatprep.subr.bf16.mxu0 0
      %1062 = vmatpush1.bf16.msra.mxu0 0
      %1063 = vmatprep.subr.bf16.mxu0 0
      %1064 = vmatpush1.bf16.msra.mxu0 0
      %1065 = vmatprep.subr.bf16.mxu0 0
      %1066 = vmatpush1.bf16.msra.mxu0 0
      %1067 = vmatprep.subr.bf16.mxu0 0
      %1068 = vmatpush1.bf16.msra.mxu0 0
      %1069 = vmatprep.subr.bf16.mxu0 0
      %1070 = vmatpush1.bf16.msra.mxu0 0
      %1071 = vmatprep.subr.bf16.mxu0 0
      %1072 = vmatpush1.bf16.msra.mxu0 0
      %1073 = vmatprep.subr.bf16.mxu0 0
      %1074 = vmatpush1.bf16.msra.mxu0 0
      %1075 = vmatprep.subr.bf16.mxu0 0
      %1076 = vmatpush1.bf16.msra.mxu0 0
      %1077 = vmatprep.subr.bf16.mxu0 0
      %1078 = vmatpush1.bf16.msra.mxu0 0
      %1079 = vmatprep.subr.bf16.mxu0 0
      %1080 = vmatpush1.bf16.msra.mxu0 0
      %1081 = vmatprep.subr.bf16.mxu0 0
      %1082 = vmatpush1.bf16.msra.mxu0 0
      %1083 = vmatprep.mubr.bf16.mxu0 0
      %1084 = vmatmul.mubr.bf16.gmra.mrb[0].mxu0 %v1040
      %v1085 = vpop.f32.mrb[0].mxu0
      %v1086 = vadd.f32 0.0, %v1085
      %v1087 = vpop.f32.mrb[0].mxu0
      %v1088 = vpop.f32.mrb[0].mxu0
      %v1089 = vadd.f32 0.0, %v1088
      %v1090 = vpop.f32.mrb[0].mxu0
      %1091 = vmatprep.mubr.bf16.mxu0 0
      %1092 = vmatmul.mubr.bf16.gmra.mrb[0].mxu0 %v1043
      %v1093 = vpop.f32.mrb[0].mxu0
      %v1094 = vadd.f32 0.0, %v1093
      %v1095 = vpop.f32.mrb[0].mxu0
      %v1096 = vpop.f32.mrb[0].mxu0
      %v1097 = vadd.f32 0.0, %v1096
      %v1098 = vpop.f32.mrb[0].mxu0
      %1099 = vmatprep.mubr.bf16.mxu0 0
      %1100 = vmatmul.mubr.bf16.gmra.mrb[0].mxu0 %v1046
      %v1101 = vpop.f32.mrb[0].mxu0
      %v1102 = vadd.f32 0.0, %v1101
      %v1103 = vpop.f32.mrb[0].mxu0
      %v1104 = vpop.f32.mrb[0].mxu0
      %v1105 = vadd.f32 0.0, %v1104
      %v1106 = vpop.f32.mrb[0].mxu0
      %1107 = vmatprep.mubr.bf16.mxu0 0
      %1108 = vmatmul.mubr.bf16.gmra.mrb[0].mxu0 %v1049
      %v1109 = vpop.f32.mrb[0].mxu0
      %v1110 = vadd.f32 0.0, %v1109
      %v1111 = vpop.f32.mrb[0].mxu0
      %v1112 = vpop.f32.mrb[0].mxu0
      %v1113 = vadd.f32 0.0, %v1112
      %v1114 = vpop.f32.mrb[0].mxu0
      %1115 = vdwg.mxu0
      %v1116 = vadd.f32 %v1014, %v1086
      %v1117 = vadd.f32 %v1015, %v1089
      %v1118 = vadd.f32 %v1016, %v1094
      %v1119 = vadd.f32 %v1017, %v1097
      %v1120 = vadd.f32 %v1018, %v1102
      %v1121 = vadd.f32 %v1019, %v1105
      %v1122 = vadd.f32 %v1020, %v1110
      %v1123 = vadd.f32 %v1021, %v1113
      %v1124 = vrot.slane %v683, 7
      %v1125 = vor.u32 %v1124, %v686
      %v1126 = vrot.slane %v691, 7
      %v1127 = vor.u32 %v1126, %v694
      %v1128 = vsel %vm891, %v1124, %v1127
      %v1129 = vrot.slane %v700, 7
      %v1130 = vor.u32 %v1129, %v703
      %v1131 = vsel %vm891, %v1126, %v1130
      %v1132 = vrot.slane %v709, 7
      %v1133 = vor.u32 %v1132, %v712
      %v1134 = vsel %vm891, %v1129, %v1133
      %vm1135 = vcmp.ne.s16.totalorder %v1125, 0
      %vm1136 = vcmp.ne.s16.totalorder %v1128, 0
      %vm1137 = vcmp.ne.s16.totalorder %v1131, 0
      %vm1138 = vcmp.ne.s16.totalorder %v1134, 0
      %v1139 = vsel %vm1135, %v209, 0
      %v1140 = vsel %vm1136, %v210, 0
      %v1141 = vsel %vm1137, %v211, 0
      %v1142 = vsel %vm1138, %v212, 0
      %s1143 = scalar_lea.vmem %s1, 80
      %v1144 = vld [vmem:[%s1143] sm:$0xf]
      %v1145 = vld [vmem:[%s1143 + $0x4] sm:$0xf]
      %v1146 = vld [vmem:[%s1143 + $0x8] sm:$0xf]
      %v1147 = vld [vmem:[%s1143 + $0xc] sm:$0xf]
      %v1149 = vshrl.u32 %v1139, 16
      %v1151 = vshll.u32 %v1139, 16
      %v1153 = vrot.slane %v1151, 1
      %v1154 = vor.u32 %v1149, %v1153
      %v1156 = vshll.u32 %v1140, 16
      %v1158 = vrot.slane %v1156, 1
      %v1159 = vsel %vm866, %v1154, %v1158
      %v1160 = vshrl.u32 %v1140, 16
      %v1162 = vor.u32 %v1160, %v1158
      %v1164 = vshll.u32 %v1141, 16
      %v1166 = vrot.slane %v1164, 1
      %v1167 = vsel %vm866, %v1162, %v1166
      %v1168 = vshrl.u32 %v1141, 16
      %v1170 = vor.u32 %v1168, %v1166
      %v1172 = vshll.u32 %v1142, 16
      %v1174 = vrot.slane %v1172, 1
      %v1175 = vsel %vm866, %v1170, %v1174
      %v1176 = vshrl.u32 %v1142, 16
      %v1178 = vor.u32 %v1176, %v1174
      %v1179 = vrot.slane %v525, 1
      %v1180 = vsel %vm866, %v1178, %v1179
      %v1185 = vunpack.c.l.b16 %v1144
      %v1186 = vunpack.c.l.b16 %v1145
      %v1187 = vunpack.c.l.b16 %v1146
      %v1188 = vunpack.c.l.b16 %v1147
      %v1189 = vpack.c.b16 %v1186, %v1185
      %v1190 = vpack.c.b16 %v1188, %v1187
      %v1194 = vsel %vm442, %v1159, 0
      %v1197 = vsel %vm442, %v1167, 0
      %v1200 = vsel %vm442, %v1175, 0
      %v1203 = vsel %vm442, %v1180, 0
      %1205 = vmatprep.subr.bf16.mxu0 0
      %1206 = vmatpush1.bf16.msra.mxu0 %v1189
      %1207 = vmatprep.subr.bf16.mxu0 0
      %1208 = vmatpush1.bf16.msra.mxu0 %v1190
      %1209 = vmatprep.subr.bf16.mxu0 0
      %1210 = vmatpush1.bf16.msra.mxu0 0
      %1211 = vmatprep.subr.bf16.mxu0 0
      %1212 = vmatpush1.bf16.msra.mxu0 0
      %1213 = vmatprep.subr.bf16.mxu0 0
      %1214 = vmatpush1.bf16.msra.mxu0 0
      %1215 = vmatprep.subr.bf16.mxu0 0
      %1216 = vmatpush1.bf16.msra.mxu0 0
      %1217 = vmatprep.subr.bf16.mxu0 0
      %1218 = vmatpush1.bf16.msra.mxu0 0
      %1219 = vmatprep.subr.bf16.mxu0 0
      %1220 = vmatpush1.bf16.msra.mxu0 0
      %1221 = vmatprep.subr.bf16.mxu0 0
      %1222 = vmatpush1.bf16.msra.mxu0 0
      %1223 = vmatprep.subr.bf16.mxu0 0
      %1224 = vmatpush1.bf16.msra.mxu0 0
      %1225 = vmatprep.subr.bf16.mxu0 0
      %1226 = vmatpush1.bf16.msra.mxu0 0
      %1227 = vmatprep.subr.bf16.mxu0 0
      %1228 = vmatpush1.bf16.msra.mxu0 0
      %1229 = vmatprep.subr.bf16.mxu0 0
      %1230 = vmatpush1.bf16.msra.mxu0 0
      %1231 = vmatprep.subr.bf16.mxu0 0
      %1232 = vmatpush1.bf16.msra.mxu0 0
      %1233 = vmatprep.subr.bf16.mxu0 0
      %1234 = vmatpush1.bf16.msra.mxu0 0
      %1235 = vmatprep.subr.bf16.mxu0 0
      %1236 = vmatpush1.bf16.msra.mxu0 0
      %1237 = vmatprep.mubr.bf16.mxu0 0
      %1238 = vmatmul.mubr.bf16.gmra.mrb[0].mxu0 %v1194
      %v1239 = vpop.f32.mrb[0].mxu0
      %v1240 = vadd.f32 0.0, %v1239
      %v1241 = vpop.f32.mrb[0].mxu0
      %v1242 = vpop.f32.mrb[0].mxu0
      %v1243 = vadd.f32 0.0, %v1242
      %v1244 = vpop.f32.mrb[0].mxu0
      %1245 = vmatprep.mubr.bf16.mxu0 0
      %1246 = vmatmul.mubr.bf16.gmra.mrb[0].mxu0 %v1197
      %v1247 = vpop.f32.mrb[0].mxu0
      %v1248 = vadd.f32 0.0, %v1247
      %v1249 = vpop.f32.mrb[0].mxu0
      %v1250 = vpop.f32.mrb[0].mxu0
      %v1251 = vadd.f32 0.0, %v1250
      %v1252 = vpop.f32.mrb[0].mxu0
      %1253 = vmatprep.mubr.bf16.mxu0 0
      %1254 = vmatmul.mubr.bf16.gmra.mrb[0].mxu0 %v1200
      %v1255 = vpop.f32.mrb[0].mxu0
      %v1256 = vadd.f32 0.0, %v1255
      %v1257 = vpop.f32.mrb[0].mxu0
      %v1258 = vpop.f32.mrb[0].mxu0
      %v1259 = vadd.f32 0.0, %v1258
      %v1260 = vpop.f32.mrb[0].mxu0
      %1261 = vmatprep.mubr.bf16.mxu0 0
      %1262 = vmatmul.mubr.bf16.gmra.mrb[0].mxu0 %v1203
      %v1263 = vpop.f32.mrb[0].mxu0
      %v1264 = vadd.f32 0.0, %v1263
      %v1265 = vpop.f32.mrb[0].mxu0
      %v1266 = vpop.f32.mrb[0].mxu0
      %v1267 = vadd.f32 0.0, %v1266
      %v1268 = vpop.f32.mrb[0].mxu0
      %1269 = vdwg.mxu0
      %v1270 = vadd.f32 %v1116, %v1240
      %v1271 = vadd.f32 %v1117, %v1243
      %v1272 = vadd.f32 %v1118, %v1248
      %v1273 = vadd.f32 %v1119, %v1251
      %v1274 = vadd.f32 %v1120, %v1256
      %v1275 = vadd.f32 %v1121, %v1259
      %v1276 = vadd.f32 %v1122, %v1264
      %v1277 = vadd.f32 %v1123, %v1267
      %vm1278 = vcmp.ne.s16.totalorder %v374, 0
      %v1279 = vsel %vm1278, %v209, 0
      %v1280 = vsel %vm402, %v210, 0
      %v1281 = vsel %vm403, %v211, 0
      %v1282 = vsel %vm404, %v212, 0
      %s1283 = scalar_lea.vmem %s1, 96
      %v1284 = vld [vmem:[%s1283] sm:$0xf]
      %v1285 = vld [vmem:[%s1283 + $0x4] sm:$0xf]
      %v1286 = vld [vmem:[%s1283 + $0x8] sm:$0xf]
      %v1287 = vld [vmem:[%s1283 + $0xc] sm:$0xf]
      %v1289 = vshrl.u32 %v1279, 16
      %v1291 = vrot.slane %v1289, 3
      %v1292 = vshll.u32 %v1279, 16
      %v1294 = vrot.slane %v1292, 4
      %v1295 = vor.u32 %v1291, %v1294
      %v1297 = vshrl.u32 %v1280, 16
      %v1299 = vrot.slane %v1297, 3
      %v1300 = vshll.u32 %v1280, 16
      %v1302 = vrot.slane %v1300, 4
      %v1303 = vor.u32 %v1299, %v1302
      %v1304 = vsel %vm520, %v1295, %v1303
      %v1306 = vshrl.u32 %v1281, 16
      %v1308 = vrot.slane %v1306, 3
      %v1309 = vshll.u32 %v1281, 16
      %v1311 = vrot.slane %v1309, 4
      %v1312 = vor.u32 %v1308, %v1311
      %v1313 = vsel %vm520, %v1303, %v1312
      %v1315 = vshrl.u32 %v1282, 16
      %v1317 = vrot.slane %v1315, 3
      %v1318 = vshll.u32 %v1282, 16
      %v1320 = vrot.slane %v1318, 4
      %v1321 = vor.u32 %v1317, %v1320
      %v1322 = vsel %vm520, %v1312, %v1321
      %v1323 = vsel %vm520, %v1321, %v528
      %v1328 = vunpack.c.l.b16 %v1284
      %v1329 = vunpack.c.l.b16 %v1285
      %v1330 = vunpack.c.l.b16 %v1286
      %v1331 = vunpack.c.l.b16 %v1287
      %v1332 = vpack.c.b16 %v1329, %v1328
      %v1333 = vpack.c.b16 %v1331, %v1330
      %v1337 = vsel %vm442, %v1304, 0
      %v1340 = vsel %vm442, %v1313, 0
      %v1343 = vsel %vm442, %v1322, 0
      %v1346 = vsel %vm442, %v1323, 0
      %1348 = vmatprep.subr.bf16.mxu0 0
      %1349 = vmatpush1.bf16.msra.mxu0 %v1332
      %1350 = vmatprep.subr.bf16.mxu0 0
      %1351 = vmatpush1.bf16.msra.mxu0 %v1333
      %1352 = vmatprep.subr.bf16.mxu0 0
      %1353 = vmatpush1.bf16.msra.mxu0 0
      %1354 = vmatprep.subr.bf16.mxu0 0
      %1355 = vmatpush1.bf16.msra.mxu0 0
      %1356 = vmatprep.subr.bf16.mxu0 0
      %1357 = vmatpush1.bf16.msra.mxu0 0
      %1358 = vmatprep.subr.bf16.mxu0 0
      %1359 = vmatpush1.bf16.msra.mxu0 0
      %1360 = vmatprep.subr.bf16.mxu0 0
      %1361 = vmatpush1.bf16.msra.mxu0 0
      %1362 = vmatprep.subr.bf16.mxu0 0
      %1363 = vmatpush1.bf16.msra.mxu0 0
      %1364 = vmatprep.subr.bf16.mxu0 0
      %1365 = vmatpush1.bf16.msra.mxu0 0
      %1366 = vmatprep.subr.bf16.mxu0 0
      %1367 = vmatpush1.bf16.msra.mxu0 0
      %1368 = vmatprep.subr.bf16.mxu0 0
      %1369 = vmatpush1.bf16.msra.mxu0 0
      %1370 = vmatprep.subr.bf16.mxu0 0
      %1371 = vmatpush1.bf16.msra.mxu0 0
      %1372 = vmatprep.subr.bf16.mxu0 0
      %1373 = vmatpush1.bf16.msra.mxu0 0
      %1374 = vmatprep.subr.bf16.mxu0 0
      %1375 = vmatpush1.bf16.msra.mxu0 0
      %1376 = vmatprep.subr.bf16.mxu0 0
      %1377 = vmatpush1.bf16.msra.mxu0 0
      %1378 = vmatprep.subr.bf16.mxu0 0
      %1379 = vmatpush1.bf16.msra.mxu0 0
      %1380 = vmatprep.mubr.bf16.mxu0 0
      %1381 = vmatmul.mubr.bf16.gmra.mrb[0].mxu0 %v1337
      %v1382 = vpop.f32.mrb[0].mxu0
      %v1383 = vadd.f32 0.0, %v1382
      %v1384 = vpop.f32.mrb[0].mxu0
      %v1385 = vpop.f32.mrb[0].mxu0
      %v1386 = vadd.f32 0.0, %v1385
      %v1387 = vpop.f32.mrb[0].mxu0
      %1388 = vmatprep.mubr.bf16.mxu0 0
      %1389 = vmatmul.mubr.bf16.gmra.mrb[0].mxu0 %v1340
      %v1390 = vpop.f32.mrb[0].mxu0
      %v1391 = vadd.f32 0.0, %v1390
      %v1392 = vpop.f32.mrb[0].mxu0
      %v1393 = vpop.f32.mrb[0].mxu0
      %v1394 = vadd.f32 0.0, %v1393
      %v1395 = vpop.f32.mrb[0].mxu0
      %1396 = vmatprep.mubr.bf16.mxu0 0
      %1397 = vmatmul.mubr.bf16.gmra.mrb[0].mxu0 %v1343
      %v1398 = vpop.f32.mrb[0].mxu0
      %v1399 = vadd.f32 0.0, %v1398
      %v1400 = vpop.f32.mrb[0].mxu0
      %v1401 = vpop.f32.mrb[0].mxu0
      %v1402 = vadd.f32 0.0, %v1401
      %v1403 = vpop.f32.mrb[0].mxu0
      %1404 = vmatprep.mubr.bf16.mxu0 0
      %1405 = vmatmul.mubr.bf16.gmra.mrb[0].mxu0 %v1346
      %v1406 = vpop.f32.mrb[0].mxu0
      %v1407 = vadd.f32 0.0, %v1406
      %v1408 = vpop.f32.mrb[0].mxu0
      %v1409 = vpop.f32.mrb[0].mxu0
      %v1410 = vadd.f32 0.0, %v1409
      %v1411 = vpop.f32.mrb[0].mxu0
      %1412 = vdwg.mxu0
      %v1413 = vadd.f32 %v1270, %v1383
      %v1414 = vadd.f32 %v1271, %v1386
      %v1415 = vadd.f32 %v1272, %v1391
      %v1416 = vadd.f32 %v1273, %v1394
      %v1417 = vadd.f32 %v1274, %v1399
      %v1418 = vadd.f32 %v1275, %v1402
      %v1419 = vadd.f32 %v1276, %v1407
      %v1420 = vadd.f32 %v1277, %v1410
      %s1421 = scalar_lea.vmem %s1, 112
      %v1422 = vld [vmem:[%s1421] sm:$0xf]
      %v1423 = vld [vmem:[%s1421 + $0x4] sm:$0xf]
      %v1424 = vld [vmem:[%s1421 + $0x8] sm:$0xf]
      %v1425 = vld [vmem:[%s1421 + $0xc] sm:$0xf]
      %v1426 = vsel %vm420, %v428, %v421
      %v1431 = vunpack.c.l.b16 %v1422
      %v1432 = vunpack.c.l.b16 %v1423
      %v1433 = vunpack.c.l.b16 %v1424
      %v1434 = vunpack.c.l.b16 %v1425
      %v1435 = vpack.c.b16 %v1432, %v1431
      %v1436 = vpack.c.b16 %v1434, %v1433
      %v1440 = vsel %vm442, %v1426, 0
      %1442 = vmatprep.subr.bf16.mxu0 0
      %1443 = vmatpush1.bf16.msra.mxu0 %v1435
      %1444 = vmatprep.subr.bf16.mxu0 0
      %1445 = vmatpush1.bf16.msra.mxu0 %v1436
      %1446 = vmatprep.subr.bf16.mxu0 0
      %1447 = vmatpush1.bf16.msra.mxu0 0
      %1448 = vmatprep.subr.bf16.mxu0 0
      %1449 = vmatpush1.bf16.msra.mxu0 0
      %1450 = vmatprep.subr.bf16.mxu0 0
      %1451 = vmatpush1.bf16.msra.mxu0 0
      %1452 = vmatprep.subr.bf16.mxu0 0
      %1453 = vmatpush1.bf16.msra.mxu0 0
      %1454 = vmatprep.subr.bf16.mxu0 0
      %1455 = vmatpush1.bf16.msra.mxu0 0
      %1456 = vmatprep.subr.bf16.mxu0 0
      %1457 = vmatpush1.bf16.msra.mxu0 0
      %1458 = vmatprep.subr.bf16.mxu0 0
      %1459 = vmatpush1.bf16.msra.mxu0 0
      %1460 = vmatprep.subr.bf16.mxu0 0
      %1461 = vmatpush1.bf16.msra.mxu0 0
      %1462 = vmatprep.subr.bf16.mxu0 0
      %1463 = vmatpush1.bf16.msra.mxu0 0
      %1464 = vmatprep.subr.bf16.mxu0 0
      %1465 = vmatpush1.bf16.msra.mxu0 0
      %1466 = vmatprep.subr.bf16.mxu0 0
      %1467 = vmatpush1.bf16.msra.mxu0 0
      %1468 = vmatprep.subr.bf16.mxu0 0
      %1469 = vmatpush1.bf16.msra.mxu0 0
      %1470 = vmatprep.subr.bf16.mxu0 0
      %1471 = vmatpush1.bf16.msra.mxu0 0
      %1472 = vmatprep.subr.bf16.mxu0 0
      %1473 = vmatpush1.bf16.msra.mxu0 0
      %1474 = vmatprep.mubr.bf16.mxu0 0
      %1475 = vmatmul.mubr.bf16.gmra.mrb[0].mxu0 %v447
      %v1476 = vpop.f32.mrb[0].mxu0
      %v1477 = vadd.f32 0.0, %v1476
      %v1478 = vpop.f32.mrb[0].mxu0
      %v1479 = vpop.f32.mrb[0].mxu0
      %v1480 = vadd.f32 0.0, %v1479
      %v1481 = vpop.f32.mrb[0].mxu0
      %1482 = vmatprep.mubr.bf16.mxu0 0
      %1483 = vmatmul.mubr.bf16.gmra.mrb[0].mxu0 %v450
      %v1484 = vpop.f32.mrb[0].mxu0
      %v1485 = vadd.f32 0.0, %v1484
      %v1486 = vpop.f32.mrb[0].mxu0
      %v1487 = vpop.f32.mrb[0].mxu0
      %v1488 = vadd.f32 0.0, %v1487
      %v1489 = vpop.f32.mrb[0].mxu0
      %1490 = vmatprep.mubr.bf16.mxu0 0
      %1491 = vmatmul.mubr.bf16.gmra.mrb[0].mxu0 %v453
      %v1492 = vpop.f32.mrb[0].mxu0
      %v1493 = vadd.f32 0.0, %v1492
      %v1494 = vpop.f32.mrb[0].mxu0
      %v1495 = vpop.f32.mrb[0].mxu0
      %v1496 = vadd.f32 0.0, %v1495
      %v1497 = vpop.f32.mrb[0].mxu0
      %1498 = vmatprep.mubr.bf16.mxu0 0
      %1499 = vmatmul.mubr.bf16.gmra.mrb[0].mxu0 %v1440
      %v1500 = vpop.f32.mrb[0].mxu0
      %v1501 = vadd.f32 0.0, %v1500
      %v1502 = vpop.f32.mrb[0].mxu0
      %v1503 = vpop.f32.mrb[0].mxu0
      %v1504 = vadd.f32 0.0, %v1503
      %v1505 = vpop.f32.mrb[0].mxu0
      %1506 = vdwg.mxu0
      %v1507 = vadd.f32 %v1413, %v1477
      %v1508 = vadd.f32 %v1414, %v1480
      %v1509 = vadd.f32 %v1415, %v1485
      %v1510 = vadd.f32 %v1416, %v1488
      %v1511 = vadd.f32 %v1417, %v1493
      %v1512 = vadd.f32 %v1418, %v1496
      %v1513 = vadd.f32 %v1419, %v1501
      %v1514 = vadd.f32 %v1420, %v1504
      %vm1515 = vcmp.ne.s16.totalorder %v689, 0
      %v1516 = vsel %vm1515, %v209, 0
      %v1517 = vsel %vm717, %v210, 0
      %v1518 = vsel %vm718, %v211, 0
      %v1519 = vsel %vm719, %v212, 0
      %s1520 = scalar_lea.vmem %s1, 128
      %v1521 = vld [vmem:[%s1520] sm:$0xf]
      %v1522 = vld [vmem:[%s1520 + $0x4] sm:$0xf]
      %v1523 = vld [vmem:[%s1520 + $0x8] sm:$0xf]
      %v1524 = vld [vmem:[%s1520 + $0xc] sm:$0xf]
      %v1526 = vshrl.u32 %v1516, 16
      %v1528 = vrot.slane %v1526, 4
      %v1529 = vshll.u32 %v1516, 16
      %v1531 = vrot.slane %v1529, 5
      %v1532 = vor.u32 %v1528, %v1531
      %v1534 = vshrl.u32 %v1517, 16
      %v1536 = vrot.slane %v1534, 4
      %v1537 = vshll.u32 %v1517, 16
      %v1539 = vrot.slane %v1537, 5
      %v1540 = vor.u32 %v1536, %v1539
      %v1541 = vsel %vm366, %v1532, %v1540
      %v1543 = vshrl.u32 %v1518, 16
      %v1545 = vrot.slane %v1543, 4
      %v1546 = vshll.u32 %v1518, 16
      %v1548 = vrot.slane %v1546, 5
      %v1549 = vor.u32 %v1545, %v1548
      %v1550 = vsel %vm366, %v1540, %v1549
      %v1552 = vshrl.u32 %v1519, 16
      %v1554 = vrot.slane %v1552, 4
      %v1555 = vshll.u32 %v1519, 16
      %v1557 = vrot.slane %v1555, 5
      %v1558 = vor.u32 %v1554, %v1557
      %v1559 = vsel %vm366, %v1549, %v1558
      %v1560 = vsel %vm366, %v1558, %v732
      %v1565 = vunpack.c.l.b16 %v1521
      %v1566 = vunpack.c.l.b16 %v1522
      %v1567 = vunpack.c.l.b16 %v1523
      %v1568 = vunpack.c.l.b16 %v1524
      %v1569 = vpack.c.b16 %v1566, %v1565
      %v1570 = vpack.c.b16 %v1568, %v1567
      %v1574 = vsel %vm442, %v1541, 0
      %v1577 = vsel %vm442, %v1550, 0
      %v1580 = vsel %vm442, %v1559, 0
      %v1583 = vsel %vm442, %v1560, 0
      %1585 = vmatprep.subr.bf16.mxu0 0
      %1586 = vmatpush1.bf16.msra.mxu0 %v1569
      %1587 = vmatprep.subr.bf16.mxu0 0
      %1588 = vmatpush1.bf16.msra.mxu0 %v1570
      %1589 = vmatprep.subr.bf16.mxu0 0
      %1590 = vmatpush1.bf16.msra.mxu0 0
      %1591 = vmatprep.subr.bf16.mxu0 0
      %1592 = vmatpush1.bf16.msra.mxu0 0
      %1593 = vmatprep.subr.bf16.mxu0 0
      %1594 = vmatpush1.bf16.msra.mxu0 0
      %1595 = vmatprep.subr.bf16.mxu0 0
      %1596 = vmatpush1.bf16.msra.mxu0 0
      %1597 = vmatprep.subr.bf16.mxu0 0
      %1598 = vmatpush1.bf16.msra.mxu0 0
      %1599 = vmatprep.subr.bf16.mxu0 0
      %1600 = vmatpush1.bf16.msra.mxu0 0
      %1601 = vmatprep.subr.bf16.mxu0 0
      %1602 = vmatpush1.bf16.msra.mxu0 0
      %1603 = vmatprep.subr.bf16.mxu0 0
      %1604 = vmatpush1.bf16.msra.mxu0 0
      %1605 = vmatprep.subr.bf16.mxu0 0
      %1606 = vmatpush1.bf16.msra.mxu0 0
      %1607 = vmatprep.subr.bf16.mxu0 0
      %1608 = vmatpush1.bf16.msra.mxu0 0
      %1609 = vmatprep.subr.bf16.mxu0 0
      %1610 = vmatpush1.bf16.msra.mxu0 0
      %1611 = vmatprep.subr.bf16.mxu0 0
      %1612 = vmatpush1.bf16.msra.mxu0 0
      %1613 = vmatprep.subr.bf16.mxu0 0
      %1614 = vmatpush1.bf16.msra.mxu0 0
      %1615 = vmatprep.subr.bf16.mxu0 0
      %1616 = vmatpush1.bf16.msra.mxu0 0
      %1617 = vmatprep.mubr.bf16.mxu0 0
      %1618 = vmatmul.mubr.bf16.gmra.mrb[0].mxu0 %v1574
      %v1619 = vpop.f32.mrb[0].mxu0
      %v1620 = vadd.f32 0.0, %v1619
      %v1621 = vpop.f32.mrb[0].mxu0
      %v1622 = vpop.f32.mrb[0].mxu0
      %v1623 = vadd.f32 0.0, %v1622
      %v1624 = vpop.f32.mrb[0].mxu0
      %1625 = vmatprep.mubr.bf16.mxu0 0
      %1626 = vmatmul.mubr.bf16.gmra.mrb[0].mxu0 %v1577
      %v1627 = vpop.f32.mrb[0].mxu0
      %v1628 = vadd.f32 0.0, %v1627
      %v1629 = vpop.f32.mrb[0].mxu0
      %v1630 = vpop.f32.mrb[0].mxu0
      %v1631 = vadd.f32 0.0, %v1630
      %v1632 = vpop.f32.mrb[0].mxu0
      %1633 = vmatprep.mubr.bf16.mxu0 0
      %1634 = vmatmul.mubr.bf16.gmra.mrb[0].mxu0 %v1580
      %v1635 = vpop.f32.mrb[0].mxu0
      %v1636 = vadd.f32 0.0, %v1635
      %v1637 = vpop.f32.mrb[0].mxu0
      %v1638 = vpop.f32.mrb[0].mxu0
      %v1639 = vadd.f32 0.0, %v1638
      %v1640 = vpop.f32.mrb[0].mxu0
      %1641 = vmatprep.mubr.bf16.mxu0 0
      %1642 = vmatmul.mubr.bf16.gmra.mrb[0].mxu0 %v1583
      %v1643 = vpop.f32.mrb[0].mxu0
      %v1644 = vadd.f32 0.0, %v1643
      %v1645 = vpop.f32.mrb[0].mxu0
      %v1646 = vpop.f32.mrb[0].mxu0
      %v1647 = vadd.f32 0.0, %v1646
      %v1648 = vpop.f32.mrb[0].mxu0
      %1649 = vdwg.mxu0
      %v1650 = vadd.f32 %v1507, %v1620
      %v1651 = vadd.f32 %v1508, %v1623
      %v1652 = vadd.f32 %v1509, %v1628
      %v1653 = vadd.f32 %v1510, %v1631
      %v1654 = vadd.f32 %v1511, %v1636
      %v1655 = vadd.f32 %v1512, %v1639
      %v1656 = vadd.f32 %v1513, %v1644
      %v1657 = vadd.f32 %v1514, %v1647
      %v1658 = vpack.c.bf16 %v1651, %v1650
      %v1659 = vpack.c.bf16 %v1653, %v1652
      %v1660 = vpack.c.bf16 %v1655, %v1654
      %v1661 = vpack.c.bf16 %v1657, %v1656
      %v1666 = vunpack.c.l.b16 %v1658
      %v1667 = vunpack.c.h.b16 %v1658
      %v1668 = vunpack.c.l.b16 %v1659
      %v1669 = vunpack.c.h.b16 %v1659
      %v1670 = vunpack.c.l.b16 %v1660
      %v1671 = vunpack.c.h.b16 %v1660
      %v1672 = vunpack.c.l.b16 %v1661
      %v1673 = vunpack.c.h.b16 %v1661
      %v1674 = vpack.c.b16 %v1666, %v1666
      %v1675 = vpack.c.b16 %v1667, %v1667
      %v1676 = vpack.c.b16 %v1668, %v1668
      %v1677 = vpack.c.b16 %v1669, %v1669
      %v1678 = vpack.c.b16 %v1670, %v1670
      %v1679 = vpack.c.b16 %v1671, %v1671
      %v1680 = vpack.c.b16 %v1672, %v1672
      %v1681 = vpack.c.b16 %v1673, %v1673
      %vm1690 = vcmask 519168
      %1691 = vst.msk [vmem:[%s177] sm:$0xf] %vm1690, %v1674
      %1692 = vst.msk [vmem:[%s177 + $0x4] sm:$0xf] %vm1690, %v1675
      %1693 = vst.msk [vmem:[%s177 + $0x8] sm:$0xf] %vm1690, %v1676
      %1694 = vst.msk [vmem:[%s177 + $0xc] sm:$0xf] %vm1690, %v1677
      %1695 = vst.msk [vmem:[%s177 + $0x10] sm:$0xf] %vm1690, %v1678
      %1696 = vst.msk [vmem:[%s177 + $0x14] sm:$0xf] %vm1690, %v1679
      %1697 = vst.msk [vmem:[%s177 + $0x18] sm:$0xf] %vm1690, %v1680
      %1698 = vst.msk [vmem:[%s177 + $0x1c] sm:$0xf] %vm1690, %v1681
      %vm1699 = vcmask 523264
      %v1700 = vsel %vm1699, %v1650, 0.0
      %v1701 = vsel %vm1699, %v1651, 0.0
      %v1702 = vadd.f32 %v1700, %v1701
      %v1703 = vsel %vm1699, %v1652, 0.0
      %v1704 = vadd.f32 %v1702, %v1703
      %v1705 = vsel %vm1699, %v1653, 0.0
      %v1706 = vadd.f32 %v1704, %v1705
      %v1707 = vsel %vm1699, %v1654, 0.0
      %v1708 = vadd.f32 %v1706, %v1707
      %v1709 = vsel %vm1699, %v1655, 0.0
      %v1710 = vadd.f32 %v1708, %v1709
      %v1711 = vsel %vm1699, %v1656, 0.0
      %v1712 = vadd.f32 %v1710, %v1711
      %v1713 = vsel %vm1699, %v1657, 0.0
      %v1714 = vadd.f32 %v1712, %v1713
      %v1715 = vrot.slane %v1714, 4
      %v1716 = vadd.f32 %v1714, %v1715
      %v1717 = vrot.slane %v1716, 2
      %v1718 = vadd.f32 %v1716, %v1717
      %v1719 = vrot.slane %v1718, 1
      %v1720 = vadd.f32 %v1718, %v1719
      %v1721 = vmul.f32 %v1650, %v1650
      %v1722 = vmul.f32 %v1651, %v1651
      %v1723 = vmul.f32 %v1652, %v1652
      %v1724 = vmul.f32 %v1653, %v1653
      %v1725 = vmul.f32 %v1654, %v1654
      %v1726 = vmul.f32 %v1655, %v1655
      %v1727 = vmul.f32 %v1656, %v1656
      %v1728 = vmul.f32 %v1657, %v1657
      %v1729 = vsel %vm1699, %v1721, 0.0
      %v1730 = vsel %vm1699, %v1722, 0.0
      %v1731 = vadd.f32 %v1729, %v1730
      %v1732 = vsel %vm1699, %v1723, 0.0
      %v1733 = vadd.f32 %v1731, %v1732
      %v1734 = vsel %vm1699, %v1724, 0.0
      %v1735 = vadd.f32 %v1733, %v1734
      %v1736 = vsel %vm1699, %v1725, 0.0
      %v1737 = vadd.f32 %v1735, %v1736
      %v1738 = vsel %vm1699, %v1726, 0.0
      %v1739 = vadd.f32 %v1737, %v1738
      %v1740 = vsel %vm1699, %v1727, 0.0
      %v1741 = vadd.f32 %v1739, %v1740
      %v1742 = vsel %vm1699, %v1728, 0.0
      %v1743 = vadd.f32 %v1741, %v1742
      %v1744 = vrot.slane %v1743, 4
      %v1745 = vadd.f32 %v1743, %v1744
      %v1746 = vrot.slane %v1745, 2
      %v1747 = vadd.f32 %v1745, %v1746
      %v1748 = vrot.slane %v1747, 1
      %v1749 = vadd.f32 %v1747, %v1748
      %vm1750 = vcmask 1040384
      %v1751 = vsel %vm1750, %v1720, %v1749
      %vm1752 = vcmask 1041408
      %v1753 = vsel %vm1752, %v1751, 0.0
      %1754 = vst.msk [vmem:[%s181] sm:$0xff] %vm1699, %v1753
      %p1755 = scmp.lt.s32.totalorder %s15, 1
      %s1756 = scalar_select %p1755, %s15, 1
      %s1757 = smul.addr %s1756, 8
      %s1758 = smul.addr %s1757, 4
      %s1759 = scalar_lea.vmem %s2, %s1758
      %p1760 = scmp.lt.s32.totalorder %s15, 1
      %s1761 = scalar_select %p1760, %s15, 1
      %s1762 = smul.addr %s1761, 8
      %s1763 = scalar_lea.vmem %s3, %s1762
      // Predicated region
      $region29: #{double_conv.3} parent=27 // pred_check
        %p1764 = pneg %p80
      $region30: #{double_conv.3} parent=27 // pred_check_branch
        %1766 = sbr.rel (%p1764) target = $region32
      $region31: #{double_conv.3} parent=27 // pred_region
        _
      $region32: #{double_conv.3} parent=27 // pred_fallthru
        _
      // Predicated region
      $region33: #{double_conv.3} parent=27 // pred_check
        %p1767 = pneg %p106
      $region34: #{double_conv.3} parent=27 // pred_check_branch
        %1769 = sbr.rel (%p1767) target = $region36
      $region35: #{double_conv.3} parent=27 // pred_region
        _
      $region36: #{double_conv.3} parent=27 // pred_fallthru
        _
    $region28: #{double_conv.3} parent=5 // pred_fallthru
      _
    %p1770 = scmp.le.s32.totalorder 2, %s10
    // Predicated region
    $region37: #{double_conv.3} parent=5 // pred_check
      %p1771 = pneg %p1770
    $region38: #{double_conv.3} parent=5 // pred_check_branch
      %1773 = sbr.rel (%p1771) target = $region40
    $region39: #{double_conv.3} parent=5 // pred_region
      %s1774 = ssub.s32 %s10, 2
      // Predicated region
      $region41: #{double_conv.3} parent=39 // pred_check
        %p1775 = pneg %p86
      $region42: #{double_conv.3} parent=39 // pred_check_branch
        %1777 = sbr.rel (%p1775) target = $region44
      $region43: #{double_conv.3} parent=39 // pred_region
        %p1778 = scmp.lt.s32.totalorder %s16, 1
        %s1779 = scalar_select %p1778, %s16, 1
        %s1780 = smul.addr %s1779, 8
        %s1781 = smul.addr %s1780, 4
        %s1782 = scalar_lea.vmem %s2, %s1781
      $region44: #{double_conv.3} parent=39 // pred_fallthru
        _
      // Predicated region
      $region45: #{double_conv.3} parent=39 // pred_check
        %p1783 = pneg %p112
      $region46: #{double_conv.3} parent=39 // pred_check_branch
        %1785 = sbr.rel (%p1783) target = $region48
      $region47: #{double_conv.3} parent=39 // pred_region
        %p1786 = scmp.lt.s32.totalorder %s16, 1
        %s1787 = scalar_select %p1786, %s16, 1
        %s1788 = smul.addr %s1787, 8
        %s1789 = scalar_lea.vmem %s3, %s1788
      $region48: #{double_conv.3} parent=39 // pred_fallthru
        _
    $region40: #{double_conv.3} parent=5 // pred_fallthru
      _
  $region6: #{double_conv.3} parent=0 // loop_footer
    %s14 = sadd.s32 1, %s10
  $region7: #{double_conv.3} parent=0 // loop_footer_branch
    %9 = sbr.rel target = $region3
  $region8: #{double_conv.3} parent=0 // loop_exit
    _

// kernel: double_conv.5
$region0: #{double_conv.5}
  #allocation0 [shape = 'u32[]', space=smem, size = 0x4, offset = 0x4, fixed_abs, tag = 'smem constant byte address 0x4 - core index']
  #allocation1 [shape = 'u32[144,128]{1,0:T(1,128)}', space=vmem, size = 0x12000, scoped, tag = 'internal scratch']
  %s0 = inlined_call_operand.vmem [shape: f32[2,64,64], index: 0, kind: input, shape index: {}]
  %s1 = inlined_call_operand.vmem [shape: f32[1,64], index: 1, kind: input, shape index: {}]
  %s2 = inlined_call_operand.vmem [shape: f32[1,64], index: 2, kind: input, shape index: {}]
  %s3 = inlined_call_operand.vmem [shape: f32[2,64,64], index: 3, kind: output, shape index: {}]
  %s4 = sld [smem:[#allocation0]]
  $region45: #{double_conv.5} parent=0
    _
  %s6 = ssub.s32 1, %s4
  %s7 = scalar_select 0, %s6, %s4
  loop: start=0, step=1, limit=4
  $region2: #{double_conv.5} parent=0 // loop_pre_header
    _
  $region3: #{double_conv.5} parent=0 // loop_header
    %s9 = sphi 0, %s13
    %p10 = scmp.ge.s32.totalorder %s9, 4
    %s19 = sphi 0, %s21
    %s22 = sphi 0, %s19
    %s23 = sphi 0, %s22
    %s39 = sphi 0, %s23
    %s43 = sphi 0, %s43
    %s45 = sphi 0, %s43
    %s46 = sphi 0, %s45
    %s60 = sphi 0, %s46
    %s64 = sphi 0, %s64
    %s66 = sphi 0, %s64
    %s67 = sphi 0, %s66
    %s81 = sphi 0, %s67
    %s87 = sphi 0, %s89
    %s90 = sphi 0, %s87
    %s91 = sphi 0, %s90
    %s107 = sphi 0, %s91
  $region4: #{double_conv.5} parent=0 // loop_header_branch
    %12 = sbr.rel (%p10) target = $region8
  $region5: #{double_conv.5} parent=0 // loop_body
    %s14 = ssub.s32 %s9, 1
    %s15 = ssub.s32 %s9, 2
    %s16 = sadd.s32 %s9, 1
    %s17 = ssub.s32 %s9, %s16
    %p18 = scmp.eq.s32.totalorder %s17, 0
    %s20 = sadd.s32 %s19, 1
    %s21 = scalar_select %p18, %s19, %s20
    %p24 = pneg %p18
    %p25 = scmp.eq.s32.totalorder %s9, 1
    %p26 = por %p24, %p25
    %p27 = scmp.ne.s32.totalorder %s19, %s22
    %p28 = scmp.eq.s32.totalorder %s9, 0
    %p29 = por %p27, %p28
    %p30 = scmp.ne.s32.totalorder %s19, %s22
    %p31 = scmp.eq.s32.totalorder %s14, 1
    %p32 = por %p30, %p31
    %p33 = scmp.ne.s32.totalorder %s22, %s23
    %p34 = scmp.eq.s32.totalorder %s14, 0
    %p35 = por %p33, %p34
    %p36 = scmp.ne.s32.totalorder %s22, %s23
    %p37 = scmp.eq.s32.totalorder %s15, 1
    %p38 = por %p36, %p37
    %p40 = scmp.ne.s32.totalorder %s23, %s39
    %p41 = scmp.eq.s32.totalorder %s15, 0
    %p42 = por %p40, %p41
    %s44 = sadd.s32 %s43, 1
    %p47 = scmp.eq.s32.totalorder %s9, 1
    %p48 = scmp.ne.s32.totalorder %s43, %s45
    %p49 = scmp.eq.s32.totalorder %s9, 0
    %p50 = por %p48, %p49
    %p51 = scmp.ne.s32.totalorder %s43, %s45
    %p52 = scmp.eq.s32.totalorder %s14, 1
    %p53 = por %p51, %p52
    %p54 = scmp.ne.s32.totalorder %s45, %s46
    %p55 = scmp.eq.s32.totalorder %s14, 0
    %p56 = por %p54, %p55
    %p57 = scmp.ne.s32.totalorder %s45, %s46
    %p58 = scmp.eq.s32.totalorder %s15, 1
    %p59 = por %p57, %p58
    %p61 = scmp.ne.s32.totalorder %s46, %s60
    %p62 = scmp.eq.s32.totalorder %s15, 0
    %p63 = por %p61, %p62
    %s65 = sadd.s32 %s64, 1
    %p68 = scmp.eq.s32.totalorder %s9, 1
    %p69 = scmp.ne.s32.totalorder %s64, %s66
    %p70 = scmp.eq.s32.totalorder %s9, 0
    %p71 = por %p69, %p70
    %p72 = scmp.ne.s32.totalorder %s64, %s66
    %p73 = scmp.eq.s32.totalorder %s14, 1
    %p74 = por %p72, %p73
    %p75 = scmp.ne.s32.totalorder %s66, %s67
    %p76 = scmp.eq.s32.totalorder %s14, 0
    %p77 = por %p75, %p76
    %p78 = scmp.ne.s32.totalorder %s66, %s67
    %p79 = scmp.eq.s32.totalorder %s15, 1
    %p80 = por %p78, %p79
    %p82 = scmp.ne.s32.totalorder %s67, %s81
    %p83 = scmp.eq.s32.totalorder %s15, 0
    %p84 = por %p82, %p83
    %s85 = ssub.s32 %s9, %s16
    %p86 = scmp.eq.s32.totalorder %s85, 0
    %s88 = sadd.s32 %s87, 1
    %s89 = scalar_select %p86, %s87, %s88
    %p92 = pneg %p86
    %p93 = scmp.eq.s32.totalorder %s9, 1
    %p94 = por %p92, %p93
    %p95 = scmp.ne.s32.totalorder %s87, %s90
    %p96 = scmp.eq.s32.totalorder %s9, 0
    %p97 = por %p95, %p96
    %p98 = scmp.ne.s32.totalorder %s87, %s90
    %p99 = scmp.eq.s32.totalorder %s14, 1
    %p100 = por %p98, %p99
    %p101 = scmp.ne.s32.totalorder %s90, %s91
    %p102 = scmp.eq.s32.totalorder %s14, 0
    %p103 = por %p101, %p102
    %p104 = scmp.ne.s32.totalorder %s90, %s91
    %p105 = scmp.eq.s32.totalorder %s15, 1
    %p106 = por %p104, %p105
    %p108 = scmp.ne.s32.totalorder %s91, %s107
    %p109 = scmp.eq.s32.totalorder %s15, 0
    %p110 = por %p108, %p109
    %p111 = scmp.le.s32.totalorder 1, %s9
    %p112 = scmp.lt.s32.totalorder %s9, 3
    %p113 = pnand %p111, %p112
    %p114 = pneg %p113
    // Predicated region
    $region9: #{double_conv.5} parent=5 // pred_check
      _
    $region10: #{double_conv.5} parent=5 // pred_check_branch
      %116 = sbr.rel (%p113) target = $region12
    $region11: #{double_conv.5} parent=5 // pred_region
      %s117 = ssub.s32 %s9, 1
      // Predicated region
      $region13: #{double_conv.5} parent=11 // pred_check
        %p118 = pneg %p56
      $region14: #{double_conv.5} parent=11 // pred_check_branch
        %120 = sbr.rel (%p118) target = $region16
      $region15: #{double_conv.5} parent=11 // pred_region
        _
      $region16: #{double_conv.5} parent=11 // pred_fallthru
        _
      // Predicated region
      $region17: #{double_conv.5} parent=11 // pred_check
        %p121 = pneg %p77
      $region18: #{double_conv.5} parent=11 // pred_check_branch
        %123 = sbr.rel (%p121) target = $region20
      $region19: #{double_conv.5} parent=11 // pred_region
        _
      $region20: #{double_conv.5} parent=11 // pred_fallthru
        _
    $region12: #{double_conv.5} parent=5 // pred_fallthru
      _
    %p124 = scmp.lt.s32.totalorder %s9, 2
    // Predicated region
    $region21: #{double_conv.5} parent=5 // pred_check
      %p125 = pneg %p124
    $region22: #{double_conv.5} parent=5 // pred_check_branch
      %127 = sbr.rel (%p125) target = $region24
    $region23: #{double_conv.5} parent=5 // pred_region
      // Predicated region
      $region25: #{double_conv.5} parent=23 // pred_check
        %p128 = pneg %p29
      $region26: #{double_conv.5} parent=23 // pred_check_branch
        %130 = sbr.rel (%p128) target = $region28
      $region27: #{double_conv.5} parent=23 // pred_region
        %p131 = scmp.lt.s32.totalorder %s9, 1
        %s132 = scalar_select %p131, %s9, 1
        %s133 = smul.addr %s132, 8
        %s134 = smul.addr %s133, 8
        %s135 = scalar_lea.vmem %s0, %s134
      $region28: #{double_conv.5} parent=23 // pred_fallthru
        _
    $region24: #{double_conv.5} parent=5 // pred_fallthru
      _
    %p136 = scmp.le.s32.totalorder 1, %s9
    %p137 = scmp.lt.s32.totalorder %s9, 3
    %p138 = pnand %p136, %p137
    %p139 = pneg %p138
    // Predicated region
    $region29: #{double_conv.5} parent=5 // pred_check
      _
    $region30: #{double_conv.5} parent=5 // pred_check_branch
      %141 = sbr.rel (%p138) target = $region32
    $region31: #{double_conv.5} parent=5 // pred_region
      %s142 = ssub.s32 %s9, 1
      %p143 = scmp.lt.s32.totalorder %s14, 1
      %s144 = scalar_select %p143, %s14, 1
      %s145 = smul.addr %s144, 8
      %s146 = smul.addr %s145, 8
      %s147 = scalar_lea.vmem %s0, %s146
      %p148 = pneg %p35
      %p149 = pneg %p32
      %p150 = pneg %p56
      %p151 = pneg %p53
      %p152 = pneg %p77
      %p153 = pneg %p74
      %p154 = pneg %p103
      %p155 = pneg %p100
      %p156 = scmp.lt.s32.totalorder %s14, 1
      %s157 = scalar_select %p156, %s14, 1
      %s158 = smul.addr %s157, 8
      %s159 = smul.addr %s158, 8
      %s160 = scalar_lea.vmem %s3, %s159
      %p161 = scmp.lt.s32.totalorder %s14, 1
      %s162 = scalar_select %p161, %s14, 1
      %s163 = smul.addr %s162, 8
      %s164 = smul.addr %s163, 8
      %s165 = scalar_lea.vmem %s0, %s164
      %p166 = scmp.lt.s32.totalorder %s14, 1
      %s167 = scalar_select %p166, %s14, 1
      %s168 = smul.addr %s167, 8
      %s169 = smul.addr %s168, 8
      %s170 = scalar_lea.vmem %s3, %s169
      %v171 = vld [vmem:[%s165] sm:$0xff]
      %v172 = vld [vmem:[%s165 + $0x8] sm:$0xff]
      %v173 = vld [vmem:[%s165 + $0x10] sm:$0xff]
      %v174 = vld [vmem:[%s165 + $0x18] sm:$0xff]
      %v175 = vld [vmem:[%s165 + $0x20] sm:$0xff]
      %v176 = vld [vmem:[%s165 + $0x28] sm:$0xff]
      %v177 = vld [vmem:[%s165 + $0x30] sm:$0xff]
      %v178 = vld [vmem:[%s165 + $0x38] sm:$0xff]
      %v179 = vld [vmem:[%s1] sm:$0x1]
      %v181 = vlaneseq
      %v182 = vshrl.u32 %v181, 7
      %v183 = vsub.s32 0, %v182
      %v184 = vrot.slane %v179, %v183
      %v186 = vmul.f32 %v171, %v184
      %v187 = vmul.f32 %v172, %v184
      %v188 = vmul.f32 %v173, %v184
      %v189 = vmul.f32 %v174, %v184
      %v190 = vmul.f32 %v175, %v184
      %v191 = vmul.f32 %v176, %v184
      %v192 = vmul.f32 %v177, %v184
      %v193 = vmul.f32 %v178, %v184
      %v194 = vld [vmem:[%s2] sm:$0x1]
      %v196 = vlaneseq
      %v197 = vshrl.u32 %v196, 7
      %v198 = vsub.s32 0, %v197
      %v199 = vrot.slane %v194, %v198
      %v201 = vadd.f32 %v186, %v199
      %v202 = vadd.f32 %v187, %v199
      %v203 = vadd.f32 %v188, %v199
      %v204 = vadd.f32 %v189, %v199
      %v205 = vadd.f32 %v190, %v199
      %v206 = vadd.f32 %v191, %v199
      %v207 = vadd.f32 %v192, %v199
      %v208 = vadd.f32 %v193, %v199
      %v209 = vmax.f32 %v201, 0.0
      %v210 = vmax.f32 %v202, 0.0
      %v211 = vmax.f32 %v203, 0.0
      %v212 = vmax.f32 %v204, 0.0
      %v213 = vmax.f32 %v205, 0.0
      %v214 = vmax.f32 %v206, 0.0
      %v215 = vmax.f32 %v207, 0.0
      %v216 = vmax.f32 %v208, 0.0
      %vm217 = vcmask 523264
      %218 = vst.msk [vmem:[%s170] sm:$0xff] %vm217, %v209
      %219 = vst.msk [vmem:[%s170 + $0x8] sm:$0xff] %vm217, %v210
      %220 = vst.msk [vmem:[%s170 + $0x10] sm:$0xff] %vm217, %v211
      %221 = vst.msk [vmem:[%s170 + $0x18] sm:$0xff] %vm217, %v212
      %222 = vst.msk [vmem:[%s170 + $0x20] sm:$0xff] %vm217, %v213
      %223 = vst.msk [vmem:[%s170 + $0x28] sm:$0xff] %vm217, %v214
      %224 = vst.msk [vmem:[%s170 + $0x30] sm:$0xff] %vm217, %v215
      %225 = vst.msk [vmem:[%s170 + $0x38] sm:$0xff] %vm217, %v216
      %p226 = scmp.lt.s32.totalorder %s14, 1
      %s227 = scalar_select %p226, %s14, 1
      %s228 = smul.addr %s227, 8
      %s229 = smul.addr %s228, 8
      %s230 = scalar_lea.vmem %s3, %s229
      // Predicated region
      $region33: #{double_conv.5} parent=31 // pred_check
        %p231 = pneg %p100
      $region34: #{double_conv.5} parent=31 // pred_check_branch
        %233 = sbr.rel (%p231) target = $region36
      $region35: #{double_conv.5} parent=31 // pred_region
        _
      $region36: #{double_conv.5} parent=31 // pred_fallthru
        _
    $region32: #{double_conv.5} parent=5 // pred_fallthru
      _
    %p234 = scmp.le.s32.totalorder 2, %s9
    // Predicated region
    $region37: #{double_conv.5} parent=5 // pred_check
      %p235 = pneg %p234
    $region38: #{double_conv.5} parent=5 // pred_check_branch
      %237 = sbr.rel (%p235) target = $region40
    $region39: #{double_conv.5} parent=5 // pred_region
      %s238 = ssub.s32 %s9, 2
      // Predicated region
      $region41: #{double_conv.5} parent=39 // pred_check
        %p239 = pneg %p106
      $region42: #{double_conv.5} parent=39 // pred_check_branch
        %241 = sbr.rel (%p239) target = $region44
      $region43: #{double_conv.5} parent=39 // pred_region
        %p242 = scmp.lt.s32.totalorder %s15, 1
        %s243 = scalar_select %p242, %s15, 1
        %s244 = smul.addr %s243, 8
        %s245 = smul.addr %s244, 8
        %s246 = scalar_lea.vmem %s3, %s245
      $region44: #{double_conv.5} parent=39 // pred_fallthru
        _
    $region40: #{double_conv.5} parent=5 // pred_fallthru
      _
  $region6: #{double_conv.5} parent=0 // loop_footer
    %s13 = sadd.s32 1, %s9
  $region7: #{double_conv.5} parent=0 // loop_footer_branch
    %8 = sbr.rel target = $region3
  $region8: #{double_conv.5} parent=0 // loop_exit
    _

// kernel: double_conv.4
$region0: #{double_conv.4}
  #allocation0 [shape = 'u32[]', space=smem, size = 0x4, offset = 0x4, fixed_abs, tag = 'smem constant byte address 0x4 - core index']
  #allocation1 [shape = 'u32[144,128]{1,0:T(1,128)}', space=vmem, size = 0x12000, scoped, tag = 'internal scratch']
  %s0 = inlined_call_operand.vmem [shape: bf16[2,64,64], index: 0, kind: input, shape index: {}]
  %s1 = inlined_call_operand.vmem [shape: bf16[9,64,64], index: 1, kind: input, shape index: {}]
  %s2 = inlined_call_operand.vmem [shape: f32[1,64], index: 2, kind: input, shape index: {}]
  %s3 = inlined_call_operand.vmem [shape: f32[1,64], index: 3, kind: input, shape index: {}]
  %s4 = inlined_call_operand.vmem [shape: f32[2,64,64], index: 4, kind: output, shape index: {0}]
  %s5 = inlined_call_operand.vmem [shape: f32[2,8,64], index: 5, kind: output, shape index: {1}]
  %6 = xla_tuple %s4, %s5
  %s7 = sld [smem:[#allocation0]]
  $region57: #{double_conv.4} parent=0
    _
  %s9 = ssub.s32 1, %s7
  %s10 = scalar_select 0, %s9, %s7
  loop: start=0, step=1, limit=4
  $region2: #{double_conv.4} parent=0 // loop_pre_header
    _
  $region3: #{double_conv.4} parent=0 // loop_header
    %s12 = sphi 0, %s16
    %p13 = scmp.ge.s32.totalorder %s12, 4
    %s22 = sphi 0, %s24
    %s25 = sphi 0, %s22
    %s26 = sphi 0, %s25
    %s42 = sphi 0, %s26
    %s46 = sphi 0, %s46
    %s48 = sphi 0, %s46
    %s49 = sphi 0, %s48
    %s63 = sphi 0, %s49
    %s67 = sphi 0, %s67
    %s69 = sphi 0, %s67
    %s70 = sphi 0, %s69
    %s84 = sphi 0, %s70
    %s88 = sphi 0, %s88
    %s90 = sphi 0, %s88
    %s91 = sphi 0, %s90
    %s105 = sphi 0, %s91
    %s111 = sphi 0, %s113
    %s114 = sphi 0, %s111
    %s115 = sphi 0, %s114
    %s131 = sphi 0, %s115
    %s137 = sphi 0, %s139
    %s140 = sphi 0, %s137
    %s141 = sphi 0, %s140
    %s157 = sphi 0, %s141
  $region4: #{double_conv.4} parent=0 // loop_header_branch
    %15 = sbr.rel (%p13) target = $region8
  $region5: #{double_conv.4} parent=0 // loop_body
    %s17 = ssub.s32 %s12, 1
    %s18 = ssub.s32 %s12, 2
    %s19 = sadd.s32 %s12, 1
    %s20 = ssub.s32 %s12, %s19
    %p21 = scmp.eq.s32.totalorder %s20, 0
    %s23 = sadd.s32 %s22, 1
    %s24 = scalar_select %p21, %s22, %s23
    %p27 = pneg %p21
    %p28 = scmp.eq.s32.totalorder %s12, 1
    %p29 = por %p27, %p28
    %p30 = scmp.ne.s32.totalorder %s22, %s25
    %p31 = scmp.eq.s32.totalorder %s12, 0
    %p32 = por %p30, %p31
    %p33 = scmp.ne.s32.totalorder %s22, %s25
    %p34 = scmp.eq.s32.totalorder %s17, 1
    %p35 = por %p33, %p34
    %p36 = scmp.ne.s32.totalorder %s25, %s26
    %p37 = scmp.eq.s32.totalorder %s17, 0
    %p38 = por %p36, %p37
    %p39 = scmp.ne.s32.totalorder %s25, %s26
    %p40 = scmp.eq.s32.totalorder %s18, 1
    %p41 = por %p39, %p40
    %p43 = scmp.ne.s32.totalorder %s26, %s42
    %p44 = scmp.eq.s32.totalorder %s18, 0
    %p45 = por %p43, %p44
    %s47 = sadd.s32 %s46, 1
    %p50 = scmp.eq.s32.totalorder %s12, 1
    %p51 = scmp.ne.s32.totalorder %s46, %s48
    %p52 = scmp.eq.s32.totalorder %s12, 0
    %p53 = por %p51, %p52
    %p54 = scmp.ne.s32.totalorder %s46, %s48
    %p55 = scmp.eq.s32.totalorder %s17, 1
    %p56 = por %p54, %p55
    %p57 = scmp.ne.s32.totalorder %s48, %s49
    %p58 = scmp.eq.s32.totalorder %s17, 0
    %p59 = por %p57, %p58
    %p60 = scmp.ne.s32.totalorder %s48, %s49
    %p61 = scmp.eq.s32.totalorder %s18, 1
    %p62 = por %p60, %p61
    %p64 = scmp.ne.s32.totalorder %s49, %s63
    %p65 = scmp.eq.s32.totalorder %s18, 0
    %p66 = por %p64, %p65
    %s68 = sadd.s32 %s67, 1
    %p71 = scmp.eq.s32.totalorder %s12, 1
    %p72 = scmp.ne.s32.totalorder %s67, %s69
    %p73 = scmp.eq.s32.totalorder %s12, 0
    %p74 = por %p72, %p73
    %p75 = scmp.ne.s32.totalorder %s67, %s69
    %p76 = scmp.eq.s32.totalorder %s17, 1
    %p77 = por %p75, %p76
    %p78 = scmp.ne.s32.totalorder %s69, %s70
    %p79 = scmp.eq.s32.totalorder %s17, 0
    %p80 = por %p78, %p79
    %p81 = scmp.ne.s32.totalorder %s69, %s70
    %p82 = scmp.eq.s32.totalorder %s18, 1
    %p83 = por %p81, %p82
    %p85 = scmp.ne.s32.totalorder %s70, %s84
    %p86 = scmp.eq.s32.totalorder %s18, 0
    %p87 = por %p85, %p86
    %s89 = sadd.s32 %s88, 1
    %p92 = scmp.eq.s32.totalorder %s12, 1
    %p93 = scmp.ne.s32.totalorder %s88, %s90
    %p94 = scmp.eq.s32.totalorder %s12, 0
    %p95 = por %p93, %p94
    %p96 = scmp.ne.s32.totalorder %s88, %s90
    %p97 = scmp.eq.s32.totalorder %s17, 1
    %p98 = por %p96, %p97
    %p99 = scmp.ne.s32.totalorder %s90, %s91
    %p100 = scmp.eq.s32.totalorder %s17, 0
    %p101 = por %p99, %p100
    %p102 = scmp.ne.s32.totalorder %s90, %s91
    %p103 = scmp.eq.s32.totalorder %s18, 1
    %p104 = por %p102, %p103
    %p106 = scmp.ne.s32.totalorder %s91, %s105
    %p107 = scmp.eq.s32.totalorder %s18, 0
    %p108 = por %p106, %p107
    %s109 = ssub.s32 %s12, %s19
    %p110 = scmp.eq.s32.totalorder %s109, 0
    %s112 = sadd.s32 %s111, 1
    %s113 = scalar_select %p110, %s111, %s112
    %p116 = pneg %p110
    %p117 = scmp.eq.s32.totalorder %s12, 1
    %p118 = por %p116, %p117
    %p119 = scmp.ne.s32.totalorder %s111, %s114
    %p120 = scmp.eq.s32.totalorder %s12, 0
    %p121 = por %p119, %p120
    %p122 = scmp.ne.s32.totalorder %s111, %s114
    %p123 = scmp.eq.s32.totalorder %s17, 1
    %p124 = por %p122, %p123
    %p125 = scmp.ne.s32.totalorder %s114, %s115
    %p126 = scmp.eq.s32.totalorder %s17, 0
    %p127 = por %p125, %p126
    %p128 = scmp.ne.s32.totalorder %s114, %s115
    %p129 = scmp.eq.s32.totalorder %s18, 1
    %p130 = por %p128, %p129
    %p132 = scmp.ne.s32.totalorder %s115, %s131
    %p133 = scmp.eq.s32.totalorder %s18, 0
    %p134 = por %p132, %p133
    %s135 = ssub.s32 %s12, %s19
    %p136 = scmp.eq.s32.totalorder %s135, 0
    %s138 = sadd.s32 %s137, 1
    %s139 = scalar_select %p136, %s137, %s138
    %p142 = pneg %p136
    %p143 = scmp.eq.s32.totalorder %s12, 1
    %p144 = por %p142, %p143
    %p145 = scmp.ne.s32.totalorder %s137, %s140
    %p146 = scmp.eq.s32.totalorder %s12, 0
    %p147 = por %p145, %p146
    %p148 = scmp.ne.s32.totalorder %s137, %s140
    %p149 = scmp.eq.s32.totalorder %s17, 1
    %p150 = por %p148, %p149
    %p151 = scmp.ne.s32.totalorder %s140, %s141
    %p152 = scmp.eq.s32.totalorder %s17, 0
    %p153 = por %p151, %p152
    %p154 = scmp.ne.s32.totalorder %s140, %s141
    %p155 = scmp.eq.s32.totalorder %s18, 1
    %p156 = por %p154, %p155
    %p158 = scmp.ne.s32.totalorder %s141, %s157
    %p159 = scmp.eq.s32.totalorder %s18, 0
    %p160 = por %p158, %p159
    %p161 = scmp.le.s32.totalorder 1, %s12
    %p162 = scmp.lt.s32.totalorder %s12, 3
    %p163 = pnand %p161, %p162
    %p164 = pneg %p163
    // Predicated region
    $region9: #{double_conv.4} parent=5 // pred_check
      _
    $region10: #{double_conv.4} parent=5 // pred_check_branch
      %166 = sbr.rel (%p163) target = $region12
    $region11: #{double_conv.4} parent=5 // pred_region
      %s167 = ssub.s32 %s12, 1
      // Predicated region
      $region13: #{double_conv.4} parent=11 // pred_check
        %p168 = pneg %p59
      $region14: #{double_conv.4} parent=11 // pred_check_branch
        %170 = sbr.rel (%p168) target = $region16
      $region15: #{double_conv.4} parent=11 // pred_region
        _
      $region16: #{double_conv.4} parent=11 // pred_fallthru
        _
      // Predicated region
      $region17: #{double_conv.4} parent=11 // pred_check
        %p171 = pneg %p80
      $region18: #{double_conv.4} parent=11 // pred_check_branch
        %173 = sbr.rel (%p171) target = $region20
      $region19: #{double_conv.4} parent=11 // pred_region
        _
      $region20: #{double_conv.4} parent=11 // pred_fallthru
        _
      // Predicated region
      $region21: #{double_conv.4} parent=11 // pred_check
        %p174 = pneg %p101
      $region22: #{double_conv.4} parent=11 // pred_check_branch
        %176 = sbr.rel (%p174) target = $region24
      $region23: #{double_conv.4} parent=11 // pred_region
        _
      $region24: #{double_conv.4} parent=11 // pred_fallthru
        _
    $region12: #{double_conv.4} parent=5 // pred_fallthru
      _
    %p177 = scmp.lt.s32.totalorder %s12, 2
    // Predicated region
    $region25: #{double_conv.4} parent=5 // pred_check
      %p178 = pneg %p177
    $region26: #{double_conv.4} parent=5 // pred_check_branch
      %180 = sbr.rel (%p178) target = $region28
    $region27: #{double_conv.4} parent=5 // pred_region
      // Predicated region
      $region29: #{double_conv.4} parent=27 // pred_check
        %p181 = pneg %p32
      $region30: #{double_conv.4} parent=27 // pred_check_branch
        %183 = sbr.rel (%p181) target = $region32
      $region31: #{double_conv.4} parent=27 // pred_region
        %p184 = scmp.lt.s32.totalorder %s12, 1
        %s185 = scalar_select %p184, %s12, 1
        %s186 = smul.addr %s185, 8
        %s187 = smul.addr %s186, 4
        %s188 = scalar_lea.vmem %s0, %s187
      $region32: #{double_conv.4} parent=27 // pred_fallthru
        _
    $region28: #{double_conv.4} parent=5 // pred_fallthru
      _
    %p189 = scmp.le.s32.totalorder 1, %s12
    %p190 = scmp.lt.s32.totalorder %s12, 3
    %p191 = pnand %p189, %p190
    %p192 = pneg %p191
    // Predicated region
    $region33: #{double_conv.4} parent=5 // pred_check
      _
    $region34: #{double_conv.4} parent=5 // pred_check_branch
      %194 = sbr.rel (%p191) target = $region36
    $region35: #{double_conv.4} parent=5 // pred_region
      %s195 = ssub.s32 %s12, 1
      %p196 = scmp.lt.s32.totalorder %s17, 1
      %s197 = scalar_select %p196, %s17, 1
      %s198 = smul.addr %s197, 8
      %s199 = smul.addr %s198, 4
      %s200 = scalar_lea.vmem %s0, %s199
      %p201 = pneg %p38
      %p202 = pneg %p35
      %p203 = pneg %p59
      %p204 = pneg %p56
      %p205 = pneg %p80
      %p206 = pneg %p77
      %p207 = pneg %p101
      %p208 = pneg %p98
      %p209 = pneg %p127
      %p210 = pneg %p124
      %p211 = scmp.lt.s32.totalorder %s17, 1
      %s212 = scalar_select %p211, %s17, 1
      %s213 = smul.addr %s212, 8
      %s214 = smul.addr %s213, 8
      %s215 = scalar_lea.vmem %s4, %s214
      %p216 = pneg %p153
      %p217 = pneg %p150
      %p218 = scmp.lt.s32.totalorder %s17, 1
      %s219 = scalar_select %p218, %s17, 1
      %s220 = smul.addr %s219, 8
      %s221 = scalar_lea.vmem %s5, %s220
      %p222 = scmp.lt.s32.totalorder %s17, 1
      %s223 = scalar_select %p222, %s17, 1
      %s224 = smul.addr %s223, 8
      %s225 = smul.addr %s224, 4
      %s226 = scalar_lea.vmem %s0, %s225
      %p227 = scmp.lt.s32.totalorder %s17, 1
      %s228 = scalar_select %p227, %s17, 1
      %s229 = smul.addr %s228, 8
      %s230 = smul.addr %s229, 8
      %s231 = scalar_lea.vmem %s4, %s230
      %p232 = scmp.lt.s32.totalorder %s17, 1
      %s233 = scalar_select %p232, %s17, 1
      %s234 = smul.addr %s233, 8
      %s235 = scalar_lea.vmem %s5, %s234
      %v239 = vld [vmem:[%s226] sm:$0xf]
      %v240 = vld [vmem:[%s226 + $0x4] sm:$0xf]
      %v241 = vld [vmem:[%s226 + $0x8] sm:$0xf]
      %v242 = vld [vmem:[%s226 + $0xc] sm:$0xf]
      %v243 = vld [vmem:[%s226 + $0x10] sm:$0xf]
      %v244 = vld [vmem:[%s226 + $0x14] sm:$0xf]
      %v245 = vld [vmem:[%s226 + $0x18] sm:$0xf]
      %v246 = vld [vmem:[%s226 + $0x1c] sm:$0xf]
      %v247 = vunpack.c.l.bf16 %v239
      %v248 = vunpack.c.l.bf16 %v240
      %v249 = vunpack.c.l.bf16 %v241
      %v250 = vunpack.c.l.bf16 %v242
      %v251 = vunpack.c.l.bf16 %v243
      %v252 = vunpack.c.l.bf16 %v244
      %v253 = vunpack.c.l.bf16 %v245
      %v254 = vunpack.c.l.bf16 %v246
      %v255 = vld [vmem:[%s2] sm:$0x1]
      %v257 = vlaneseq
      %v258 = vshrl.u32 %v257, 7
      %v259 = vsub.s32 0, %v258
      %v260 = vrot.slane %v255, %v259
      %v262 = vmul.f32 %v247, %v260
      %v263 = vmul.f32 %v248, %v260
      %v264 = vmul.f32 %v249, %v260
      %v265 = vmul.f32 %v250, %v260
      %v266 = vmul.f32 %v251, %v260
      %v267 = vmul.f32 %v252, %v260
      %v268 = vmul.f32 %v253, %v260
      %v269 = vmul.f32 %v254, %v260
      %v270 = vld [vmem:[%s3] sm:$0x1]
      %v272 = vlaneseq
      %v273 = vshrl.u32 %v272, 7
      %v274 = vsub.s32 0, %v273
      %v275 = vrot.slane %v270, %v274
      %v277 = vadd.f32 %v262, %v275
      %v278 = vadd.f32 %v263, %v275
      %v279 = vadd.f32 %v264, %v275
      %v280 = vadd.f32 %v265, %v275
      %v281 = vadd.f32 %v266, %v275
      %v282 = vadd.f32 %v267, %v275
      %v283 = vadd.f32 %v268, %v275
      %v284 = vadd.f32 %v269, %v275
      %v285 = vmax.f32 %v277, 0.0
      %v286 = vmax.f32 %v278, 0.0
      %v287 = vmax.f32 %v279, 0.0
      %v288 = vmax.f32 %v280, 0.0
      %v289 = vmax.f32 %v281, 0.0
      %v290 = vmax.f32 %v282, 0.0
      %v291 = vmax.f32 %v283, 0.0
      %v292 = vmax.f32 %v284, 0.0
      %v293 = vpack.c.bf16 %v286, %v285
      %v294 = vpack.c.bf16 %v288, %v287
      %v295 = vpack.c.bf16 %v290, %v289
      %v296 = vpack.c.bf16 %v292, %v291
      %v297 = vlaneseq
      %v298 = vshrl.u32 %v297, 7
      %v299 = vadd.s32 %v298, 8
      %v300 = vadd.s32 %v298, 16
      %v301 = vadd.s32 %v298, 24
      %v302 = vadd.s32 %v298, 32
      %v303 = vadd.s32 %v298, 40
      %v304 = vadd.s32 %v298, 48
      %v305 = vadd.s32 %v298, 56
      %vm306 = vcmp.lt.s32.totalorder %v298, 0
      %v307 = vsub.s32 0, %v298
      %v308 = vsel %vm306, %v307, %v298
      %v309 = vshrl.u32 %v308, 3
      %v310 = vand.u32 %v308, 7
      %v311 = vsub.s32 0, %v310
      %v312 = vsel %vm306, %v311, %v310
      %vm313 = vcmp.lt.s32.totalorder %v299, 0
      %v314 = vsub.s32 0, %v299
      %v315 = vsel %vm313, %v314, %v299
      %v316 = vshrl.u32 %v315, 3
      %v317 = vand.u32 %v315, 7
      %v318 = vsub.s32 0, %v317
      %v319 = vsel %vm313, %v318, %v317
      %vm320 = vcmp.lt.s32.totalorder %v300, 0
      %v321 = vsub.s32 0, %v300
      %v322 = vsel %vm320, %v321, %v300
      %v323 = vshrl.u32 %v322, 3
      %v324 = vand.u32 %v322, 7
      %v325 = vsub.s32 0, %v324
      %v326 = vsel %vm320, %v325, %v324
      %vm327 = vcmp.lt.s32.totalorder %v301, 0
      %v328 = vsub.s32 0, %v301
      %v329 = vsel %vm327, %v328, %v301
      %v330 = vshrl.u32 %v329, 3
      %v331 = vand.u32 %v329, 7
      %v332 = vsub.s32 0, %v331
      %v333 = vsel %vm327, %v332, %v331
      %vm334 = vcmp.lt.s32.totalorder %v302, 0
      %v335 = vsub.s32 0, %v302
      %v336 = vsel %vm334, %v335, %v302
      %v337 = vshrl.u32 %v336, 3
      %v338 = vand.u32 %v336, 7
      %v339 = vsub.s32 0, %v338
      %v340 = vsel %vm334, %v339, %v338
      %vm341 = vcmp.lt.s32.totalorder %v303, 0
      %v342 = vsub.s32 0, %v303
      %v343 = vsel %vm341, %v342, %v303
      %v344 = vshrl.u32 %v343, 3
      %v345 = vand.u32 %v343, 7
      %v346 = vsub.s32 0, %v345
      %v347 = vsel %vm341, %v346, %v345
      %vm348 = vcmp.lt.s32.totalorder %v304, 0
      %v349 = vsub.s32 0, %v304
      %v350 = vsel %vm348, %v349, %v304
      %v351 = vshrl.u32 %v350, 3
      %v352 = vand.u32 %v350, 7
      %v353 = vsub.s32 0, %v352
      %v354 = vsel %vm348, %v353, %v352
      %vm355 = vcmp.lt.s32.totalorder %v305, 0
      %v356 = vsub.s32 0, %v305
      %v357 = vsel %vm355, %v356, %v305
      %v358 = vshrl.u32 %v357, 3
      %v359 = vand.u32 %v357, 7
      %v360 = vsub.s32 0, %v359
      %v361 = vsel %vm355, %v360, %v359
      %vm362 = vcmp.ne.s32.totalorder %v312, 0
      %vm363 = vcmp.ne.s32.totalorder %v319, 0
      %vm364 = vcmp.ne.s32.totalorder %v326, 0
      %vm365 = vcmp.ne.s32.totalorder %v333, 0
      %vm366 = vcmp.ne.s32.totalorder %v340, 0
      %vm367 = vcmp.ne.s32.totalorder %v347, 0
      %vm368 = vcmp.ne.s32.totalorder %v354, 0
      %vm369 = vcmp.ne.s32.totalorder %v361, 0
      %vm370 = vcmp.lt.s32.totalorder %v312, 0
      %vm371 = vcmp.lt.s32.totalorder %v319, 0
      %vm372 = vcmp.lt.s32.totalorder %v326, 0
      %vm373 = vcmp.lt.s32.totalorder %v333, 0
      %vm374 = vcmp.lt.s32.totalorder %v340, 0
      %vm375 = vcmp.lt.s32.totalorder %v347, 0
      %vm376 = vcmp.lt.s32.totalorder %v354, 0
      %vm377 = vcmp.lt.s32.totalorder %v361, 0
      %vm378 = vmand %vm370, %vm362
      %vm379 = vmand %vm371, %vm363
      %vm380 = vmand %vm372, %vm364
      %vm381 = vmand %vm373, %vm365
      %vm382 = vmand %vm374, %vm366
      %vm383 = vmand %vm375, %vm367
      %vm384 = vmand %vm376, %vm368
      %vm385 = vmand %vm377, %vm369
      %v386 = vadd.s32 %v312, 8
      %v387 = vadd.s32 %v319, 8
      %v388 = vadd.s32 %v326, 8
      %v389 = vadd.s32 %v333, 8
      %v390 = vadd.s32 %v340, 8
      %v391 = vadd.s32 %v347, 8
      %v392 = vadd.s32 %v354, 8
      %v393 = vadd.s32 %v361, 8
      %v394 = vsel %vm378, %v386, %v312
      %v395 = vsel %vm379, %v387, %v319
      %v396 = vsel %vm380, %v388, %v326
      %v397 = vsel %vm381, %v389, %v333
      %v398 = vsel %vm382, %v390, %v340
      %v399 = vsel %vm383, %v391, %v347
      %v400 = vsel %vm384, %v392, %v354
      %v401 = vsel %vm385, %v393, %v361
      %vm402 = vcmp.ne.s32.totalorder %v394, 0
      %vm403 = vcmp.ne.s32.totalorder %v395, 0
      %vm404 = vcmp.ne.s32.totalorder %v396, 0
      %vm405 = vcmp.ne.s32.totalorder %v397, 0
      %vm406 = vcmp.ne.s32.totalorder %v398, 0
      %vm407 = vcmp.ne.s32.totalorder %v399, 0
      %vm408 = vcmp.ne.s32.totalorder %v400, 0
      %vm409 = vcmp.ne.s32.totalorder %v401, 0
      %vm410 = vcmp.ne.s32.totalorder %v394, 7
      %vm411 = vcmp.ne.s32.totalorder %v395, 7
      %vm412 = vcmp.ne.s32.totalorder %v396, 7
      %vm413 = vcmp.ne.s32.totalorder %v397, 7
      %vm414 = vcmp.ne.s32.totalorder %v398, 7
      %vm415 = vcmp.ne.s32.totalorder %v399, 7
      %vm416 = vcmp.ne.s32.totalorder %v400, 7
      %vm417 = vcmp.ne.s32.totalorder %v401, 7
      %vm418 = vmpackc.low %vm402, %vm402
      %vm419 = vmpackc.low %vm403, %vm403
      %vm420 = vmpackc.low %vm404, %vm404
      %vm421 = vmpackc.low %vm405, %vm405
      %vm422 = vmpackc.low %vm406, %vm406
      %vm423 = vmpackc.low %vm407, %vm407
      %vm424 = vmpackc.low %vm408, %vm408
      %vm425 = vmpackc.low %vm409, %vm409
      %v426 = vsel %vm418, 65537, 0
      %v427 = vsel %vm419, 65537, 0
      %v428 = vsel %vm420, 65537, 0
      %v429 = vsel %vm421, 65537, 0
      %v430 = vsel %vm422, 65537, 0
      %v431 = vsel %vm423, 65537, 0
      %v432 = vsel %vm424, 65537, 0
      %v433 = vsel %vm425, 65537, 0
      %v434 = vunpack.c.l.b16 %v426
      %v435 = vunpack.c.l.b16 %v427
      %v436 = vunpack.c.l.b16 %v428
      %v437 = vunpack.c.l.b16 %v429
      %v438 = vunpack.c.l.b16 %v430
      %v439 = vunpack.c.l.b16 %v431
      %v440 = vunpack.c.l.b16 %v432
      %v441 = vunpack.c.l.b16 %v433
      %v442 = vpack.c.b16 %v435, %v434
      %v443 = vpack.c.b16 %v437, %v436
      %v444 = vpack.c.b16 %v439, %v438
      %v445 = vpack.c.b16 %v441, %v440
      %vm446 = vsmask.f32 3328
      %v448 = vshrl.u32 %v442, 16
      %v450 = vrot.slane %v448, 4
      %v451 = vshll.u32 %v442, 16
      %v453 = vrot.slane %v451, 5
      %v454 = vor.u32 %v450, %v453
      %v456 = vshrl.u32 %v443, 16
      %v458 = vrot.slane %v456, 4
      %v459 = vshll.u32 %v443, 16
      %v461 = vrot.slane %v459, 5
      %v462 = vor.u32 %v458, %v461
      %v463 = vsel %vm446, %v454, %v462
      %v465 = vshrl.u32 %v444, 16
      %v467 = vrot.slane %v465, 4
      %v468 = vshll.u32 %v444, 16
      %v470 = vrot.slane %v468, 5
      %v471 = vor.u32 %v467, %v470
      %v472 = vsel %vm446, %v462, %v471
      %v474 = vshrl.u32 %v445, 16
      %v476 = vrot.slane %v474, 4
      %v477 = vshll.u32 %v445, 16
      %v479 = vrot.slane %v477, 5
      %v480 = vor.u32 %v476, %v479
      %v481 = vsel %vm446, %v471, %v480
      %vm482 = vcmp.ne.s16.totalorder %v463, 0
      %vm483 = vcmp.ne.s16.totalorder %v472, 0
      %vm484 = vcmp.ne.s16.totalorder %v481, 0
      %vm485 = vcmp.ne.s16.totalorder %v480, 0
      %v486 = vsel %vm482, %v293, 0
      %v487 = vsel %vm483, %v294, 0
      %v488 = vsel %vm484, %v295, 0
      %v489 = vsel %vm485, %v296, 0
      %v490 = vld [vmem:[%s1] sm:$0xf]
      %v491 = vld [vmem:[%s1 + $0x4] sm:$0xf]
      %v492 = vld [vmem:[%s1 + $0x8] sm:$0xf]
      %v493 = vld [vmem:[%s1 + $0xc] sm:$0xf]
      %v494 = vld [vmem:[%s1 + $0x10] sm:$0xf]
      %v495 = vld [vmem:[%s1 + $0x14] sm:$0xf]
      %v496 = vld [vmem:[%s1 + $0x18] sm:$0xf]
      %v497 = vld [vmem:[%s1 + $0x1c] sm:$0xf]
      %s498 = scalar_lea.vmem %s1, 32
      %v499 = vld [vmem:[%s498] sm:$0xf]
      %v500 = vld [vmem:[%s498 + $0x4] sm:$0xf]
      %v501 = vld [vmem:[%s498 + $0x8] sm:$0xf]
      %v502 = vld [vmem:[%s498 + $0xc] sm:$0xf]
      %v503 = vld [vmem:[%s498 + $0x10] sm:$0xf]
      %v504 = vld [vmem:[%s498 + $0x14] sm:$0xf]
      %v505 = vld [vmem:[%s498 + $0x18] sm:$0xf]
      %v506 = vld [vmem:[%s498 + $0x1c] sm:$0xf]
      %vm512 = vcmask 1043456
      %v513 = vrot.slane 0, 4
      %v514 = vrot.slane %v293, 4
      %v515 = vsel %vm512, %v513, %v514
      %v516 = vrot.slane %v294, 4
      %v517 = vsel %vm512, %v514, %v516
      %v518 = vrot.slane %v295, 4
      %v519 = vsel %vm512, %v516, %v518
      %v520 = vrot.slane %v296, 4
      %v521 = vsel %vm512, %v518, %v520
      %v530 = vunpack.c.l.b16 %v499
      %v531 = vunpack.c.l.b16 %v500
      %v532 = vunpack.c.l.b16 %v501
      %v533 = vunpack.c.l.b16 %v502
      %v534 = vunpack.c.l.b16 %v503
      %v535 = vunpack.c.l.b16 %v504
      %v536 = vunpack.c.l.b16 %v505
      %v537 = vunpack.c.l.b16 %v506
      %v538 = vpack.c.b16 %v531, %v530
      %v539 = vpack.c.b16 %v533, %v532
      %v540 = vpack.c.b16 %v535, %v534
      %v541 = vpack.c.b16 %v537, %v536
      %vm546 = vcmask 523264
      %v548 = vsel %vm546, %v515, 0
      %v551 = vsel %vm546, %v517, 0
      %v554 = vsel %vm546, %v519, 0
      %v557 = vsel %vm546, %v521, 0
      %559 = vmatprep.subr.bf16.mxu0 0
      %560 = vmatpush1.bf16.msra.mxu0 %v538
      %561 = vmatprep.subr.bf16.mxu0 0
      %562 = vmatpush1.bf16.msra.mxu0 %v539
      %563 = vmatprep.subr.bf16.mxu0 0
      %564 = vmatpush1.bf16.msra.mxu0 %v540
      %565 = vmatprep.subr.bf16.mxu0 0
      %566 = vmatpush1.bf16.msra.mxu0 %v541
      %567 = vmatprep.subr.bf16.mxu0 0
      %568 = vmatpush1.bf16.msra.mxu0 0
      %569 = vmatprep.subr.bf16.mxu0 0
      %570 = vmatpush1.bf16.msra.mxu0 0
      %571 = vmatprep.subr.bf16.mxu0 0
      %572 = vmatpush1.bf16.msra.mxu0 0
      %573 = vmatprep.subr.bf16.mxu0 0
      %574 = vmatpush1.bf16.msra.mxu0 0
      %575 = vmatprep.subr.bf16.mxu0 0
      %576 = vmatpush1.bf16.msra.mxu0 0
      %577 = vmatprep.subr.bf16.mxu0 0
      %578 = vmatpush1.bf16.msra.mxu0 0
      %579 = vmatprep.subr.bf16.mxu0 0
      %580 = vmatpush1.bf16.msra.mxu0 0
      %581 = vmatprep.subr.bf16.mxu0 0
      %582 = vmatpush1.bf16.msra.mxu0 0
      %583 = vmatprep.subr.bf16.mxu0 0
      %584 = vmatpush1.bf16.msra.mxu0 0
      %585 = vmatprep.subr.bf16.mxu0 0
      %586 = vmatpush1.bf16.msra.mxu0 0
      %587 = vmatprep.subr.bf16.mxu0 0
      %588 = vmatpush1.bf16.msra.mxu0 0
      %589 = vmatprep.subr.bf16.mxu0 0
      %590 = vmatpush1.bf16.msra.mxu0 0
      %591 = vmatprep.mubr.bf16.mxu0 0
      %592 = vmatmul.mubr.bf16.gmra.mrb[0].mxu0 %v548
      %v593 = vpop.f32.mrb[0].mxu0
      %v594 = vadd.f32 0.0, %v593
      %v595 = vpop.f32.mrb[0].mxu0
      %v596 = vpop.f32.mrb[0].mxu0
      %v597 = vadd.f32 0.0, %v596
      %v598 = vpop.f32.mrb[0].mxu0
      %599 = vmatprep.mubr.bf16.mxu0 0
      %600 = vmatmul.mubr.bf16.gmra.mrb[0].mxu0 %v551
      %v601 = vpop.f32.mrb[0].mxu0
      %v602 = vadd.f32 0.0, %v601
      %v603 = vpop.f32.mrb[0].mxu0
      %v604 = vpop.f32.mrb[0].mxu0
      %v605 = vadd.f32 0.0, %v604
      %v606 = vpop.f32.mrb[0].mxu0
      %607 = vmatprep.mubr.bf16.mxu0 0
      %608 = vmatmul.mubr.bf16.gmra.mrb[0].mxu0 %v554
      %v609 = vpop.f32.mrb[0].mxu0
      %v610 = vadd.f32 0.0, %v609
      %v611 = vpop.f32.mrb[0].mxu0
      %v612 = vpop.f32.mrb[0].mxu0
      %v613 = vadd.f32 0.0, %v612
      %v614 = vpop.f32.mrb[0].mxu0
      %615 = vmatprep.mubr.bf16.mxu0 0
      %616 = vmatmul.mubr.bf16.gmra.mrb[0].mxu0 %v557
      %v617 = vpop.f32.mrb[0].mxu0
      %v618 = vadd.f32 0.0, %v617
      %v619 = vpop.f32.mrb[0].mxu0
      %v620 = vpop.f32.mrb[0].mxu0
      %v621 = vadd.f32 0.0, %v620
      %v622 = vpop.f32.mrb[0].mxu0
      %623 = vdwg.mxu0
      %vm624 = vsmask.f32 4352
      %v626 = vshrl.u32 0, 16
      %v628 = vrot.slane %v626, 3
      %v629 = vshll.u32 0, 16
      %v631 = vrot.slane %v629, 4
      %v632 = vor.u32 %v628, %v631
      %v634 = vshrl.u32 %v486, 16
      %v636 = vrot.slane %v634, 3
      %v637 = vshll.u32 %v486, 16
      %v639 = vrot.slane %v637, 4
      %v640 = vor.u32 %v636, %v639
      %v641 = vsel %vm624, %v632, %v640
      %v643 = vshrl.u32 %v487, 16
      %v645 = vrot.slane %v643, 3
      %v646 = vshll.u32 %v487, 16
      %v648 = vrot.slane %v646, 4
      %v649 = vor.u32 %v645, %v648
      %v650 = vsel %vm624, %v640, %v649
      %v652 = vshrl.u32 %v488, 16
      %v654 = vrot.slane %v652, 3
      %v655 = vshll.u32 %v488, 16
      %v657 = vrot.slane %v655, 4
      %v658 = vor.u32 %v654, %v657
      %v659 = vsel %vm624, %v649, %v658
      %v661 = vshrl.u32 %v489, 16
      %v663 = vrot.slane %v661, 3
      %v664 = vshll.u32 %v489, 16
      %v666 = vrot.slane %v664, 4
      %v667 = vor.u32 %v663, %v666
      %v668 = vsel %vm624, %v658, %v667
      %v677 = vunpack.c.l.b16 %v490
      %v678 = vunpack.c.l.b16 %v491
      %v679 = vunpack.c.l.b16 %v492
      %v680 = vunpack.c.l.b16 %v493
      %v681 = vunpack.c.l.b16 %v494
      %v682 = vunpack.c.l.b16 %v495
      %v683 = vunpack.c.l.b16 %v496
      %v684 = vunpack.c.l.b16 %v497
      %v685 = vpack.c.b16 %v678, %v677
      %v686 = vpack.c.b16 %v680, %v679
      %v687 = vpack.c.b16 %v682, %v681
      %v688 = vpack.c.b16 %v684, %v683
      %v694 = vsel %vm546, %v641, 0
      %v697 = vsel %vm546, %v650, 0
      %v700 = vsel %vm546, %v659, 0
      %v703 = vsel %vm546, %v668, 0
      %705 = vmatprep.subr.bf16.mxu0 0
      %706 = vmatpush1.bf16.msra.mxu0 %v685
      %707 = vmatprep.subr.bf16.mxu0 0
      %708 = vmatpush1.bf16.msra.mxu0 %v686
      %709 = vmatprep.subr.bf16.mxu0 0
      %710 = vmatpush1.bf16.msra.mxu0 %v687
      %711 = vmatprep.subr.bf16.mxu0 0
      %712 = vmatpush1.bf16.msra.mxu0 %v688
      %713 = vmatprep.subr.bf16.mxu0 0
      %714 = vmatpush1.bf16.msra.mxu0 0
      %715 = vmatprep.subr.bf16.mxu0 0
      %716 = vmatpush1.bf16.msra.mxu0 0
      %717 = vmatprep.subr.bf16.mxu0 0
      %718 = vmatpush1.bf16.msra.mxu0 0
      %719 = vmatprep.subr.bf16.mxu0 0
      %720 = vmatpush1.bf16.msra.mxu0 0
      %721 = vmatprep.subr.bf16.mxu0 0
      %722 = vmatpush1.bf16.msra.mxu0 0
      %723 = vmatprep.subr.bf16.mxu0 0
      %724 = vmatpush1.bf16.msra.mxu0 0
      %725 = vmatprep.subr.bf16.mxu0 0
      %726 = vmatpush1.bf16.msra.mxu0 0
      %727 = vmatprep.subr.bf16.mxu0 0
      %728 = vmatpush1.bf16.msra.mxu0 0
      %729 = vmatprep.subr.bf16.mxu0 0
      %730 = vmatpush1.bf16.msra.mxu0 0
      %731 = vmatprep.subr.bf16.mxu0 0
      %732 = vmatpush1.bf16.msra.mxu0 0
      %733 = vmatprep.subr.bf16.mxu0 0
      %734 = vmatpush1.bf16.msra.mxu0 0
      %735 = vmatprep.subr.bf16.mxu0 0
      %736 = vmatpush1.bf16.msra.mxu0 0
      %737 = vmatprep.mubr.bf16.mxu0 0
      %738 = vmatmul.mubr.bf16.gmra.mrb[0].mxu0 %v694
      %v739 = vpop.f32.mrb[0].mxu0
      %v740 = vadd.f32 %v594, %v739
      %v741 = vpop.f32.mrb[0].mxu0
      %v742 = vpop.f32.mrb[0].mxu0
      %v743 = vadd.f32 %v597, %v742
      %v744 = vpop.f32.mrb[0].mxu0
      %745 = vmatprep.mubr.bf16.mxu0 0
      %746 = vmatmul.mubr.bf16.gmra.mrb[0].mxu0 %v697
      %v747 = vpop.f32.mrb[0].mxu0
      %v748 = vadd.f32 %v602, %v747
      %v749 = vpop.f32.mrb[0].mxu0
      %v750 = vpop.f32.mrb[0].mxu0
      %v751 = vadd.f32 %v605, %v750
      %v752 = vpop.f32.mrb[0].mxu0
      %753 = vmatprep.mubr.bf16.mxu0 0
      %754 = vmatmul.mubr.bf16.gmra.mrb[0].mxu0 %v700
      %v755 = vpop.f32.mrb[0].mxu0
      %v756 = vadd.f32 %v610, %v755
      %v757 = vpop.f32.mrb[0].mxu0
      %v758 = vpop.f32.mrb[0].mxu0
      %v759 = vadd.f32 %v613, %v758
      %v760 = vpop.f32.mrb[0].mxu0
      %761 = vmatprep.mubr.bf16.mxu0 0
      %762 = vmatmul.mubr.bf16.gmra.mrb[0].mxu0 %v703
      %v763 = vpop.f32.mrb[0].mxu0
      %v764 = vadd.f32 %v618, %v763
      %v765 = vpop.f32.mrb[0].mxu0
      %v766 = vpop.f32.mrb[0].mxu0
      %v767 = vadd.f32 %v621, %v766
      %v768 = vpop.f32.mrb[0].mxu0
      %769 = vdwg.mxu0
      %vm770 = vmpackc.low %vm410, %vm410
      %vm771 = vmpackc.low %vm411, %vm411
      %vm772 = vmpackc.low %vm412, %vm412
      %vm773 = vmpackc.low %vm413, %vm413
      %vm774 = vmpackc.low %vm414, %vm414
      %vm775 = vmpackc.low %vm415, %vm415
      %vm776 = vmpackc.low %vm416, %vm416
      %vm777 = vmpackc.low %vm417, %vm417
      %v778 = vsel %vm770, 65537, 0
      %v779 = vsel %vm771, 65537, 0
      %v780 = vsel %vm772, 65537, 0
      %v781 = vsel %vm773, 65537, 0
      %v782 = vsel %vm774, 65537, 0
      %v783 = vsel %vm775, 65537, 0
      %v784 = vsel %vm776, 65537, 0
      %v785 = vsel %vm777, 65537, 0
      %v786 = vunpack.c.l.b16 %v778
      %v787 = vunpack.c.l.b16 %v779
      %v788 = vunpack.c.l.b16 %v780
      %v789 = vunpack.c.l.b16 %v781
      %v790 = vunpack.c.l.b16 %v782
      %v791 = vunpack.c.l.b16 %v783
      %v792 = vunpack.c.l.b16 %v784
      %v793 = vunpack.c.l.b16 %v785
      %v794 = vpack.c.b16 %v787, %v786
      %v795 = vpack.c.b16 %v789, %v788
      %v796 = vpack.c.b16 %v791, %v790
      %v797 = vpack.c.b16 %v793, %v792
      %v799 = vshrl.u32 %v794, 16
      %v801 = vrot.slane %v799, 3
      %v802 = vshll.u32 %v794, 16
      %v804 = vrot.slane %v802, 4
      %v805 = vor.u32 %v801, %v804
      %v807 = vshrl.u32 %v795, 16
      %v809 = vrot.slane %v807, 3
      %v810 = vshll.u32 %v795, 16
      %v812 = vrot.slane %v810, 4
      %v813 = vor.u32 %v809, %v812
      %v814 = vsel %vm624, %v805, %v813
      %v816 = vshrl.u32 %v796, 16
      %v818 = vrot.slane %v816, 3
      %v819 = vshll.u32 %v796, 16
      %v821 = vrot.slane %v819, 4
      %v822 = vor.u32 %v818, %v821
      %v823 = vsel %vm624, %v813, %v822
      %v825 = vshrl.u32 %v797, 16
      %v827 = vrot.slane %v825, 3
      %v828 = vshll.u32 %v797, 16
      %v830 = vrot.slane %v828, 4
      %v831 = vor.u32 %v827, %v830
      %v832 = vsel %vm624, %v822, %v831
      %vm833 = vcmp.ne.s16.totalorder %v814, 0
      %vm834 = vcmp.ne.s16.totalorder %v823, 0
      %vm835 = vcmp.ne.s16.totalorder %v832, 0
      %vm836 = vcmp.ne.s16.totalorder %v831, 0
      %v837 = vsel %vm833, %v293, 0
      %v838 = vsel %vm834, %v294, 0
      %v839 = vsel %vm835, %v295, 0
      %v840 = vsel %vm836, %v296, 0
      %s841 = scalar_lea.vmem %s1, 64
      %v842 = vld [vmem:[%s841] sm:$0xf]
      %v843 = vld [vmem:[%s841 + $0x4] sm:$0xf]
      %v844 = vld [vmem:[%s841 + $0x8] sm:$0xf]
      %v845 = vld [vmem:[%s841 + $0xc] sm:$0xf]
      %v846 = vld [vmem:[%s841 + $0x10] sm:$0xf]
      %v847 = vld [vmem:[%s841 + $0x14] sm:$0xf]
      %v848 = vld [vmem:[%s841 + $0x18] sm:$0xf]
      %v849 = vld [vmem:[%s841 + $0x1c] sm:$0xf]
      %v850 = vrot.slane %v626, 4
      %v851 = vrot.slane %v629, 5
      %v852 = vor.u32 %v850, %v851
      %v854 = vshrl.u32 %v837, 16
      %v856 = vrot.slane %v854, 4
      %v857 = vshll.u32 %v837, 16
      %v859 = vrot.slane %v857, 5
      %v860 = vor.u32 %v856, %v859
      %v861 = vsel %vm446, %v852, %v860
      %v863 = vshrl.u32 %v838, 16
      %v865 = vrot.slane %v863, 4
      %v866 = vshll.u32 %v838, 16
      %v868 = vrot.slane %v866, 5
      %v869 = vor.u32 %v865, %v868
      %v870 = vsel %vm446, %v860, %v869
      %v872 = vshrl.u32 %v839, 16
      %v874 = vrot.slane %v872, 4
      %v875 = vshll.u32 %v839, 16
      %v877 = vrot.slane %v875, 5
      %v878 = vor.u32 %v874, %v877
      %v879 = vsel %vm446, %v869, %v878
      %v881 = vshrl.u32 %v840, 16
      %v883 = vrot.slane %v881, 4
      %v884 = vshll.u32 %v840, 16
      %v886 = vrot.slane %v884, 5
      %v887 = vor.u32 %v883, %v886
      %v888 = vsel %vm446, %v878, %v887
      %v897 = vunpack.c.l.b16 %v842
      %v898 = vunpack.c.l.b16 %v843
      %v899 = vunpack.c.l.b16 %v844
      %v900 = vunpack.c.l.b16 %v845
      %v901 = vunpack.c.l.b16 %v846
      %v902 = vunpack.c.l.b16 %v847
      %v903 = vunpack.c.l.b16 %v848
      %v904 = vunpack.c.l.b16 %v849
      %v905 = vpack.c.b16 %v898, %v897
      %v906 = vpack.c.b16 %v900, %v899
      %v907 = vpack.c.b16 %v902, %v901
      %v908 = vpack.c.b16 %v904, %v903
      %v914 = vsel %vm546, %v861, 0
      %v917 = vsel %vm546, %v870, 0
      %v920 = vsel %vm546, %v879, 0
      %v923 = vsel %vm546, %v888, 0
      %925 = vmatprep.subr.bf16.mxu0 0
      %926 = vmatpush1.bf16.msra.mxu0 %v905
      %927 = vmatprep.subr.bf16.mxu0 0
      %928 = vmatpush1.bf16.msra.mxu0 %v906
      %929 = vmatprep.subr.bf16.mxu0 0
      %930 = vmatpush1.bf16.msra.mxu0 %v907
      %931 = vmatprep.subr.bf16.mxu0 0
      %932 = vmatpush1.bf16.msra.mxu0 %v908
      %933 = vmatprep.subr.bf16.mxu0 0
      %934 = vmatpush1.bf16.msra.mxu0 0
      %935 = vmatprep.subr.bf16.mxu0 0
      %936 = vmatpush1.bf16.msra.mxu0 0
      %937 = vmatprep.subr.bf16.mxu0 0
      %938 = vmatpush1.bf16.msra.mxu0 0
      %939 = vmatprep.subr.bf16.mxu0 0
      %940 = vmatpush1.bf16.msra.mxu0 0
      %941 = vmatprep.subr.bf16.mxu0 0
      %942 = vmatpush1.bf16.msra.mxu0 0
      %943 = vmatprep.subr.bf16.mxu0 0
      %944 = vmatpush1.bf16.msra.mxu0 0
      %945 = vmatprep.subr.bf16.mxu0 0
      %946 = vmatpush1.bf16.msra.mxu0 0
      %947 = vmatprep.subr.bf16.mxu0 0
      %948 = vmatpush1.bf16.msra.mxu0 0
      %949 = vmatprep.subr.bf16.mxu0 0
      %950 = vmatpush1.bf16.msra.mxu0 0
      %951 = vmatprep.subr.bf16.mxu0 0
      %952 = vmatpush1.bf16.msra.mxu0 0
      %953 = vmatprep.subr.bf16.mxu0 0
      %954 = vmatpush1.bf16.msra.mxu0 0
      %955 = vmatprep.subr.bf16.mxu0 0
      %956 = vmatpush1.bf16.msra.mxu0 0
      %957 = vmatprep.mubr.bf16.mxu0 0
      %958 = vmatmul.mubr.bf16.gmra.mrb[0].mxu0 %v914
      %v959 = vpop.f32.mrb[0].mxu0
      %v960 = vadd.f32 0.0, %v959
      %v961 = vpop.f32.mrb[0].mxu0
      %v962 = vpop.f32.mrb[0].mxu0
      %v963 = vadd.f32 0.0, %v962
      %v964 = vpop.f32.mrb[0].mxu0
      %965 = vmatprep.mubr.bf16.mxu0 0
      %966 = vmatmul.mubr.bf16.gmra.mrb[0].mxu0 %v917
      %v967 = vpop.f32.mrb[0].mxu0
      %v968 = vadd.f32 0.0, %v967
      %v969 = vpop.f32.mrb[0].mxu0
      %v970 = vpop.f32.mrb[0].mxu0
      %v971 = vadd.f32 0.0, %v970
      %v972 = vpop.f32.mrb[0].mxu0
      %973 = vmatprep.mubr.bf16.mxu0 0
      %974 = vmatmul.mubr.bf16.gmra.mrb[0].mxu0 %v920
      %v975 = vpop.f32.mrb[0].mxu0
      %v976 = vadd.f32 0.0, %v975
      %v977 = vpop.f32.mrb[0].mxu0
      %v978 = vpop.f32.mrb[0].mxu0
      %v979 = vadd.f32 0.0, %v978
      %v980 = vpop.f32.mrb[0].mxu0
      %981 = vmatprep.mubr.bf16.mxu0 0
      %982 = vmatmul.mubr.bf16.gmra.mrb[0].mxu0 %v923
      %v983 = vpop.f32.mrb[0].mxu0
      %v984 = vadd.f32 0.0, %v983
      %v985 = vpop.f32.mrb[0].mxu0
      %v986 = vpop.f32.mrb[0].mxu0
      %v987 = vadd.f32 0.0, %v986
      %v988 = vpop.f32.mrb[0].mxu0
      %989 = vdwg.mxu0
      %v990 = vadd.f32 %v740, %v960
      %v991 = vadd.f32 %v743, %v963
      %v992 = vadd.f32 %v748, %v968
      %v993 = vadd.f32 %v751, %v971
      %v994 = vadd.f32 %v756, %v976
      %v995 = vadd.f32 %v759, %v979
      %v996 = vadd.f32 %v764, %v984
      %v997 = vadd.f32 %v767, %v987
      %vm998 = vsmask.f32 7424
      %v999 = vrot.slane %v451, 1
      %v1000 = vor.u32 %v448, %v999
      %v1001 = vrot.slane %v459, 1
      %v1002 = vsel %vm998, %v1000, %v1001
      %v1003 = vor.u32 %v456, %v1001
      %v1004 = vrot.slane %v468, 1
      %v1005 = vsel %vm998, %v1003, %v1004
      %v1006 = vor.u32 %v465, %v1004
      %v1007 = vrot.slane %v477, 1
      %v1008 = vsel %vm998, %v1006, %v1007
      %v1009 = vor.u32 %v474, %v1007
      %vm1010 = vcmp.ne.s16.totalorder %v1002, 0
      %vm1011 = vcmp.ne.s16.totalorder %v1005, 0
      %vm1012 = vcmp.ne.s16.totalorder %v1008, 0
      %vm1013 = vcmp.ne.s16.totalorder %v1009, 0
      %v1014 = vsel %vm1010, %v293, 0
      %v1015 = vsel %vm1011, %v294, 0
      %v1016 = vsel %vm1012, %v295, 0
      %v1017 = vsel %vm1013, %v296, 0
      %s1018 = scalar_lea.vmem %s1, 96
      %v1019 = vld [vmem:[%s1018] sm:$0xf]
      %v1020 = vld [vmem:[%s1018 + $0x4] sm:$0xf]
      %v1021 = vld [vmem:[%s1018 + $0x8] sm:$0xf]
      %v1022 = vld [vmem:[%s1018 + $0xc] sm:$0xf]
      %v1023 = vld [vmem:[%s1018 + $0x10] sm:$0xf]
      %v1024 = vld [vmem:[%s1018 + $0x14] sm:$0xf]
      %v1025 = vld [vmem:[%s1018 + $0x18] sm:$0xf]
      %v1026 = vld [vmem:[%s1018 + $0x1c] sm:$0xf]
      %vm1027 = vsmask.f32 256
      %v1028 = vrot.slane %v626, 7
      %v1030 = vshrl.u32 %v1014, 16
      %v1032 = vrot.slane %v1030, 7
      %v1033 = vshll.u32 %v1014, 16
      %v1035 = vor.u32 %v1032, %v1033
      %v1036 = vsel %vm1027, %v1028, %v1035
      %v1038 = vshrl.u32 %v1015, 16
      %v1040 = vrot.slane %v1038, 7
      %v1041 = vshll.u32 %v1015, 16
      %v1043 = vor.u32 %v1040, %v1041
      %v1044 = vsel %vm1027, %v1032, %v1043
      %v1046 = vshrl.u32 %v1016, 16
      %v1048 = vrot.slane %v1046, 7
      %v1049 = vshll.u32 %v1016, 16
      %v1051 = vor.u32 %v1048, %v1049
      %v1052 = vsel %vm1027, %v1040, %v1051
      %v1054 = vshrl.u32 %v1017, 16
      %v1056 = vrot.slane %v1054, 7
      %v1057 = vshll.u32 %v1017, 16
      %v1059 = vor.u32 %v1056, %v1057
      %v1060 = vsel %vm1027, %v1048, %v1059
      %v1069 = vunpack.c.l.b16 %v1019
      %v1070 = vunpack.c.l.b16 %v1020
      %v1071 = vunpack.c.l.b16 %v1021
      %v1072 = vunpack.c.l.b16 %v1022
      %v1073 = vunpack.c.l.b16 %v1023
      %v1074 = vunpack.c.l.b16 %v1024
      %v1075 = vunpack.c.l.b16 %v1025
      %v1076 = vunpack.c.l.b16 %v1026
      %v1077 = vpack.c.b16 %v1070, %v1069
      %v1078 = vpack.c.b16 %v1072, %v1071
      %v1079 = vpack.c.b16 %v1074, %v1073
      %v1080 = vpack.c.b16 %v1076, %v1075
      %v1086 = vsel %vm546, %v1036, 0
      %v1089 = vsel %vm546, %v1044, 0
      %v1092 = vsel %vm546, %v1052, 0
      %v1095 = vsel %vm546, %v1060, 0
      %1097 = vmatprep.subr.bf16.mxu0 0
      %1098 = vmatpush1.bf16.msra.mxu0 %v1077
      %1099 = vmatprep.subr.bf16.mxu0 0
      %1100 = vmatpush1.bf16.msra.mxu0 %v1078
      %1101 = vmatprep.subr.bf16.mxu0 0
      %1102 = vmatpush1.bf16.msra.mxu0 %v1079
      %1103 = vmatprep.subr.bf16.mxu0 0
      %1104 = vmatpush1.bf16.msra.mxu0 %v1080
      %1105 = vmatprep.subr.bf16.mxu0 0
      %1106 = vmatpush1.bf16.msra.mxu0 0
      %1107 = vmatprep.subr.bf16.mxu0 0
      %1108 = vmatpush1.bf16.msra.mxu0 0
      %1109 = vmatprep.subr.bf16.mxu0 0
      %1110 = vmatpush1.bf16.msra.mxu0 0
      %1111 = vmatprep.subr.bf16.mxu0 0
      %1112 = vmatpush1.bf16.msra.mxu0 0
      %1113 = vmatprep.subr.bf16.mxu0 0
      %1114 = vmatpush1.bf16.msra.mxu0 0
      %1115 = vmatprep.subr.bf16.mxu0 0
      %1116 = vmatpush1.bf16.msra.mxu0 0
      %1117 = vmatprep.subr.bf16.mxu0 0
      %1118 = vmatpush1.bf16.msra.mxu0 0
      %1119 = vmatprep.subr.bf16.mxu0 0
      %1120 = vmatpush1.bf16.msra.mxu0 0
      %1121 = vmatprep.subr.bf16.mxu0 0
      %1122 = vmatpush1.bf16.msra.mxu0 0
      %1123 = vmatprep.subr.bf16.mxu0 0
      %1124 = vmatpush1.bf16.msra.mxu0 0
      %1125 = vmatprep.subr.bf16.mxu0 0
      %1126 = vmatpush1.bf16.msra.mxu0 0
      %1127 = vmatprep.subr.bf16.mxu0 0
      %1128 = vmatpush1.bf16.msra.mxu0 0
      %1129 = vmatprep.mubr.bf16.mxu0 0
      %1130 = vmatmul.mubr.bf16.gmra.mrb[0].mxu0 %v1086
      %v1131 = vpop.f32.mrb[0].mxu0
      %v1132 = vadd.f32 0.0, %v1131
      %v1133 = vpop.f32.mrb[0].mxu0
      %v1134 = vpop.f32.mrb[0].mxu0
      %v1135 = vadd.f32 0.0, %v1134
      %v1136 = vpop.f32.mrb[0].mxu0
      %1137 = vmatprep.mubr.bf16.mxu0 0
      %1138 = vmatmul.mubr.bf16.gmra.mrb[0].mxu0 %v1089
      %v1139 = vpop.f32.mrb[0].mxu0
      %v1140 = vadd.f32 0.0, %v1139
      %v1141 = vpop.f32.mrb[0].mxu0
      %v1142 = vpop.f32.mrb[0].mxu0
      %v1143 = vadd.f32 0.0, %v1142
      %v1144 = vpop.f32.mrb[0].mxu0
      %1145 = vmatprep.mubr.bf16.mxu0 0
      %1146 = vmatmul.mubr.bf16.gmra.mrb[0].mxu0 %v1092
      %v1147 = vpop.f32.mrb[0].mxu0
      %v1148 = vadd.f32 0.0, %v1147
      %v1149 = vpop.f32.mrb[0].mxu0
      %v1150 = vpop.f32.mrb[0].mxu0
      %v1151 = vadd.f32 0.0, %v1150
      %v1152 = vpop.f32.mrb[0].mxu0
      %1153 = vmatprep.mubr.bf16.mxu0 0
      %1154 = vmatmul.mubr.bf16.gmra.mrb[0].mxu0 %v1095
      %v1155 = vpop.f32.mrb[0].mxu0
      %v1156 = vadd.f32 0.0, %v1155
      %v1157 = vpop.f32.mrb[0].mxu0
      %v1158 = vpop.f32.mrb[0].mxu0
      %v1159 = vadd.f32 0.0, %v1158
      %v1160 = vpop.f32.mrb[0].mxu0
      %1161 = vdwg.mxu0
      %v1162 = vadd.f32 %v990, %v1132
      %v1163 = vadd.f32 %v991, %v1135
      %v1164 = vadd.f32 %v992, %v1140
      %v1165 = vadd.f32 %v993, %v1143
      %v1166 = vadd.f32 %v994, %v1148
      %v1167 = vadd.f32 %v995, %v1151
      %v1168 = vadd.f32 %v996, %v1156
      %v1169 = vadd.f32 %v997, %v1159
      %s1170 = scalar_lea.vmem %s1, 128
      %v1171 = vld [vmem:[%s1170] sm:$0xf]
      %v1172 = vld [vmem:[%s1170 + $0x4] sm:$0xf]
      %v1173 = vld [vmem:[%s1170 + $0x8] sm:$0xf]
      %v1174 = vld [vmem:[%s1170 + $0xc] sm:$0xf]
      %v1175 = vld [vmem:[%s1170 + $0x10] sm:$0xf]
      %v1176 = vld [vmem:[%s1170 + $0x14] sm:$0xf]
      %v1177 = vld [vmem:[%s1170 + $0x18] sm:$0xf]
      %v1178 = vld [vmem:[%s1170 + $0x1c] sm:$0xf]
      %v1187 = vunpack.c.l.b16 %v1171
      %v1188 = vunpack.c.l.b16 %v1172
      %v1189 = vunpack.c.l.b16 %v1173
      %v1190 = vunpack.c.l.b16 %v1174
      %v1191 = vunpack.c.l.b16 %v1175
      %v1192 = vunpack.c.l.b16 %v1176
      %v1193 = vunpack.c.l.b16 %v1177
      %v1194 = vunpack.c.l.b16 %v1178
      %v1195 = vpack.c.b16 %v1188, %v1187
      %v1196 = vpack.c.b16 %v1190, %v1189
      %v1197 = vpack.c.b16 %v1192, %v1191
      %v1198 = vpack.c.b16 %v1194, %v1193
      %v1204 = vsel %vm546, %v293, 0
      %v1207 = vsel %vm546, %v294, 0
      %v1210 = vsel %vm546, %v295, 0
      %v1213 = vsel %vm546, %v296, 0
      %1215 = vmatprep.subr.bf16.mxu0 0
      %1216 = vmatpush1.bf16.msra.mxu0 %v1195
      %1217 = vmatprep.subr.bf16.mxu0 0
      %1218 = vmatpush1.bf16.msra.mxu0 %v1196
      %1219 = vmatprep.subr.bf16.mxu0 0
      %1220 = vmatpush1.bf16.msra.mxu0 %v1197
      %1221 = vmatprep.subr.bf16.mxu0 0
      %1222 = vmatpush1.bf16.msra.mxu0 %v1198
      %1223 = vmatprep.subr.bf16.mxu0 0
      %1224 = vmatpush1.bf16.msra.mxu0 0
      %1225 = vmatprep.subr.bf16.mxu0 0
      %1226 = vmatpush1.bf16.msra.mxu0 0
      %1227 = vmatprep.subr.bf16.mxu0 0
      %1228 = vmatpush1.bf16.msra.mxu0 0
      %1229 = vmatprep.subr.bf16.mxu0 0
      %1230 = vmatpush1.bf16.msra.mxu0 0
      %1231 = vmatprep.subr.bf16.mxu0 0
      %1232 = vmatpush1.bf16.msra.mxu0 0
      %1233 = vmatprep.subr.bf16.mxu0 0
      %1234 = vmatpush1.bf16.msra.mxu0 0
      %1235 = vmatprep.subr.bf16.mxu0 0
      %1236 = vmatpush1.bf16.msra.mxu0 0
      %1237 = vmatprep.subr.bf16.mxu0 0
      %1238 = vmatpush1.bf16.msra.mxu0 0
      %1239 = vmatprep.subr.bf16.mxu0 0
      %1240 = vmatpush1.bf16.msra.mxu0 0
      %1241 = vmatprep.subr.bf16.mxu0 0
      %1242 = vmatpush1.bf16.msra.mxu0 0
      %1243 = vmatprep.subr.bf16.mxu0 0
      %1244 = vmatpush1.bf16.msra.mxu0 0
      %1245 = vmatprep.subr.bf16.mxu0 0
      %1246 = vmatpush1.bf16.msra.mxu0 0
      %1247 = vmatprep.mubr.bf16.mxu0 0
      %1248 = vmatmul.mubr.bf16.gmra.mrb[0].mxu0 %v1204
      %v1249 = vpop.f32.mrb[0].mxu0
      %v1250 = vadd.f32 0.0, %v1249
      %v1251 = vpop.f32.mrb[0].mxu0
      %v1252 = vpop.f32.mrb[0].mxu0
      %v1253 = vadd.f32 0.0, %v1252
      %v1254 = vpop.f32.mrb[0].mxu0
      %1255 = vmatprep.mubr.bf16.mxu0 0
      %1256 = vmatmul.mubr.bf16.gmra.mrb[0].mxu0 %v1207
      %v1257 = vpop.f32.mrb[0].mxu0
      %v1258 = vadd.f32 0.0, %v1257
      %v1259 = vpop.f32.mrb[0].mxu0
      %v1260 = vpop.f32.mrb[0].mxu0
      %v1261 = vadd.f32 0.0, %v1260
      %v1262 = vpop.f32.mrb[0].mxu0
      %1263 = vmatprep.mubr.bf16.mxu0 0
      %1264 = vmatmul.mubr.bf16.gmra.mrb[0].mxu0 %v1210
      %v1265 = vpop.f32.mrb[0].mxu0
      %v1266 = vadd.f32 0.0, %v1265
      %v1267 = vpop.f32.mrb[0].mxu0
      %v1268 = vpop.f32.mrb[0].mxu0
      %v1269 = vadd.f32 0.0, %v1268
      %v1270 = vpop.f32.mrb[0].mxu0
      %1271 = vmatprep.mubr.bf16.mxu0 0
      %1272 = vmatmul.mubr.bf16.gmra.mrb[0].mxu0 %v1213
      %v1273 = vpop.f32.mrb[0].mxu0
      %v1274 = vadd.f32 0.0, %v1273
      %v1275 = vpop.f32.mrb[0].mxu0
      %v1276 = vpop.f32.mrb[0].mxu0
      %v1277 = vadd.f32 0.0, %v1276
      %v1278 = vpop.f32.mrb[0].mxu0
      %1279 = vdwg.mxu0
      %v1280 = vadd.f32 %v1162, %v1250
      %v1281 = vadd.f32 %v1163, %v1253
      %v1282 = vadd.f32 %v1164, %v1258
      %v1283 = vadd.f32 %v1165, %v1261
      %v1284 = vadd.f32 %v1166, %v1266
      %v1285 = vadd.f32 %v1167, %v1269
      %v1286 = vadd.f32 %v1168, %v1274
      %v1287 = vadd.f32 %v1169, %v1277
      %v1288 = vrot.slane %v799, 7
      %v1289 = vor.u32 %v1288, %v802
      %v1290 = vrot.slane %v807, 7
      %v1291 = vor.u32 %v1290, %v810
      %v1292 = vsel %vm1027, %v1288, %v1291
      %v1293 = vrot.slane %v816, 7
      %v1294 = vor.u32 %v1293, %v819
      %v1295 = vsel %vm1027, %v1290, %v1294
      %v1296 = vrot.slane %v825, 7
      %v1297 = vor.u32 %v1296, %v828
      %v1298 = vsel %vm1027, %v1293, %v1297
      %vm1299 = vcmp.ne.s16.totalorder %v1289, 0
      %vm1300 = vcmp.ne.s16.totalorder %v1292, 0
      %vm1301 = vcmp.ne.s16.totalorder %v1295, 0
      %vm1302 = vcmp.ne.s16.totalorder %v1298, 0
      %v1303 = vsel %vm1299, %v293, 0
      %v1304 = vsel %vm1300, %v294, 0
      %v1305 = vsel %vm1301, %v295, 0
      %v1306 = vsel %vm1302, %v296, 0
      %s1307 = scalar_lea.vmem %s1, 160
      %v1308 = vld [vmem:[%s1307] sm:$0xf]
      %v1309 = vld [vmem:[%s1307 + $0x4] sm:$0xf]
      %v1310 = vld [vmem:[%s1307 + $0x8] sm:$0xf]
      %v1311 = vld [vmem:[%s1307 + $0xc] sm:$0xf]
      %v1312 = vld [vmem:[%s1307 + $0x10] sm:$0xf]
      %v1313 = vld [vmem:[%s1307 + $0x14] sm:$0xf]
      %v1314 = vld [vmem:[%s1307 + $0x18] sm:$0xf]
      %v1315 = vld [vmem:[%s1307 + $0x1c] sm:$0xf]
      %v1317 = vshrl.u32 %v1303, 16
      %v1319 = vshll.u32 %v1303, 16
      %v1321 = vrot.slane %v1319, 1
      %v1322 = vor.u32 %v1317, %v1321
      %v1324 = vshll.u32 %v1304, 16
      %v1326 = vrot.slane %v1324, 1
      %v1327 = vsel %vm998, %v1322, %v1326
      %v1328 = vshrl.u32 %v1304, 16
      %v1330 = vor.u32 %v1328, %v1326
      %v1332 = vshll.u32 %v1305, 16
      %v1334 = vrot.slane %v1332, 1
      %v1335 = vsel %vm998, %v1330, %v1334
      %v1336 = vshrl.u32 %v1305, 16
      %v1338 = vor.u32 %v1336, %v1334
      %v1340 = vshll.u32 %v1306, 16
      %v1342 = vrot.slane %v1340, 1
      %v1343 = vsel %vm998, %v1338, %v1342
      %v1344 = vshrl.u32 %v1306, 16
      %v1346 = vor.u32 %v1344, %v1342
      %v1347 = vrot.slane %v629, 1
      %v1348 = vsel %vm998, %v1346, %v1347
      %v1357 = vunpack.c.l.b16 %v1308
      %v1358 = vunpack.c.l.b16 %v1309
      %v1359 = vunpack.c.l.b16 %v1310
      %v1360 = vunpack.c.l.b16 %v1311
      %v1361 = vunpack.c.l.b16 %v1312
      %v1362 = vunpack.c.l.b16 %v1313
      %v1363 = vunpack.c.l.b16 %v1314
      %v1364 = vunpack.c.l.b16 %v1315
      %v1365 = vpack.c.b16 %v1358, %v1357
      %v1366 = vpack.c.b16 %v1360, %v1359
      %v1367 = vpack.c.b16 %v1362, %v1361
      %v1368 = vpack.c.b16 %v1364, %v1363
      %v1374 = vsel %vm546, %v1327, 0
      %v1377 = vsel %vm546, %v1335, 0
      %v1380 = vsel %vm546, %v1343, 0
      %v1383 = vsel %vm546, %v1348, 0
      %1385 = vmatprep.subr.bf16.mxu0 0
      %1386 = vmatpush1.bf16.msra.mxu0 %v1365
      %1387 = vmatprep.subr.bf16.mxu0 0
      %1388 = vmatpush1.bf16.msra.mxu0 %v1366
      %1389 = vmatprep.subr.bf16.mxu0 0
      %1390 = vmatpush1.bf16.msra.mxu0 %v1367
      %1391 = vmatprep.subr.bf16.mxu0 0
      %1392 = vmatpush1.bf16.msra.mxu0 %v1368
      %1393 = vmatprep.subr.bf16.mxu0 0
      %1394 = vmatpush1.bf16.msra.mxu0 0
      %1395 = vmatprep.subr.bf16.mxu0 0
      %1396 = vmatpush1.bf16.msra.mxu0 0
      %1397 = vmatprep.subr.bf16.mxu0 0
      %1398 = vmatpush1.bf16.msra.mxu0 0
      %1399 = vmatprep.subr.bf16.mxu0 0
      %1400 = vmatpush1.bf16.msra.mxu0 0
      %1401 = vmatprep.subr.bf16.mxu0 0
      %1402 = vmatpush1.bf16.msra.mxu0 0
      %1403 = vmatprep.subr.bf16.mxu0 0
      %1404 = vmatpush1.bf16.msra.mxu0 0
      %1405 = vmatprep.subr.bf16.mxu0 0
      %1406 = vmatpush1.bf16.msra.mxu0 0
      %1407 = vmatprep.subr.bf16.mxu0 0
      %1408 = vmatpush1.bf16.msra.mxu0 0
      %1409 = vmatprep.subr.bf16.mxu0 0
      %1410 = vmatpush1.bf16.msra.mxu0 0
      %1411 = vmatprep.subr.bf16.mxu0 0
      %1412 = vmatpush1.bf16.msra.mxu0 0
      %1413 = vmatprep.subr.bf16.mxu0 0
      %1414 = vmatpush1.bf16.msra.mxu0 0
      %1415 = vmatprep.subr.bf16.mxu0 0
      %1416 = vmatpush1.bf16.msra.mxu0 0
      %1417 = vmatprep.mubr.bf16.mxu0 0
      %1418 = vmatmul.mubr.bf16.gmra.mrb[0].mxu0 %v1374
      %v1419 = vpop.f32.mrb[0].mxu0
      %v1420 = vadd.f32 0.0, %v1419
      %v1421 = vpop.f32.mrb[0].mxu0
      %v1422 = vpop.f32.mrb[0].mxu0
      %v1423 = vadd.f32 0.0, %v1422
      %v1424 = vpop.f32.mrb[0].mxu0
      %1425 = vmatprep.mubr.bf16.mxu0 0
      %1426 = vmatmul.mubr.bf16.gmra.mrb[0].mxu0 %v1377
      %v1427 = vpop.f32.mrb[0].mxu0
      %v1428 = vadd.f32 0.0, %v1427
      %v1429 = vpop.f32.mrb[0].mxu0
      %v1430 = vpop.f32.mrb[0].mxu0
      %v1431 = vadd.f32 0.0, %v1430
      %v1432 = vpop.f32.mrb[0].mxu0
      %1433 = vmatprep.mubr.bf16.mxu0 0
      %1434 = vmatmul.mubr.bf16.gmra.mrb[0].mxu0 %v1380
      %v1435 = vpop.f32.mrb[0].mxu0
      %v1436 = vadd.f32 0.0, %v1435
      %v1437 = vpop.f32.mrb[0].mxu0
      %v1438 = vpop.f32.mrb[0].mxu0
      %v1439 = vadd.f32 0.0, %v1438
      %v1440 = vpop.f32.mrb[0].mxu0
      %1441 = vmatprep.mubr.bf16.mxu0 0
      %1442 = vmatmul.mubr.bf16.gmra.mrb[0].mxu0 %v1383
      %v1443 = vpop.f32.mrb[0].mxu0
      %v1444 = vadd.f32 0.0, %v1443
      %v1445 = vpop.f32.mrb[0].mxu0
      %v1446 = vpop.f32.mrb[0].mxu0
      %v1447 = vadd.f32 0.0, %v1446
      %v1448 = vpop.f32.mrb[0].mxu0
      %1449 = vdwg.mxu0
      %v1450 = vadd.f32 %v1280, %v1420
      %v1451 = vadd.f32 %v1281, %v1423
      %v1452 = vadd.f32 %v1282, %v1428
      %v1453 = vadd.f32 %v1283, %v1431
      %v1454 = vadd.f32 %v1284, %v1436
      %v1455 = vadd.f32 %v1285, %v1439
      %v1456 = vadd.f32 %v1286, %v1444
      %v1457 = vadd.f32 %v1287, %v1447
      %vm1458 = vcmp.ne.s16.totalorder %v454, 0
      %v1459 = vsel %vm1458, %v293, 0
      %v1460 = vsel %vm482, %v294, 0
      %v1461 = vsel %vm483, %v295, 0
      %v1462 = vsel %vm484, %v296, 0
      %s1463 = scalar_lea.vmem %s1, 192
      %v1464 = vld [vmem:[%s1463] sm:$0xf]
      %v1465 = vld [vmem:[%s1463 + $0x4] sm:$0xf]
      %v1466 = vld [vmem:[%s1463 + $0x8] sm:$0xf]
      %v1467 = vld [vmem:[%s1463 + $0xc] sm:$0xf]
      %v1468 = vld [vmem:[%s1463 + $0x10] sm:$0xf]
      %v1469 = vld [vmem:[%s1463 + $0x14] sm:$0xf]
      %v1470 = vld [vmem:[%s1463 + $0x18] sm:$0xf]
      %v1471 = vld [vmem:[%s1463 + $0x1c] sm:$0xf]
      %v1473 = vshrl.u32 %v1459, 16
      %v1475 = vrot.slane %v1473, 3
      %v1476 = vshll.u32 %v1459, 16
      %v1478 = vrot.slane %v1476, 4
      %v1479 = vor.u32 %v1475, %v1478
      %v1481 = vshrl.u32 %v1460, 16
      %v1483 = vrot.slane %v1481, 3
      %v1484 = vshll.u32 %v1460, 16
      %v1486 = vrot.slane %v1484, 4
      %v1487 = vor.u32 %v1483, %v1486
      %v1488 = vsel %vm624, %v1479, %v1487
      %v1490 = vshrl.u32 %v1461, 16
      %v1492 = vrot.slane %v1490, 3
      %v1493 = vshll.u32 %v1461, 16
      %v1495 = vrot.slane %v1493, 4
      %v1496 = vor.u32 %v1492, %v1495
      %v1497 = vsel %vm624, %v1487, %v1496
      %v1499 = vshrl.u32 %v1462, 16
      %v1501 = vrot.slane %v1499, 3
      %v1502 = vshll.u32 %v1462, 16
      %v1504 = vrot.slane %v1502, 4
      %v1505 = vor.u32 %v1501, %v1504
      %v1506 = vsel %vm624, %v1496, %v1505
      %v1507 = vsel %vm624, %v1505, %v632
      %v1516 = vunpack.c.l.b16 %v1464
      %v1517 = vunpack.c.l.b16 %v1465
      %v1518 = vunpack.c.l.b16 %v1466
      %v1519 = vunpack.c.l.b16 %v1467
      %v1520 = vunpack.c.l.b16 %v1468
      %v1521 = vunpack.c.l.b16 %v1469
      %v1522 = vunpack.c.l.b16 %v1470
      %v1523 = vunpack.c.l.b16 %v1471
      %v1524 = vpack.c.b16 %v1517, %v1516
      %v1525 = vpack.c.b16 %v1519, %v1518
      %v1526 = vpack.c.b16 %v1521, %v1520
      %v1527 = vpack.c.b16 %v1523, %v1522
      %v1533 = vsel %vm546, %v1488, 0
      %v1536 = vsel %vm546, %v1497, 0
      %v1539 = vsel %vm546, %v1506, 0
      %v1542 = vsel %vm546, %v1507, 0
      %1544 = vmatprep.subr.bf16.mxu0 0
      %1545 = vmatpush1.bf16.msra.mxu0 %v1524
      %1546 = vmatprep.subr.bf16.mxu0 0
      %1547 = vmatpush1.bf16.msra.mxu0 %v1525
      %1548 = vmatprep.subr.bf16.mxu0 0
      %1549 = vmatpush1.bf16.msra.mxu0 %v1526
      %1550 = vmatprep.subr.bf16.mxu0 0
      %1551 = vmatpush1.bf16.msra.mxu0 %v1527
      %1552 = vmatprep.subr.bf16.mxu0 0
      %1553 = vmatpush1.bf16.msra.mxu0 0
      %1554 = vmatprep.subr.bf16.mxu0 0
      %1555 = vmatpush1.bf16.msra.mxu0 0
      %1556 = vmatprep.subr.bf16.mxu0 0
      %1557 = vmatpush1.bf16.msra.mxu0 0
      %1558 = vmatprep.subr.bf16.mxu0 0
      %1559 = vmatpush1.bf16.msra.mxu0 0
      %1560 = vmatprep.subr.bf16.mxu0 0
      %1561 = vmatpush1.bf16.msra.mxu0 0
      %1562 = vmatprep.subr.bf16.mxu0 0
      %1563 = vmatpush1.bf16.msra.mxu0 0
      %1564 = vmatprep.subr.bf16.mxu0 0
      %1565 = vmatpush1.bf16.msra.mxu0 0
      %1566 = vmatprep.subr.bf16.mxu0 0
      %1567 = vmatpush1.bf16.msra.mxu0 0
      %1568 = vmatprep.subr.bf16.mxu0 0
      %1569 = vmatpush1.bf16.msra.mxu0 0
      %1570 = vmatprep.subr.bf16.mxu0 0
      %1571 = vmatpush1.bf16.msra.mxu0 0
      %1572 = vmatprep.subr.bf16.mxu0 0
      %1573 = vmatpush1.bf16.msra.mxu0 0
      %1574 = vmatprep.subr.bf16.mxu0 0
      %1575 = vmatpush1.bf16.msra.mxu0 0
      %1576 = vmatprep.mubr.bf16.mxu0 0
      %1577 = vmatmul.mubr.bf16.gmra.mrb[0].mxu0 %v1533
      %v1578 = vpop.f32.mrb[0].mxu0
      %v1579 = vadd.f32 0.0, %v1578
      %v1580 = vpop.f32.mrb[0].mxu0
      %v1581 = vpop.f32.mrb[0].mxu0
      %v1582 = vadd.f32 0.0, %v1581
      %v1583 = vpop.f32.mrb[0].mxu0
      %1584 = vmatprep.mubr.bf16.mxu0 0
      %1585 = vmatmul.mubr.bf16.gmra.mrb[0].mxu0 %v1536
      %v1586 = vpop.f32.mrb[0].mxu0
      %v1587 = vadd.f32 0.0, %v1586
      %v1588 = vpop.f32.mrb[0].mxu0
      %v1589 = vpop.f32.mrb[0].mxu0
      %v1590 = vadd.f32 0.0, %v1589
      %v1591 = vpop.f32.mrb[0].mxu0
      %1592 = vmatprep.mubr.bf16.mxu0 0
      %1593 = vmatmul.mubr.bf16.gmra.mrb[0].mxu0 %v1539
      %v1594 = vpop.f32.mrb[0].mxu0
      %v1595 = vadd.f32 0.0, %v1594
      %v1596 = vpop.f32.mrb[0].mxu0
      %v1597 = vpop.f32.mrb[0].mxu0
      %v1598 = vadd.f32 0.0, %v1597
      %v1599 = vpop.f32.mrb[0].mxu0
      %1600 = vmatprep.mubr.bf16.mxu0 0
      %1601 = vmatmul.mubr.bf16.gmra.mrb[0].mxu0 %v1542
      %v1602 = vpop.f32.mrb[0].mxu0
      %v1603 = vadd.f32 0.0, %v1602
      %v1604 = vpop.f32.mrb[0].mxu0
      %v1605 = vpop.f32.mrb[0].mxu0
      %v1606 = vadd.f32 0.0, %v1605
      %v1607 = vpop.f32.mrb[0].mxu0
      %1608 = vdwg.mxu0
      %v1609 = vadd.f32 %v1450, %v1579
      %v1610 = vadd.f32 %v1451, %v1582
      %v1611 = vadd.f32 %v1452, %v1587
      %v1612 = vadd.f32 %v1453, %v1590
      %v1613 = vadd.f32 %v1454, %v1595
      %v1614 = vadd.f32 %v1455, %v1598
      %v1615 = vadd.f32 %v1456, %v1603
      %v1616 = vadd.f32 %v1457, %v1606
      %s1617 = scalar_lea.vmem %s1, 224
      %v1618 = vld [vmem:[%s1617] sm:$0xf]
      %v1619 = vld [vmem:[%s1617 + $0x4] sm:$0xf]
      %v1620 = vld [vmem:[%s1617 + $0x8] sm:$0xf]
      %v1621 = vld [vmem:[%s1617 + $0xc] sm:$0xf]
      %v1622 = vld [vmem:[%s1617 + $0x10] sm:$0xf]
      %v1623 = vld [vmem:[%s1617 + $0x14] sm:$0xf]
      %v1624 = vld [vmem:[%s1617 + $0x18] sm:$0xf]
      %v1625 = vld [vmem:[%s1617 + $0x1c] sm:$0xf]
      %v1626 = vsel %vm512, %v520, %v513
      %v1635 = vunpack.c.l.b16 %v1618
      %v1636 = vunpack.c.l.b16 %v1619
      %v1637 = vunpack.c.l.b16 %v1620
      %v1638 = vunpack.c.l.b16 %v1621
      %v1639 = vunpack.c.l.b16 %v1622
      %v1640 = vunpack.c.l.b16 %v1623
      %v1641 = vunpack.c.l.b16 %v1624
      %v1642 = vunpack.c.l.b16 %v1625
      %v1643 = vpack.c.b16 %v1636, %v1635
      %v1644 = vpack.c.b16 %v1638, %v1637
      %v1645 = vpack.c.b16 %v1640, %v1639
      %v1646 = vpack.c.b16 %v1642, %v1641
      %v1652 = vsel %vm546, %v1626, 0
      %1654 = vmatprep.subr.bf16.mxu0 0
      %1655 = vmatpush1.bf16.msra.mxu0 %v1643
      %1656 = vmatprep.subr.bf16.mxu0 0
      %1657 = vmatpush1.bf16.msra.mxu0 %v1644
      %1658 = vmatprep.subr.bf16.mxu0 0
      %1659 = vmatpush1.bf16.msra.mxu0 %v1645
      %1660 = vmatprep.subr.bf16.mxu0 0
      %1661 = vmatpush1.bf16.msra.mxu0 %v1646
      %1662 = vmatprep.subr.bf16.mxu0 0
      %1663 = vmatpush1.bf16.msra.mxu0 0
      %1664 = vmatprep.subr.bf16.mxu0 0
      %1665 = vmatpush1.bf16.msra.mxu0 0
      %1666 = vmatprep.subr.bf16.mxu0 0
      %1667 = vmatpush1.bf16.msra.mxu0 0
      %1668 = vmatprep.subr.bf16.mxu0 0
      %1669 = vmatpush1.bf16.msra.mxu0 0
      %1670 = vmatprep.subr.bf16.mxu0 0
      %1671 = vmatpush1.bf16.msra.mxu0 0
      %1672 = vmatprep.subr.bf16.mxu0 0
      %1673 = vmatpush1.bf16.msra.mxu0 0
      %1674 = vmatprep.subr.bf16.mxu0 0
      %1675 = vmatpush1.bf16.msra.mxu0 0
      %1676 = vmatprep.subr.bf16.mxu0 0
      %1677 = vmatpush1.bf16.msra.mxu0 0
      %1678 = vmatprep.subr.bf16.mxu0 0
      %1679 = vmatpush1.bf16.msra.mxu0 0
      %1680 = vmatprep.subr.bf16.mxu0 0
      %1681 = vmatpush1.bf16.msra.mxu0 0
      %1682 = vmatprep.subr.bf16.mxu0 0
      %1683 = vmatpush1.bf16.msra.mxu0 0
      %1684 = vmatprep.subr.bf16.mxu0 0
      %1685 = vmatpush1.bf16.msra.mxu0 0
      %1686 = vmatprep.mubr.bf16.mxu0 0
      %1687 = vmatmul.mubr.bf16.gmra.mrb[0].mxu0 %v551
      %v1688 = vpop.f32.mrb[0].mxu0
      %v1689 = vadd.f32 0.0, %v1688
      %v1690 = vpop.f32.mrb[0].mxu0
      %v1691 = vpop.f32.mrb[0].mxu0
      %v1692 = vadd.f32 0.0, %v1691
      %v1693 = vpop.f32.mrb[0].mxu0
      %1694 = vmatprep.mubr.bf16.mxu0 0
      %1695 = vmatmul.mubr.bf16.gmra.mrb[0].mxu0 %v554
      %v1696 = vpop.f32.mrb[0].mxu0
      %v1697 = vadd.f32 0.0, %v1696
      %v1698 = vpop.f32.mrb[0].mxu0
      %v1699 = vpop.f32.mrb[0].mxu0
      %v1700 = vadd.f32 0.0, %v1699
      %v1701 = vpop.f32.mrb[0].mxu0
      %1702 = vmatprep.mubr.bf16.mxu0 0
      %1703 = vmatmul.mubr.bf16.gmra.mrb[0].mxu0 %v557
      %v1704 = vpop.f32.mrb[0].mxu0
      %v1705 = vadd.f32 0.0, %v1704
      %v1706 = vpop.f32.mrb[0].mxu0
      %v1707 = vpop.f32.mrb[0].mxu0
      %v1708 = vadd.f32 0.0, %v1707
      %v1709 = vpop.f32.mrb[0].mxu0
      %1710 = vmatprep.mubr.bf16.mxu0 0
      %1711 = vmatmul.mubr.bf16.gmra.mrb[0].mxu0 %v1652
      %v1712 = vpop.f32.mrb[0].mxu0
      %v1713 = vadd.f32 0.0, %v1712
      %v1714 = vpop.f32.mrb[0].mxu0
      %v1715 = vpop.f32.mrb[0].mxu0
      %v1716 = vadd.f32 0.0, %v1715
      %v1717 = vpop.f32.mrb[0].mxu0
      %1718 = vdwg.mxu0
      %v1719 = vadd.f32 %v1609, %v1689
      %v1720 = vadd.f32 %v1610, %v1692
      %v1721 = vadd.f32 %v1611, %v1697
      %v1722 = vadd.f32 %v1612, %v1700
      %v1723 = vadd.f32 %v1613, %v1705
      %v1724 = vadd.f32 %v1614, %v1708
      %v1725 = vadd.f32 %v1615, %v1713
      %v1726 = vadd.f32 %v1616, %v1716
      %vm1727 = vcmp.ne.s16.totalorder %v805, 0
      %v1728 = vsel %vm1727, %v293, 0
      %v1729 = vsel %vm833, %v294, 0
      %v1730 = vsel %vm834, %v295, 0
      %v1731 = vsel %vm835, %v296, 0
      %s1732 = scalar_lea.vmem %s1, 256
      %v1733 = vld [vmem:[%s1732] sm:$0xf]
      %v1734 = vld [vmem:[%s1732 + $0x4] sm:$0xf]
      %v1735 = vld [vmem:[%s1732 + $0x8] sm:$0xf]
      %v1736 = vld [vmem:[%s1732 + $0xc] sm:$0xf]
      %v1737 = vld [vmem:[%s1732 + $0x10] sm:$0xf]
      %v1738 = vld [vmem:[%s1732 + $0x14] sm:$0xf]
      %v1739 = vld [vmem:[%s1732 + $0x18] sm:$0xf]
      %v1740 = vld [vmem:[%s1732 + $0x1c] sm:$0xf]
      %v1742 = vshrl.u32 %v1728, 16
      %v1744 = vrot.slane %v1742, 4
      %v1745 = vshll.u32 %v1728, 16
      %v1747 = vrot.slane %v1745, 5
      %v1748 = vor.u32 %v1744, %v1747
      %v1750 = vshrl.u32 %v1729, 16
      %v1752 = vrot.slane %v1750, 4
      %v1753 = vshll.u32 %v1729, 16
      %v1755 = vrot.slane %v1753, 5
      %v1756 = vor.u32 %v1752, %v1755
      %v1757 = vsel %vm446, %v1748, %v1756
      %v1759 = vshrl.u32 %v1730, 16
      %v1761 = vrot.slane %v1759, 4
      %v1762 = vshll.u32 %v1730, 16
      %v1764 = vrot.slane %v1762, 5
      %v1765 = vor.u32 %v1761, %v1764
      %v1766 = vsel %vm446, %v1756, %v1765
      %v1768 = vshrl.u32 %v1731, 16
      %v1770 = vrot.slane %v1768, 4
      %v1771 = vshll.u32 %v1731, 16
      %v1773 = vrot.slane %v1771, 5
      %v1774 = vor.u32 %v1770, %v1773
      %v1775 = vsel %vm446, %v1765, %v1774
      %v1776 = vsel %vm446, %v1774, %v852
      %v1785 = vunpack.c.l.b16 %v1733
      %v1786 = vunpack.c.l.b16 %v1734
      %v1787 = vunpack.c.l.b16 %v1735
      %v1788 = vunpack.c.l.b16 %v1736
      %v1789 = vunpack.c.l.b16 %v1737
      %v1790 = vunpack.c.l.b16 %v1738
      %v1791 = vunpack.c.l.b16 %v1739
      %v1792 = vunpack.c.l.b16 %v1740
      %v1793 = vpack.c.b16 %v1786, %v1785
      %v1794 = vpack.c.b16 %v1788, %v1787
      %v1795 = vpack.c.b16 %v1790, %v1789
      %v1796 = vpack.c.b16 %v1792, %v1791
      %v1802 = vsel %vm546, %v1757, 0
      %v1805 = vsel %vm546, %v1766, 0
      %v1808 = vsel %vm546, %v1775, 0
      %v1811 = vsel %vm546, %v1776, 0
      %1813 = vmatprep.subr.bf16.mxu0 0
      %1814 = vmatpush1.bf16.msra.mxu0 %v1793
      %1815 = vmatprep.subr.bf16.mxu0 0
      %1816 = vmatpush1.bf16.msra.mxu0 %v1794
      %1817 = vmatprep.subr.bf16.mxu0 0
      %1818 = vmatpush1.bf16.msra.mxu0 %v1795
      %1819 = vmatprep.subr.bf16.mxu0 0
      %1820 = vmatpush1.bf16.msra.mxu0 %v1796
      %1821 = vmatprep.subr.bf16.mxu0 0
      %1822 = vmatpush1.bf16.msra.mxu0 0
      %1823 = vmatprep.subr.bf16.mxu0 0
      %1824 = vmatpush1.bf16.msra.mxu0 0
      %1825 = vmatprep.subr.bf16.mxu0 0
      %1826 = vmatpush1.bf16.msra.mxu0 0
      %1827 = vmatprep.subr.bf16.mxu0 0
      %1828 = vmatpush1.bf16.msra.mxu0 0
      %1829 = vmatprep.subr.bf16.mxu0 0
      %1830 = vmatpush1.bf16.msra.mxu0 0
      %1831 = vmatprep.subr.bf16.mxu0 0
      %1832 = vmatpush1.bf16.msra.mxu0 0
      %1833 = vmatprep.subr.bf16.mxu0 0
      %1834 = vmatpush1.bf16.msra.mxu0 0
      %1835 = vmatprep.subr.bf16.mxu0 0
      %1836 = vmatpush1.bf16.msra.mxu0 0
      %1837 = vmatprep.subr.bf16.mxu0 0
      %1838 = vmatpush1.bf16.msra.mxu0 0
      %1839 = vmatprep.subr.bf16.mxu0 0
      %1840 = vmatpush1.bf16.msra.mxu0 0
      %1841 = vmatprep.subr.bf16.mxu0 0
      %1842 = vmatpush1.bf16.msra.mxu0 0
      %1843 = vmatprep.subr.bf16.mxu0 0
      %1844 = vmatpush1.bf16.msra.mxu0 0
      %1845 = vmatprep.mubr.bf16.mxu0 0
      %1846 = vmatmul.mubr.bf16.gmra.mrb[0].mxu0 %v1802
      %v1847 = vpop.f32.mrb[0].mxu0
      %v1848 = vadd.f32 0.0, %v1847
      %v1849 = vpop.f32.mrb[0].mxu0
      %v1850 = vpop.f32.mrb[0].mxu0
      %v1851 = vadd.f32 0.0, %v1850
      %v1852 = vpop.f32.mrb[0].mxu0
      %1853 = vmatprep.mubr.bf16.mxu0 0
      %1854 = vmatmul.mubr.bf16.gmra.mrb[0].mxu0 %v1805
      %v1855 = vpop.f32.mrb[0].mxu0
      %v1856 = vadd.f32 0.0, %v1855
      %v1857 = vpop.f32.mrb[0].mxu0
      %v1858 = vpop.f32.mrb[0].mxu0
      %v1859 = vadd.f32 0.0, %v1858
      %v1860 = vpop.f32.mrb[0].mxu0
      %1861 = vmatprep.mubr.bf16.mxu0 0
      %1862 = vmatmul.mubr.bf16.gmra.mrb[0].mxu0 %v1808
      %v1863 = vpop.f32.mrb[0].mxu0
      %v1864 = vadd.f32 0.0, %v1863
      %v1865 = vpop.f32.mrb[0].mxu0
      %v1866 = vpop.f32.mrb[0].mxu0
      %v1867 = vadd.f32 0.0, %v1866
      %v1868 = vpop.f32.mrb[0].mxu0
      %1869 = vmatprep.mubr.bf16.mxu0 0
      %1870 = vmatmul.mubr.bf16.gmra.mrb[0].mxu0 %v1811
      %v1871 = vpop.f32.mrb[0].mxu0
      %v1872 = vadd.f32 0.0, %v1871
      %v1873 = vpop.f32.mrb[0].mxu0
      %v1874 = vpop.f32.mrb[0].mxu0
      %v1875 = vadd.f32 0.0, %v1874
      %v1876 = vpop.f32.mrb[0].mxu0
      %1877 = vdwg.mxu0
      %v1878 = vadd.f32 %v1719, %v1848
      %v1879 = vadd.f32 %v1720, %v1851
      %v1880 = vadd.f32 %v1721, %v1856
      %v1881 = vadd.f32 %v1722, %v1859
      %v1882 = vadd.f32 %v1723, %v1864
      %v1883 = vadd.f32 %v1724, %v1867
      %v1884 = vadd.f32 %v1725, %v1872
      %v1885 = vadd.f32 %v1726, %v1875
      %1886 = vst.msk [vmem:[%s231] sm:$0xff] %vm546, %v1878
      %1887 = vst.msk [vmem:[%s231 + $0x8] sm:$0xff] %vm546, %v1879
      %1888 = vst.msk [vmem:[%s231 + $0x10] sm:$0xff] %vm546, %v1880
      %1889 = vst.msk [vmem:[%s231 + $0x18] sm:$0xff] %vm546, %v1881
      %1890 = vst.msk [vmem:[%s231 + $0x20] sm:$0xff] %vm546, %v1882
      %1891 = vst.msk [vmem:[%s231 + $0x28] sm:$0xff] %vm546, %v1883
      %1892 = vst.msk [vmem:[%s231 + $0x30] sm:$0xff] %vm546, %v1884
      %1893 = vst.msk [vmem:[%s231 + $0x38] sm:$0xff] %vm546, %v1885
      %v1894 = vsel %vm546, %v1878, 0.0
      %v1895 = vsel %vm546, %v1879, 0.0
      %v1896 = vadd.f32 %v1894, %v1895
      %v1897 = vsel %vm546, %v1880, 0.0
      %v1898 = vadd.f32 %v1896, %v1897
      %v1899 = vsel %vm546, %v1881, 0.0
      %v1900 = vadd.f32 %v1898, %v1899
      %v1901 = vsel %vm546, %v1882, 0.0
      %v1902 = vadd.f32 %v1900, %v1901
      %v1903 = vsel %vm546, %v1883, 0.0
      %v1904 = vadd.f32 %v1902, %v1903
      %v1905 = vsel %vm546, %v1884, 0.0
      %v1906 = vadd.f32 %v1904, %v1905
      %v1907 = vsel %vm546, %v1885, 0.0
      %v1908 = vadd.f32 %v1906, %v1907
      %v1909 = vrot.slane %v1908, 4
      %v1910 = vadd.f32 %v1908, %v1909
      %v1911 = vrot.slane %v1910, 2
      %v1912 = vadd.f32 %v1910, %v1911
      %v1913 = vrot.slane %v1912, 1
      %v1914 = vadd.f32 %v1912, %v1913
      %v1915 = vmul.f32 %v1878, %v1878
      %v1916 = vmul.f32 %v1879, %v1879
      %v1917 = vmul.f32 %v1880, %v1880
      %v1918 = vmul.f32 %v1881, %v1881
      %v1919 = vmul.f32 %v1882, %v1882
      %v1920 = vmul.f32 %v1883, %v1883
      %v1921 = vmul.f32 %v1884, %v1884
      %v1922 = vmul.f32 %v1885, %v1885
      %v1923 = vsel %vm546, %v1915, 0.0
      %v1924 = vsel %vm546, %v1916, 0.0
      %v1925 = vadd.f32 %v1923, %v1924
      %v1926 = vsel %vm546, %v1917, 0.0
      %v1927 = vadd.f32 %v1925, %v1926
      %v1928 = vsel %vm546, %v1918, 0.0
      %v1929 = vadd.f32 %v1927, %v1928
      %v1930 = vsel %vm546, %v1919, 0.0
      %v1931 = vadd.f32 %v1929, %v1930
      %v1932 = vsel %vm546, %v1920, 0.0
      %v1933 = vadd.f32 %v1931, %v1932
      %v1934 = vsel %vm546, %v1921, 0.0
      %v1935 = vadd.f32 %v1933, %v1934
      %v1936 = vsel %vm546, %v1922, 0.0
      %v1937 = vadd.f32 %v1935, %v1936
      %v1938 = vrot.slane %v1937, 4
      %v1939 = vadd.f32 %v1937, %v1938
      %v1940 = vrot.slane %v1939, 2
      %v1941 = vadd.f32 %v1939, %v1940
      %v1942 = vrot.slane %v1941, 1
      %v1943 = vadd.f32 %v1941, %v1942
      %vm1944 = vcmask 1040384
      %v1945 = vsel %vm1944, %v1914, %v1943
      %vm1946 = vcmask 1041408
      %v1947 = vsel %vm1946, %v1945, 0.0
      %1948 = vst.msk [vmem:[%s235] sm:$0xff] %vm546, %v1947
      %p1949 = scmp.lt.s32.totalorder %s17, 1
      %s1950 = scalar_select %p1949, %s17, 1
      %s1951 = smul.addr %s1950, 8
      %s1952 = smul.addr %s1951, 8
      %s1953 = scalar_lea.vmem %s4, %s1952
      %p1954 = scmp.lt.s32.totalorder %s17, 1
      %s1955 = scalar_select %p1954, %s17, 1
      %s1956 = smul.addr %s1955, 8
      %s1957 = scalar_lea.vmem %s5, %s1956
      // Predicated region
      $region37: #{double_conv.4} parent=35 // pred_check
        %p1958 = pneg %p124
      $region38: #{double_conv.4} parent=35 // pred_check_branch
        %1960 = sbr.rel (%p1958) target = $region40
      $region39: #{double_conv.4} parent=35 // pred_region
        _
      $region40: #{double_conv.4} parent=35 // pred_fallthru
        _
      // Predicated region
      $region41: #{double_conv.4} parent=35 // pred_check
        %p1961 = pneg %p150
      $region42: #{double_conv.4} parent=35 // pred_check_branch
        %1963 = sbr.rel (%p1961) target = $region44
      $region43: #{double_conv.4} parent=35 // pred_region
        _
      $region44: #{double_conv.4} parent=35 // pred_fallthru
        _
    $region36: #{double_conv.4} parent=5 // pred_fallthru
      _
    %p1964 = scmp.le.s32.totalorder 2, %s12
    // Predicated region
    $region45: #{double_conv.4} parent=5 // pred_check
      %p1965 = pneg %p1964
    $region46: #{double_conv.4} parent=5 // pred_check_branch
      %1967 = sbr.rel (%p1965) target = $region48
    $region47: #{double_conv.4} parent=5 // pred_region
      %s1968 = ssub.s32 %s12, 2
      // Predicated region
      $region49: #{double_conv.4} parent=47 // pred_check
        %p1969 = pneg %p130
      $region50: #{double_conv.4} parent=47 // pred_check_branch
        %1971 = sbr.rel (%p1969) target = $region52
      $region51: #{double_conv.4} parent=47 // pred_region
        %p1972 = scmp.lt.s32.totalorder %s18, 1
        %s1973 = scalar_select %p1972, %s18, 1
        %s1974 = smul.addr %s1973, 8
        %s1975 = smul.addr %s1974, 8
        %s1976 = scalar_lea.vmem %s4, %s1975
      $region52: #{double_conv.4} parent=47 // pred_fallthru
        _
      // Predicated region
      $region53: #{double_conv.4} parent=47 // pred_check
        %p1977 = pneg %p156
      $region54: #{double_conv.4} parent=47 // pred_check_branch
        %1979 = sbr.rel (%p1977) target = $region56
      $region55: #{double_conv.4} parent=47 // pred_region
        %p1980 = scmp.lt.s32.totalorder %s18, 1
        %s1981 = scalar_select %p1980, %s18, 1
        %s1982 = smul.addr %s1981, 8
        %s1983 = scalar_lea.vmem %s5, %s1982
      $region56: #{double_conv.4} parent=47 // pred_fallthru
        _
    $region48: #{double_conv.4} parent=5 // pred_fallthru
      _
  $region6: #{double_conv.4} parent=0 // loop_footer
    %s16 = sadd.s32 1, %s12
  $region7: #{double_conv.4} parent=0 // loop_footer_branch
    %11 = sbr.rel target = $region3
  $region8: #{double_conv.4} parent=0 // loop_exit
    _

</llo_original>
